<compile_context>
chip_gen: v7x
topology: tpu7x:2x2x1
jax: 0.10.0
libtpu: 0.0.40
codegen_flags: <defaults>
</compile_context>

<pallas_src>
import jax
import jax.numpy as jnp
from jax.experimental import pallas as pl
from jax.experimental.pallas import tpu as pltpu


def _make_gated_attn_kernel(D, n_classes):
    """Builds the kernel body; D / n_classes are static Python ints (trace-time branches)."""
    use_vpu_projection = (n_classes == 1)

    def kernel(x_ref, wab_ref, bab_ref, wc_ref, bc_ref, a_out_ref):
        # x tile: (tile_n, L) f32 -> bf16 cast on the VPU (cheap vs. the matmul), fused
        # gate weights: (L, 2D) bf16. One MXU pass, f32 accumulation.
        x_bf = x_ref[...].astype(jnp.bfloat16)
        ab = jnp.dot(x_bf, wab_ref[...], preferred_element_type=jnp.float32)
        ab = ab + bab_ref[...]                       # (tile_n, 2D) f32 bias add

        a = jnp.tanh(ab[:, :D])                      # f32, EUP
        b = jax.nn.sigmoid(ab[:, D:])                # f32, EUP
        gated = a * b                                # f32, VPU

        if use_vpu_projection:
            # wc_ref is a lane-dense (1, D) f32 row: VPU multiply + XLU lane reduction,
            # skipping a 1-column MXU pass entirely.
            A = jnp.sum(gated * wc_ref[...], axis=-1, keepdims=True) + bc_ref[...]
        else:
            # General n_classes: bf16 MXU dot with f32 accumulation, bias add in f32.
            A = jnp.dot(gated.astype(jnp.bfloat16), wc_ref[...],
                        preferred_element_type=jnp.float32) + bc_ref[...]

        a_out_ref[...] = A.astype(a_out_ref.dtype)

    return kernel


def attn_net_gated_forward(x, wa, ba, wb, bb, wc, bc, *, tile_n=512):
    """Gated attention forward.

    Args:
      x:  (N, L) float32 bag of instance features.
      wa: (L, D), ba: (D,) or (1, D)   -- attention_a Linear (pre-transposed).
      wb: (L, D), bb: (D,) or (1, D)   -- attention_b Linear (pre-transposed).
      wc: (D, n_classes), bc: (n_classes,) or (1, n_classes) -- attention_c Linear.
      tile_n: rows per grid step (sweep 256-1024; keep a multiple of 8).

    Returns:
      (A, x) with A of shape (N, n_classes) float32, matching the PyTorch module.
    """
    N, L = x.shape
    D = wa.shape[1]
    n_classes = wc.shape[1]

    # --- wrapper-side weight prep (done once; negligible vs the N-dim matmuls) ---
    w_ab = jnp.concatenate([wa, wb], axis=1).astype(jnp.bfloat16)            # (L, 2D)
    b_ab = jnp.concatenate(
        [ba.reshape(1, D), bb.reshape(1, D)], axis=1).astype(jnp.float32)    # (1, 2D)
    bc2 = bc.reshape(1, n_classes).astype(jnp.float32)                       # (1, n_classes)

    if n_classes == 1:
        wc_arg = wc.reshape(1, D).astype(jnp.float32)                        # lane-dense row
        wc_spec = pl.BlockSpec((1, D), lambda i: (0, 0))
    else:
        wc_arg = wc.astype(jnp.bfloat16)                                     # (D, n_classes)
        wc_spec = pl.BlockSpec((D, n_classes), lambda i: (0, 0))

    # No padding / casting copies of x: a single block covers small bags (block == full dim
    # is always legal); otherwise the cdiv grid's boundary block is masked automatically.
    tile_n = min(tile_n, N)
    grid = (pl.cdiv(N, tile_n),)

    A = pl.pallas_call(
        _make_gated_attn_kernel(D, n_classes),
        out_shape=jax.ShapeDtypeStruct((N, n_classes), jnp.float32),
        grid_spec=pltpu.PrefetchScalarGridSpec(
            num_scalar_prefetch=0,
            grid=grid,
            in_specs=[
                pl.BlockSpec((tile_n, L), lambda i: (i, 0)),       # x tile (f32)
                pl.BlockSpec((L, 2 * D), lambda i: (0, 0)),        # fused Wa|Wb (resident)
                pl.BlockSpec((1, 2 * D), lambda i: (0, 0)),        # fused ba|bb
                wc_spec,                                           # Wc (row or matrix)
                pl.BlockSpec((1, n_classes), lambda i: (0, 0)),    # bc
            ],
            out_specs=pl.BlockSpec((tile_n, n_classes), lambda i: (i, 0)),
        ),
        compiler_params=pltpu.CompilerParams(
            dimension_semantics=("parallel",),
        ),
    )(x, w_ab, b_ab, wc_arg, bc2)

    # Module returns the input unchanged as the second output.
    return A, x


def init_params(key, L, D, n_classes, dtype=jnp.float32):
    """Deterministic PyTorch-Linear-style init: U(-1/sqrt(fan_in), 1/sqrt(fan_in))."""
    ks = jax.random.split(key, 6)
    bound_a = 1.0 / jnp.sqrt(L)
    bound_c = 1.0 / jnp.sqrt(D)
    wa = jax.random.uniform(ks[0], (L, D), dtype, -bound_a, bound_a)
    ba = jax.random.uniform(ks[1], (1, D), dtype, -bound_a, bound_a)
    wb = jax.random.uniform(ks[2], (L, D), dtype, -bound_a, bound_a)
    bb = jax.random.uniform(ks[3], (1, D), dtype, -bound_a, bound_a)
    wc = jax.random.uniform(ks[4], (D, n_classes), dtype, -bound_c, bound_c)
    bc = jax.random.uniform(ks[5], (1, n_classes), dtype, -bound_c, bound_c)
    return wa, ba, wb, bb, wc, bc


if __name__ == "__main__":
    # Module-default feature dims (L=1024, D=256, n_classes=1), small bag size N=300
    # (deliberately not a multiple of 8/128 to exercise ragged handling).
    N, L, D, n_classes = 300, 1024, 256, 1

    key = jax.random.PRNGKey(0)
    kx, kp = jax.random.split(key)
    x = jax.random.normal(kx, (N, L), dtype=jnp.float32)
    wa, ba, wb, bb, wc, bc = init_params(kp, L, D, n_classes)

    # Reference in plain JAX (same math as the PyTorch forward), full f32.
    a_ref = jnp.tanh(x @ wa + ba)
    b_ref = jax.nn.sigmoid(x @ wb + bb)
    A_ref = (a_ref * b_ref) @ wc + bc

    # Path 1: default tile (single full-extent block, since N < tile_n).
    A1, x_out = attn_net_gated_forward(x, wa, ba, wb, bb, wc, bc)
    # Path 2: small tile to exercise the multi-step grid + masked boundary block.
    A2, _ = attn_net_gated_forward(x, wa, ba, wb, bb, wc, bc, tile_n=128)
    A1 = jax.block_until_ready(A1)
    A2 = jax.block_until_ready(A2)
    x_out = jax.block_until_ready(x_out)

    assert A1.shape == (N, n_classes)
    assert A2.shape == (N, n_classes)
    assert x_out.shape == (N, L)
    # bf16 matmul inputs with f32 accumulation -> small numeric delta vs full-f32 reference.
    assert jnp.allclose(A1, A_ref, atol=2.5e-2, rtol=2.5e-2), (
        float(jnp.max(jnp.abs(A1 - A_ref))))
    assert jnp.allclose(A2, A_ref, atol=2.5e-2, rtol=2.5e-2), (
        float(jnp.max(jnp.abs(A2 - A_ref))))
    assert jnp.array_equal(x_out, x)

    print("KERNEL_OK")
</pallas_src>

<mosaic_0001>
module attributes {stable_mosaic.version = 11 : i64} {
  func.func @kernel(%arg0: i32, %arg1: memref<300x1024xf32, #tpu.memory_space<vmem>>, %arg2: memref<1024x512xbf16, #tpu.memory_space<vmem>>, %arg3: memref<1x512xf32, #tpu.memory_space<vmem>>, %arg4: memref<1x256xf32, #tpu.memory_space<vmem>>, %arg5: memref<1x1xf32, #tpu.memory_space<vmem>>, %arg6: memref<300x1xf32, #tpu.memory_space<vmem>>) attributes {dimension_semantics = [#tpu.dimension_semantics<parallel>], iteration_bounds = array<i64: 1>, scalar_prefetch = 0 : i64, scratch_operands = 0 : i64, tpu.core_type = #tpu.core_type<tc>, window_params = [{transform_indices = @transform_0, window_bounds = array<i64: 300, 1024>}, {pipeline_mode = #tpu.pipeline_mode<synchronous>, transform_indices = @transform_1, window_bounds = array<i64: 1024, 512>}, {pipeline_mode = #tpu.pipeline_mode<synchronous>, transform_indices = @transform_2, window_bounds = array<i64: 1, 512>}, {pipeline_mode = #tpu.pipeline_mode<synchronous>, transform_indices = @transform_3, window_bounds = array<i64: 1, 256>}, {pipeline_mode = #tpu.pipeline_mode<synchronous>, transform_indices = @transform_4, window_bounds = array<i64: 1, 1>}, {transform_indices = @transform_5, window_bounds = array<i64: 300, 1>}]} {
    %c0 = arith.constant 0 : index
    %c0_0 = arith.constant 0 : index
    %0 = vector.load %arg1[%c0, %c0_0] : memref<300x1024xf32, #tpu.memory_space<vmem>>, vector<300x1024xf32>
    %1 = arith.truncf %0 : vector<300x1024xf32> to vector<300x1024xbf16>
    %c0_1 = arith.constant 0 : index
    %c0_2 = arith.constant 0 : index
    %2 = vector.load %arg2[%c0_1, %c0_2] : memref<1024x512xbf16, #tpu.memory_space<vmem>>, vector<1024x512xbf16>
    %cst = arith.constant dense<0.000000e+00> : vector<300x512xf32>
    %3 = tpu.matmul %1, %2, %cst {dimension_numbers = #tpu.dot_dimension_numbers<[1], [0], [0], [1], [0, 0, 1, 1], [], []>} : vector<300x1024xbf16>, vector<1024x512xbf16>, vector<300x512xf32> -> vector<300x512xf32>
    %c0_3 = arith.constant 0 : index
    %c0_4 = arith.constant 0 : index
    %4 = vector.load %arg3[%c0_3, %c0_4] : memref<1x512xf32, #tpu.memory_space<vmem>>, vector<1x512xf32>
    %5 = vector.broadcast %4 : vector<1x512xf32> to vector<300x512xf32>
    %6 = arith.addf %3, %5 : vector<300x512xf32>
    %7 = vector.extract_strided_slice %6 {offsets = [0, 0], sizes = [300, 256], strides = [1, 1]} : vector<300x512xf32> to vector<300x256xf32>
    %8 = math.tanh %7 : vector<300x256xf32>
    %9 = vector.extract_strided_slice %6 {offsets = [0, 256], sizes = [300, 256], strides = [1, 1]} : vector<300x512xf32> to vector<300x256xf32>
    %10 = arith.negf %9 : vector<300x256xf32>
    %11 = math.exp %10 : vector<300x256xf32>
    %cst_5 = arith.constant 1.000000e+00 : f32
    %12 = vector.broadcast %cst_5 : f32 to vector<300x256xf32>
    %13 = arith.addf %12, %11 : vector<300x256xf32>
    %14 = arith.divf %12, %13 : vector<300x256xf32>
    %15 = arith.mulf %8, %14 : vector<300x256xf32>
    %c0_6 = arith.constant 0 : index
    %c0_7 = arith.constant 0 : index
    %16 = vector.load %arg4[%c0_6, %c0_7] : memref<1x256xf32, #tpu.memory_space<vmem>>, vector<1x256xf32>
    %17 = vector.broadcast %16 : vector<1x256xf32> to vector<300x256xf32>
    %18 = arith.mulf %15, %17 : vector<300x256xf32>
    %cst_8 = arith.constant dense<0.000000e+00> : vector<300xf32>
    %19 = vector.multi_reduction <add>, %18, %cst_8 [1] : vector<300x256xf32> to vector<300xf32>
    %20 = vector.shape_cast %19 : vector<300xf32> to vector<300x1xf32>
    %c0_9 = arith.constant 0 : index
    %c0_10 = arith.constant 0 : index
    %21 = vector.load %arg5[%c0_9, %c0_10] : memref<1x1xf32, #tpu.memory_space<vmem>>, vector<1x1xf32>
    %22 = vector.broadcast %21 : vector<1x1xf32> to vector<300x1xf32>
    %23 = arith.addf %20, %22 : vector<300x1xf32>
    %c0_11 = arith.constant 0 : index
    %c0_12 = arith.constant 0 : index
    %24 = vector.load %arg6[%c0_11, %c0_12] : memref<300x1xf32, #tpu.memory_space<vmem>>, vector<300x1xf32>
    tpu.vector_store %arg6[%c0_11, %c0_12], %23 {strides = array<i32>} : memref<300x1xf32, #tpu.memory_space<vmem>>, vector<300x1xf32>,
    return
  }
  func.func @transform_0(%arg0: i32) -> (i32, i32) {
    %c0_i32 = arith.constant 0 : i32
    %c0_i32_0 = arith.constant 0 : i32
    return %arg0, %c0_i32 : i32, i32
  }
  func.func @transform_1(%arg0: i32) -> (i32, i32) {
    %c0_i32 = arith.constant 0 : i32
    %c0_i32_0 = arith.constant 0 : i32
    %c0_i32_1 = arith.constant 0 : i32
    return %c0_i32, %c0_i32_0 : i32, i32
  }
  func.func @transform_2(%arg0: i32) -> (i32, i32) {
    %c0_i32 = arith.constant 0 : i32
    %c0_i32_0 = arith.constant 0 : i32
    %c0_i32_1 = arith.constant 0 : i32
    return %c0_i32, %c0_i32_0 : i32, i32
  }
  func.func @transform_3(%arg0: i32) -> (i32, i32) {
    %c0_i32 = arith.constant 0 : i32
    %c0_i32_0 = arith.constant 0 : i32
    %c0_i32_1 = arith.constant 0 : i32
    return %c0_i32, %c0_i32_0 : i32, i32
  }
  func.func @transform_4(%arg0: i32) -> (i32, i32) {
    %c0_i32 = arith.constant 0 : i32
    %c0_i32_0 = arith.constant 0 : i32
    %c0_i32_1 = arith.constant 0 : i32
    return %c0_i32, %c0_i32_0 : i32, i32
  }
  func.func @transform_5(%arg0: i32) -> (i32, i32) {
    %c0_i32 = arith.constant 0 : i32
    %c0_i32_0 = arith.constant 0 : i32
    return %arg0, %c0_i32 : i32, i32
  }
}

</mosaic_0001>

<llo_original>
// kernel: tpu_custom_call.1
$region0: #{tpu_custom_call.1}
  #allocation0 [shape = 'u32[]', space=smem, size = 0x4, offset = 0x4, fixed_abs, tag = 'smem constant byte address 0x4 - core index']
  #allocation1 [shape = 'u32[144,128]{1,0:T(1,128)}', space=vmem, size = 0x12000, scoped, tag = 'internal scratch']
  #allocation2 [shape = 'f32[1,1]{1,0:T(1,128)S(1)}', space=vmem, size = 0x200, scoped, tag = 'scoped memory for tpu_custom_call.1']
  %s0 = inlined_call_operand.hbm [shape: f32[300,1024], index: 0, kind: input, shape index: {}]
  %s1 = inlined_call_operand.hbm [shape: bf16[1024,512], index: 1, kind: input, shape index: {}]
  %s2 = inlined_call_operand.hbm [shape: f32[1,512], index: 2, kind: input, shape index: {}]
  %s3 = inlined_call_operand.hbm [shape: f32[1,256], index: 3, kind: input, shape index: {}]
  %s4 = inlined_call_operand.<no memory space> [shape: f32[1,1], index: 4, kind: input, shape index: {}]
  %s5 = inlined_call_operand.vmem [shape: f32[300,1], index: 5, kind: output, shape index: {}]
  %s6 = sld [smem:[#allocation0]]
  $region46: #{tpu_custom_call.1} parent=0
    _
  %s8 = ssub.s32 1, %s6
  %s9 = scalar_select 0, %s8, %s6
  %v10 = vstv %s4
  %11 = vst [vmem:[#allocation2] sm:$0x1] %v10
  $region1: #{tpu_custom_call.1} parent=0
    #allocation3 [shape = 'u8[1245184]{0}', space=vmem, size = 0x130000, scoped, tag = 'input window, operand 0, single buffered']
    #allocation4 [shape = 's32[1]{0}', space=sflag, size = 0x4, scoped, tag = 'scoped memory for tpu_custom_call.1']
    #allocation5 [shape = 'u8[1048576]{0}', space=vmem, size = 0x100000, scoped, tag = 'input window, operand 1, single buffered']
    #allocation6 [shape = 's32[1]{0}', space=sflag, size = 0x4, scoped, tag = 'scoped memory for tpu_custom_call.1']
    #allocation7 [shape = 'u8[2048]{0}', space=vmem, size = 0x800, scoped, tag = 'input window, operand 2, single buffered']
    #allocation8 [shape = 'u8[1024]{0}', space=vmem, size = 0x400, scoped, tag = 'input window, operand 3, single buffered']
    #allocation9 [shape = 's32[1]{0}', space=sflag, size = 0x4, scoped, tag = 'scoped memory for tpu_custom_call.1']
    %12 = vsyncpa [#allocation4], 0
    %13 = vsyncpa [#allocation6], 0
    %14 = vsyncpa [#allocation9], 0
    // Predicated region
    $region2: #{tpu_custom_call.1} parent=1 // pred_check
      _
    $region3: #{tpu_custom_call.1} parent=1 // pred_check_branch
      %16 = sbr.rel (0) target = $region5
    $region4: #{tpu_custom_call.1} parent=1 // pred_region
      %s18 = ssub.s32 38912, 38912
      %19 = vsyncadd [#allocation4], %s18
      %s20 = sshll.u32 [#allocation3], 4
      %s21 = int_to_ptr.vmem [resolvable:$true] %s20
      %26 = dma.hbm_to_vmem [thread:$0]  %s0, 38912, %s21, [#allocation4], 1024, 1024, 64
    $region5: #{tpu_custom_call.1} parent=1 // pred_fallthru
      _
    // Predicated region
    $region6: #{tpu_custom_call.1} parent=1 // pred_check
      _
    $region7: #{tpu_custom_call.1} parent=1 // pred_check_branch
      %28 = sbr.rel (0) target = $region9
    $region8: #{tpu_custom_call.1} parent=1 // pred_region
      %s30 = ssub.s32 32768, 32768
      %31 = vsyncadd [#allocation6], %s30
      %s32 = sshll.u32 [#allocation5], 4
      %s33 = int_to_ptr.vmem [resolvable:$true] %s32
      %38 = dma.hbm_to_vmem [thread:$0]  %s1, 32768, %s33, [#allocation6], 256, 256, 16
    $region9: #{tpu_custom_call.1} parent=1 // pred_fallthru
      _
    // Predicated region
    $region10: #{tpu_custom_call.1} parent=1 // pred_check
      _
    $region11: #{tpu_custom_call.1} parent=1 // pred_check_branch
      %40 = sbr.rel (0) target = $region13
    $region12: #{tpu_custom_call.1} parent=1 // pred_region
      %s42 = ssub.s32 64, 64
      %43 = vsyncadd [#allocation6], %s42
      %s45 = sshll.u32 [#allocation7], 4
      %s46 = int_to_ptr.vmem [resolvable:$true] %s45
      %48 = dma.hbm_to_vmem [thread:$0]  %s2, 64, %s46, [#allocation6]
    $region13: #{tpu_custom_call.1} parent=1 // pred_fallthru
      _
    // Predicated region
    $region14: #{tpu_custom_call.1} parent=1 // pred_check
      _
    $region15: #{tpu_custom_call.1} parent=1 // pred_check_branch
      %50 = sbr.rel (0) target = $region17
    $region16: #{tpu_custom_call.1} parent=1 // pred_region
      %s52 = ssub.s32 32, 32
      %53 = vsyncadd [#allocation9], %s52
      %s55 = sshll.u32 [#allocation8], 4
      %s56 = int_to_ptr.vmem [resolvable:$true] %s55
      %58 = dma.hbm_to_vmem [thread:$0]  %s3, 32, %s56, [#allocation9]
    $region17: #{tpu_custom_call.1} parent=1 // pred_fallthru
      _
    // Predicated region
    $region18: #{tpu_custom_call.1} parent=1 // pred_check
      _
    $region19: #{tpu_custom_call.1} parent=1 // pred_check_branch
      %60 = sbr.rel (0) target = $region21
    $region20: #{tpu_custom_call.1} parent=1 // pred_region
      _
    $region21: #{tpu_custom_call.1} parent=1 // pred_fallthru
      _
    // Predicated region
    $region22: #{tpu_custom_call.1} parent=1 // pred_check
      _
    $region23: #{tpu_custom_call.1} parent=1 // pred_check_branch
      %62 = sbr.rel (0) target = $region25
    $region24: #{tpu_custom_call.1} parent=1 // pred_region
      %63 = dma.done [#allocation4], 38912
    $region25: #{tpu_custom_call.1} parent=1 // pred_fallthru
      _
    // Predicated region
    $region26: #{tpu_custom_call.1} parent=1 // pred_check
      _
    $region27: #{tpu_custom_call.1} parent=1 // pred_check_branch
      %65 = sbr.rel (0) target = $region29
    $region28: #{tpu_custom_call.1} parent=1 // pred_region
      %66 = dma.done [#allocation6], 32768
    $region29: #{tpu_custom_call.1} parent=1 // pred_fallthru
      _
    // Predicated region
    $region30: #{tpu_custom_call.1} parent=1 // pred_check
      _
    $region31: #{tpu_custom_call.1} parent=1 // pred_check_branch
      %68 = sbr.rel (0) target = $region33
    $region32: #{tpu_custom_call.1} parent=1 // pred_region
      %69 = dma.done [#allocation6], 64
    $region33: #{tpu_custom_call.1} parent=1 // pred_fallthru
      _
    // Predicated region
    $region34: #{tpu_custom_call.1} parent=1 // pred_check
      _
    $region35: #{tpu_custom_call.1} parent=1 // pred_check_branch
      %71 = sbr.rel (0) target = $region37
    $region36: #{tpu_custom_call.1} parent=1 // pred_region
      %72 = dma.done [#allocation9], 32
    $region37: #{tpu_custom_call.1} parent=1 // pred_fallthru
      _
    %v73 = vld [vmem:[#allocation3] sm:$0xff]
    %v74 = vld [vmem:[#allocation3 + $0x8] sm:$0xff]
    %v75 = vld [vmem:[#allocation3 + $0x10] sm:$0xff]
    %v76 = vld [vmem:[#allocation3 + $0x18] sm:$0xff]
    %v77 = vld [vmem:[#allocation3 + $0x20] sm:$0xff]
    %v78 = vld [vmem:[#allocation3 + $0x28] sm:$0xff]
    %v79 = vld [vmem:[#allocation3 + $0x30] sm:$0xff]
    %v80 = vld [vmem:[#allocation3 + $0x38] sm:$0xff]
    %v81 = vld [vmem:[#allocation3 + $0x40] sm:$0xff]
    %v82 = vld [vmem:[#allocation3 + $0x48] sm:$0xff]
    %v83 = vld [vmem:[#allocation3 + $0x50] sm:$0xff]
    %v84 = vld [vmem:[#allocation3 + $0x58] sm:$0xff]
    %v85 = vld [vmem:[#allocation3 + $0x60] sm:$0xff]
    %v86 = vld [vmem:[#allocation3 + $0x68] sm:$0xff]
    %v87 = vld [vmem:[#allocation3 + $0x70] sm:$0xff]
    %v88 = vld [vmem:[#allocation3 + $0x78] sm:$0xff]
    %v89 = vld [vmem:[#allocation3 + $0x80] sm:$0xff]
    %v90 = vld [vmem:[#allocation3 + $0x88] sm:$0xff]
    %v91 = vld [vmem:[#allocation3 + $0x90] sm:$0xff]
    %v92 = vld [vmem:[#allocation3 + $0x98] sm:$0xff]
    %v93 = vld [vmem:[#allocation3 + $0xa0] sm:$0xff]
    %v94 = vld [vmem:[#allocation3 + $0xa8] sm:$0xff]
    %v95 = vld [vmem:[#allocation3 + $0xb0] sm:$0xff]
    %v96 = vld [vmem:[#allocation3 + $0xb8] sm:$0xff]
    %v97 = vld [vmem:[#allocation3 + $0xc0] sm:$0xff]
    %v98 = vld [vmem:[#allocation3 + $0xc8] sm:$0xff]
    %v99 = vld [vmem:[#allocation3 + $0xd0] sm:$0xff]
    %v100 = vld [vmem:[#allocation3 + $0xd8] sm:$0xff]
    %v101 = vld [vmem:[#allocation3 + $0xe0] sm:$0xff]
    %v102 = vld [vmem:[#allocation3 + $0xe8] sm:$0xff]
    %v103 = vld [vmem:[#allocation3 + $0xf0] sm:$0xff]
    %v104 = vld [vmem:[#allocation3 + $0xf8] sm:$0xff]
    %v105 = vld [vmem:[#allocation3 + $0x100] sm:$0xff]
    %v106 = vld [vmem:[#allocation3 + $0x108] sm:$0xff]
    %v107 = vld [vmem:[#allocation3 + $0x110] sm:$0xff]
    %v108 = vld [vmem:[#allocation3 + $0x118] sm:$0xff]
    %v109 = vld [vmem:[#allocation3 + $0x120] sm:$0xff]
    %v110 = vld [vmem:[#allocation3 + $0x128] sm:$0xff]
    %v111 = vld [vmem:[#allocation3 + $0x130] sm:$0xff]
    %v112 = vld [vmem:[#allocation3 + $0x138] sm:$0xff]
    %v113 = vld [vmem:[#allocation3 + $0x140] sm:$0xff]
    %v114 = vld [vmem:[#allocation3 + $0x148] sm:$0xff]
    %v115 = vld [vmem:[#allocation3 + $0x150] sm:$0xff]
    %v116 = vld [vmem:[#allocation3 + $0x158] sm:$0xff]
    %v117 = vld [vmem:[#allocation3 + $0x160] sm:$0xff]
    %v118 = vld [vmem:[#allocation3 + $0x168] sm:$0xff]
    %v119 = vld [vmem:[#allocation3 + $0x170] sm:$0xff]
    %v120 = vld [vmem:[#allocation3 + $0x178] sm:$0xff]
    %v121 = vld [vmem:[#allocation3 + $0x180] sm:$0xff]
    %v122 = vld [vmem:[#allocation3 + $0x188] sm:$0xff]
    %v123 = vld [vmem:[#allocation3 + $0x190] sm:$0xff]
    %v124 = vld [vmem:[#allocation3 + $0x198] sm:$0xff]
    %v125 = vld [vmem:[#allocation3 + $0x1a0] sm:$0xff]
    %v126 = vld [vmem:[#allocation3 + $0x1a8] sm:$0xff]
    %v127 = vld [vmem:[#allocation3 + $0x1b0] sm:$0xff]
    %v128 = vld [vmem:[#allocation3 + $0x1b8] sm:$0xff]
    %v129 = vld [vmem:[#allocation3 + $0x1c0] sm:$0xff]
    %v130 = vld [vmem:[#allocation3 + $0x1c8] sm:$0xff]
    %v131 = vld [vmem:[#allocation3 + $0x1d0] sm:$0xff]
    %v132 = vld [vmem:[#allocation3 + $0x1d8] sm:$0xff]
    %v133 = vld [vmem:[#allocation3 + $0x1e0] sm:$0xff]
    %v134 = vld [vmem:[#allocation3 + $0x1e8] sm:$0xff]
    %v135 = vld [vmem:[#allocation3 + $0x1f0] sm:$0xff]
    %v136 = vld [vmem:[#allocation3 + $0x1f8] sm:$0xff]
    %v137 = vld [vmem:[#allocation3 + $0x200] sm:$0xff]
    %v138 = vld [vmem:[#allocation3 + $0x208] sm:$0xff]
    %v139 = vld [vmem:[#allocation3 + $0x210] sm:$0xff]
    %v140 = vld [vmem:[#allocation3 + $0x218] sm:$0xff]
    %v141 = vld [vmem:[#allocation3 + $0x220] sm:$0xff]
    %v142 = vld [vmem:[#allocation3 + $0x228] sm:$0xff]
    %v143 = vld [vmem:[#allocation3 + $0x230] sm:$0xff]
    %v144 = vld [vmem:[#allocation3 + $0x238] sm:$0xff]
    %v145 = vld [vmem:[#allocation3 + $0x240] sm:$0xff]
    %v146 = vld [vmem:[#allocation3 + $0x248] sm:$0xff]
    %v147 = vld [vmem:[#allocation3 + $0x250] sm:$0xff]
    %v148 = vld [vmem:[#allocation3 + $0x258] sm:$0xff]
    %v149 = vld [vmem:[#allocation3 + $0x260] sm:$0xff]
    %v150 = vld [vmem:[#allocation3 + $0x268] sm:$0xff]
    %v151 = vld [vmem:[#allocation3 + $0x270] sm:$0xff]
    %v152 = vld [vmem:[#allocation3 + $0x278] sm:$0xff]
    %v153 = vld [vmem:[#allocation3 + $0x280] sm:$0xff]
    %v154 = vld [vmem:[#allocation3 + $0x288] sm:$0xff]
    %v155 = vld [vmem:[#allocation3 + $0x290] sm:$0xff]
    %v156 = vld [vmem:[#allocation3 + $0x298] sm:$0xff]
    %v157 = vld [vmem:[#allocation3 + $0x2a0] sm:$0xff]
    %v158 = vld [vmem:[#allocation3 + $0x2a8] sm:$0xff]
    %v159 = vld [vmem:[#allocation3 + $0x2b0] sm:$0xff]
    %v160 = vld [vmem:[#allocation3 + $0x2b8] sm:$0xff]
    %v161 = vld [vmem:[#allocation3 + $0x2c0] sm:$0xff]
    %v162 = vld [vmem:[#allocation3 + $0x2c8] sm:$0xff]
    %v163 = vld [vmem:[#allocation3 + $0x2d0] sm:$0xff]
    %v164 = vld [vmem:[#allocation3 + $0x2d8] sm:$0xff]
    %v165 = vld [vmem:[#allocation3 + $0x2e0] sm:$0xff]
    %v166 = vld [vmem:[#allocation3 + $0x2e8] sm:$0xff]
    %v167 = vld [vmem:[#allocation3 + $0x2f0] sm:$0xff]
    %v168 = vld [vmem:[#allocation3 + $0x2f8] sm:$0xff]
    %v169 = vld [vmem:[#allocation3 + $0x300] sm:$0xff]
    %v170 = vld [vmem:[#allocation3 + $0x308] sm:$0xff]
    %v171 = vld [vmem:[#allocation3 + $0x310] sm:$0xff]
    %v172 = vld [vmem:[#allocation3 + $0x318] sm:$0xff]
    %v173 = vld [vmem:[#allocation3 + $0x320] sm:$0xff]
    %v174 = vld [vmem:[#allocation3 + $0x328] sm:$0xff]
    %v175 = vld [vmem:[#allocation3 + $0x330] sm:$0xff]
    %v176 = vld [vmem:[#allocation3 + $0x338] sm:$0xff]
    %v177 = vld [vmem:[#allocation3 + $0x340] sm:$0xff]
    %v178 = vld [vmem:[#allocation3 + $0x348] sm:$0xff]
    %v179 = vld [vmem:[#allocation3 + $0x350] sm:$0xff]
    %v180 = vld [vmem:[#allocation3 + $0x358] sm:$0xff]
    %v181 = vld [vmem:[#allocation3 + $0x360] sm:$0xff]
    %v182 = vld [vmem:[#allocation3 + $0x368] sm:$0xff]
    %v183 = vld [vmem:[#allocation3 + $0x370] sm:$0xff]
    %v184 = vld [vmem:[#allocation3 + $0x378] sm:$0xff]
    %v185 = vld [vmem:[#allocation3 + $0x380] sm:$0xff]
    %v186 = vld [vmem:[#allocation3 + $0x388] sm:$0xff]
    %v187 = vld [vmem:[#allocation3 + $0x390] sm:$0xff]
    %v188 = vld [vmem:[#allocation3 + $0x398] sm:$0xff]
    %v189 = vld [vmem:[#allocation3 + $0x3a0] sm:$0xff]
    %v190 = vld [vmem:[#allocation3 + $0x3a8] sm:$0xff]
    %v191 = vld [vmem:[#allocation3 + $0x3b0] sm:$0xff]
    %v192 = vld [vmem:[#allocation3 + $0x3b8] sm:$0xff]
    %v193 = vld [vmem:[#allocation3 + $0x3c0] sm:$0xff]
    %v194 = vld [vmem:[#allocation3 + $0x3c8] sm:$0xff]
    %v195 = vld [vmem:[#allocation3 + $0x3d0] sm:$0xff]
    %v196 = vld [vmem:[#allocation3 + $0x3d8] sm:$0xff]
    %v197 = vld [vmem:[#allocation3 + $0x3e0] sm:$0xff]
    %v198 = vld [vmem:[#allocation3 + $0x3e8] sm:$0xff]
    %v199 = vld [vmem:[#allocation3 + $0x3f0] sm:$0xff]
    %v200 = vld [vmem:[#allocation3 + $0x3f8] sm:$0xff]
    %v201 = vld [vmem:[#allocation3 + $0x400] sm:$0xff]
    %v202 = vld [vmem:[#allocation3 + $0x408] sm:$0xff]
    %v203 = vld [vmem:[#allocation3 + $0x410] sm:$0xff]
    %v204 = vld [vmem:[#allocation3 + $0x418] sm:$0xff]
    %v205 = vld [vmem:[#allocation3 + $0x420] sm:$0xff]
    %v206 = vld [vmem:[#allocation3 + $0x428] sm:$0xff]
    %v207 = vld [vmem:[#allocation3 + $0x430] sm:$0xff]
    %v208 = vld [vmem:[#allocation3 + $0x438] sm:$0xff]
    %v209 = vld [vmem:[#allocation3 + $0x440] sm:$0xff]
    %v210 = vld [vmem:[#allocation3 + $0x448] sm:$0xff]
    %v211 = vld [vmem:[#allocation3 + $0x450] sm:$0xff]
    %v212 = vld [vmem:[#allocation3 + $0x458] sm:$0xff]
    %v213 = vld [vmem:[#allocation3 + $0x460] sm:$0xff]
    %v214 = vld [vmem:[#allocation3 + $0x468] sm:$0xff]
    %v215 = vld [vmem:[#allocation3 + $0x470] sm:$0xff]
    %v216 = vld [vmem:[#allocation3 + $0x478] sm:$0xff]
    %v217 = vld [vmem:[#allocation3 + $0x480] sm:$0xff]
    %v218 = vld [vmem:[#allocation3 + $0x488] sm:$0xff]
    %v219 = vld [vmem:[#allocation3 + $0x490] sm:$0xff]
    %v220 = vld [vmem:[#allocation3 + $0x498] sm:$0xff]
    %v221 = vld [vmem:[#allocation3 + $0x4a0] sm:$0xff]
    %v222 = vld [vmem:[#allocation3 + $0x4a8] sm:$0xff]
    %v223 = vld [vmem:[#allocation3 + $0x4b0] sm:$0xff]
    %v224 = vld [vmem:[#allocation3 + $0x4b8] sm:$0xff]
    %v225 = vld [vmem:[#allocation3 + $0x4c0] sm:$0xff]
    %v226 = vld [vmem:[#allocation3 + $0x4c8] sm:$0xff]
    %v227 = vld [vmem:[#allocation3 + $0x4d0] sm:$0xff]
    %v228 = vld [vmem:[#allocation3 + $0x4d8] sm:$0xff]
    %v229 = vld [vmem:[#allocation3 + $0x4e0] sm:$0xff]
    %v230 = vld [vmem:[#allocation3 + $0x4e8] sm:$0xff]
    %v231 = vld [vmem:[#allocation3 + $0x4f0] sm:$0xff]
    %v232 = vld [vmem:[#allocation3 + $0x4f8] sm:$0xff]
    %v233 = vld [vmem:[#allocation3 + $0x500] sm:$0xff]
    %v234 = vld [vmem:[#allocation3 + $0x508] sm:$0xff]
    %v235 = vld [vmem:[#allocation3 + $0x510] sm:$0xff]
    %v236 = vld [vmem:[#allocation3 + $0x518] sm:$0xff]
    %v237 = vld [vmem:[#allocation3 + $0x520] sm:$0xff]
    %v238 = vld [vmem:[#allocation3 + $0x528] sm:$0xff]
    %v239 = vld [vmem:[#allocation3 + $0x530] sm:$0xff]
    %v240 = vld [vmem:[#allocation3 + $0x538] sm:$0xff]
    %v241 = vld [vmem:[#allocation3 + $0x540] sm:$0xff]
    %v242 = vld [vmem:[#allocation3 + $0x548] sm:$0xff]
    %v243 = vld [vmem:[#allocation3 + $0x550] sm:$0xff]
    %v244 = vld [vmem:[#allocation3 + $0x558] sm:$0xff]
    %v245 = vld [vmem:[#allocation3 + $0x560] sm:$0xff]
    %v246 = vld [vmem:[#allocation3 + $0x568] sm:$0xff]
    %v247 = vld [vmem:[#allocation3 + $0x570] sm:$0xff]
    %v248 = vld [vmem:[#allocation3 + $0x578] sm:$0xff]
    %v249 = vld [vmem:[#allocation3 + $0x580] sm:$0xff]
    %v250 = vld [vmem:[#allocation3 + $0x588] sm:$0xff]
    %v251 = vld [vmem:[#allocation3 + $0x590] sm:$0xff]
    %v252 = vld [vmem:[#allocation3 + $0x598] sm:$0xff]
    %v253 = vld [vmem:[#allocation3 + $0x5a0] sm:$0xff]
    %v254 = vld [vmem:[#allocation3 + $0x5a8] sm:$0xff]
    %v255 = vld [vmem:[#allocation3 + $0x5b0] sm:$0xff]
    %v256 = vld [vmem:[#allocation3 + $0x5b8] sm:$0xff]
    %v257 = vld [vmem:[#allocation3 + $0x5c0] sm:$0xff]
    %v258 = vld [vmem:[#allocation3 + $0x5c8] sm:$0xff]
    %v259 = vld [vmem:[#allocation3 + $0x5d0] sm:$0xff]
    %v260 = vld [vmem:[#allocation3 + $0x5d8] sm:$0xff]
    %v261 = vld [vmem:[#allocation3 + $0x5e0] sm:$0xff]
    %v262 = vld [vmem:[#allocation3 + $0x5e8] sm:$0xff]
    %v263 = vld [vmem:[#allocation3 + $0x5f0] sm:$0xff]
    %v264 = vld [vmem:[#allocation3 + $0x5f8] sm:$0xff]
    %v265 = vld [vmem:[#allocation3 + $0x600] sm:$0xff]
    %v266 = vld [vmem:[#allocation3 + $0x608] sm:$0xff]
    %v267 = vld [vmem:[#allocation3 + $0x610] sm:$0xff]
    %v268 = vld [vmem:[#allocation3 + $0x618] sm:$0xff]
    %v269 = vld [vmem:[#allocation3 + $0x620] sm:$0xff]
    %v270 = vld [vmem:[#allocation3 + $0x628] sm:$0xff]
    %v271 = vld [vmem:[#allocation3 + $0x630] sm:$0xff]
    %v272 = vld [vmem:[#allocation3 + $0x638] sm:$0xff]
    %v273 = vld [vmem:[#allocation3 + $0x640] sm:$0xff]
    %v274 = vld [vmem:[#allocation3 + $0x648] sm:$0xff]
    %v275 = vld [vmem:[#allocation3 + $0x650] sm:$0xff]
    %v276 = vld [vmem:[#allocation3 + $0x658] sm:$0xff]
    %v277 = vld [vmem:[#allocation3 + $0x660] sm:$0xff]
    %v278 = vld [vmem:[#allocation3 + $0x668] sm:$0xff]
    %v279 = vld [vmem:[#allocation3 + $0x670] sm:$0xff]
    %v280 = vld [vmem:[#allocation3 + $0x678] sm:$0xff]
    %v281 = vld [vmem:[#allocation3 + $0x680] sm:$0xff]
    %v282 = vld [vmem:[#allocation3 + $0x688] sm:$0xff]
    %v283 = vld [vmem:[#allocation3 + $0x690] sm:$0xff]
    %v284 = vld [vmem:[#allocation3 + $0x698] sm:$0xff]
    %v285 = vld [vmem:[#allocation3 + $0x6a0] sm:$0xff]
    %v286 = vld [vmem:[#allocation3 + $0x6a8] sm:$0xff]
    %v287 = vld [vmem:[#allocation3 + $0x6b0] sm:$0xff]
    %v288 = vld [vmem:[#allocation3 + $0x6b8] sm:$0xff]
    %v289 = vld [vmem:[#allocation3 + $0x6c0] sm:$0xff]
    %v290 = vld [vmem:[#allocation3 + $0x6c8] sm:$0xff]
    %v291 = vld [vmem:[#allocation3 + $0x6d0] sm:$0xff]
    %v292 = vld [vmem:[#allocation3 + $0x6d8] sm:$0xff]
    %v293 = vld [vmem:[#allocation3 + $0x6e0] sm:$0xff]
    %v294 = vld [vmem:[#allocation3 + $0x6e8] sm:$0xff]
    %v295 = vld [vmem:[#allocation3 + $0x6f0] sm:$0xff]
    %v296 = vld [vmem:[#allocation3 + $0x6f8] sm:$0xff]
    %v297 = vld [vmem:[#allocation3 + $0x700] sm:$0xff]
    %v298 = vld [vmem:[#allocation3 + $0x708] sm:$0xff]
    %v299 = vld [vmem:[#allocation3 + $0x710] sm:$0xff]
    %v300 = vld [vmem:[#allocation3 + $0x718] sm:$0xff]
    %v301 = vld [vmem:[#allocation3 + $0x720] sm:$0xff]
    %v302 = vld [vmem:[#allocation3 + $0x728] sm:$0xff]
    %v303 = vld [vmem:[#allocation3 + $0x730] sm:$0xff]
    %v304 = vld [vmem:[#allocation3 + $0x738] sm:$0xff]
    %v305 = vld [vmem:[#allocation3 + $0x740] sm:$0xff]
    %v306 = vld [vmem:[#allocation3 + $0x748] sm:$0xff]
    %v307 = vld [vmem:[#allocation3 + $0x750] sm:$0xff]
    %v308 = vld [vmem:[#allocation3 + $0x758] sm:$0xff]
    %v309 = vld [vmem:[#allocation3 + $0x760] sm:$0xff]
    %v310 = vld [vmem:[#allocation3 + $0x768] sm:$0xff]
    %v311 = vld [vmem:[#allocation3 + $0x770] sm:$0xff]
    %v312 = vld [vmem:[#allocation3 + $0x778] sm:$0xff]
    %v313 = vld [vmem:[#allocation3 + $0x780] sm:$0xff]
    %v314 = vld [vmem:[#allocation3 + $0x788] sm:$0xff]
    %v315 = vld [vmem:[#allocation3 + $0x790] sm:$0xff]
    %v316 = vld [vmem:[#allocation3 + $0x798] sm:$0xff]
    %v317 = vld [vmem:[#allocation3 + $0x7a0] sm:$0xff]
    %v318 = vld [vmem:[#allocation3 + $0x7a8] sm:$0xff]
    %v319 = vld [vmem:[#allocation3 + $0x7b0] sm:$0xff]
    %v320 = vld [vmem:[#allocation3 + $0x7b8] sm:$0xff]
    %v321 = vld [vmem:[#allocation3 + $0x7c0] sm:$0xff]
    %v322 = vld [vmem:[#allocation3 + $0x7c8] sm:$0xff]
    %v323 = vld [vmem:[#allocation3 + $0x7d0] sm:$0xff]
    %v324 = vld [vmem:[#allocation3 + $0x7d8] sm:$0xff]
    %v325 = vld [vmem:[#allocation3 + $0x7e0] sm:$0xff]
    %v326 = vld [vmem:[#allocation3 + $0x7e8] sm:$0xff]
    %v327 = vld [vmem:[#allocation3 + $0x7f0] sm:$0xff]
    %v328 = vld [vmem:[#allocation3 + $0x7f8] sm:$0xff]
    %v329 = vld [vmem:[#allocation3 + $0x800] sm:$0xff]
    %v330 = vld [vmem:[#allocation3 + $0x808] sm:$0xff]
    %v331 = vld [vmem:[#allocation3 + $0x810] sm:$0xff]
    %v332 = vld [vmem:[#allocation3 + $0x818] sm:$0xff]
    %v333 = vld [vmem:[#allocation3 + $0x820] sm:$0xff]
    %v334 = vld [vmem:[#allocation3 + $0x828] sm:$0xff]
    %v335 = vld [vmem:[#allocation3 + $0x830] sm:$0xff]
    %v336 = vld [vmem:[#allocation3 + $0x838] sm:$0xff]
    %v337 = vld [vmem:[#allocation3 + $0x840] sm:$0xff]
    %v338 = vld [vmem:[#allocation3 + $0x848] sm:$0xff]
    %v339 = vld [vmem:[#allocation3 + $0x850] sm:$0xff]
    %v340 = vld [vmem:[#allocation3 + $0x858] sm:$0xff]
    %v341 = vld [vmem:[#allocation3 + $0x860] sm:$0xff]
    %v342 = vld [vmem:[#allocation3 + $0x868] sm:$0xff]
    %v343 = vld [vmem:[#allocation3 + $0x870] sm:$0xff]
    %v344 = vld [vmem:[#allocation3 + $0x878] sm:$0xff]
    %v345 = vld [vmem:[#allocation3 + $0x880] sm:$0xff]
    %v346 = vld [vmem:[#allocation3 + $0x888] sm:$0xff]
    %v347 = vld [vmem:[#allocation3 + $0x890] sm:$0xff]
    %v348 = vld [vmem:[#allocation3 + $0x898] sm:$0xff]
    %v349 = vld [vmem:[#allocation3 + $0x8a0] sm:$0xff]
    %v350 = vld [vmem:[#allocation3 + $0x8a8] sm:$0xff]
    %v351 = vld [vmem:[#allocation3 + $0x8b0] sm:$0xff]
    %v352 = vld [vmem:[#allocation3 + $0x8b8] sm:$0xff]
    %v353 = vld [vmem:[#allocation3 + $0x8c0] sm:$0xff]
    %v354 = vld [vmem:[#allocation3 + $0x8c8] sm:$0xff]
    %v355 = vld [vmem:[#allocation3 + $0x8d0] sm:$0xff]
    %v356 = vld [vmem:[#allocation3 + $0x8d8] sm:$0xff]
    %v357 = vld [vmem:[#allocation3 + $0x8e0] sm:$0xff]
    %v358 = vld [vmem:[#allocation3 + $0x8e8] sm:$0xff]
    %v359 = vld [vmem:[#allocation3 + $0x8f0] sm:$0xff]
    %v360 = vld [vmem:[#allocation3 + $0x8f8] sm:$0xff]
    %v361 = vld [vmem:[#allocation3 + $0x900] sm:$0xff]
    %v362 = vld [vmem:[#allocation3 + $0x908] sm:$0xff]
    %v363 = vld [vmem:[#allocation3 + $0x910] sm:$0xff]
    %v364 = vld [vmem:[#allocation3 + $0x918] sm:$0xff]
    %v365 = vld [vmem:[#allocation3 + $0x920] sm:$0xff]
    %v366 = vld [vmem:[#allocation3 + $0x928] sm:$0xff]
    %v367 = vld [vmem:[#allocation3 + $0x930] sm:$0xff]
    %v368 = vld [vmem:[#allocation3 + $0x938] sm:$0xff]
    %v369 = vld [vmem:[#allocation3 + $0x940] sm:$0xf]
    %v370 = vld [vmem:[#allocation3 + $0x948] sm:$0xf]
    %v371 = vld [vmem:[#allocation3 + $0x950] sm:$0xf]
    %v372 = vld [vmem:[#allocation3 + $0x958] sm:$0xf]
    %v373 = vld [vmem:[#allocation3 + $0x960] sm:$0xf]
    %v374 = vld [vmem:[#allocation3 + $0x968] sm:$0xf]
    %v375 = vld [vmem:[#allocation3 + $0x970] sm:$0xf]
    %v376 = vld [vmem:[#allocation3 + $0x978] sm:$0xf]
    %v377 = vpack.c.bf16 %v81, %v73
    %v378 = vpack.c.bf16 %v82, %v74
    %v379 = vpack.c.bf16 %v83, %v75
    %v380 = vpack.c.bf16 %v84, %v76
    %v381 = vpack.c.bf16 %v85, %v77
    %v382 = vpack.c.bf16 %v86, %v78
    %v383 = vpack.c.bf16 %v87, %v79
    %v384 = vpack.c.bf16 %v88, %v80
    %v385 = vpack.c.bf16 %v97, %v89
    %v386 = vpack.c.bf16 %v98, %v90
    %v387 = vpack.c.bf16 %v99, %v91
    %v388 = vpack.c.bf16 %v100, %v92
    %v389 = vpack.c.bf16 %v101, %v93
    %v390 = vpack.c.bf16 %v102, %v94
    %v391 = vpack.c.bf16 %v103, %v95
    %v392 = vpack.c.bf16 %v104, %v96
    %v393 = vpack.c.bf16 %v113, %v105
    %v394 = vpack.c.bf16 %v114, %v106
    %v395 = vpack.c.bf16 %v115, %v107
    %v396 = vpack.c.bf16 %v116, %v108
    %v397 = vpack.c.bf16 %v117, %v109
    %v398 = vpack.c.bf16 %v118, %v110
    %v399 = vpack.c.bf16 %v119, %v111
    %v400 = vpack.c.bf16 %v120, %v112
    %v401 = vpack.c.bf16 %v129, %v121
    %v402 = vpack.c.bf16 %v130, %v122
    %v403 = vpack.c.bf16 %v131, %v123
    %v404 = vpack.c.bf16 %v132, %v124
    %v405 = vpack.c.bf16 %v133, %v125
    %v406 = vpack.c.bf16 %v134, %v126
    %v407 = vpack.c.bf16 %v135, %v127
    %v408 = vpack.c.bf16 %v136, %v128
    %v409 = vpack.c.bf16 %v145, %v137
    %v410 = vpack.c.bf16 %v146, %v138
    %v411 = vpack.c.bf16 %v147, %v139
    %v412 = vpack.c.bf16 %v148, %v140
    %v413 = vpack.c.bf16 %v149, %v141
    %v414 = vpack.c.bf16 %v150, %v142
    %v415 = vpack.c.bf16 %v151, %v143
    %v416 = vpack.c.bf16 %v152, %v144
    %v417 = vpack.c.bf16 %v161, %v153
    %v418 = vpack.c.bf16 %v162, %v154
    %v419 = vpack.c.bf16 %v163, %v155
    %v420 = vpack.c.bf16 %v164, %v156
    %v421 = vpack.c.bf16 %v165, %v157
    %v422 = vpack.c.bf16 %v166, %v158
    %v423 = vpack.c.bf16 %v167, %v159
    %v424 = vpack.c.bf16 %v168, %v160
    %v425 = vpack.c.bf16 %v177, %v169
    %v426 = vpack.c.bf16 %v178, %v170
    %v427 = vpack.c.bf16 %v179, %v171
    %v428 = vpack.c.bf16 %v180, %v172
    %v429 = vpack.c.bf16 %v181, %v173
    %v430 = vpack.c.bf16 %v182, %v174
    %v431 = vpack.c.bf16 %v183, %v175
    %v432 = vpack.c.bf16 %v184, %v176
    %v433 = vpack.c.bf16 %v193, %v185
    %v434 = vpack.c.bf16 %v194, %v186
    %v435 = vpack.c.bf16 %v195, %v187
    %v436 = vpack.c.bf16 %v196, %v188
    %v437 = vpack.c.bf16 %v197, %v189
    %v438 = vpack.c.bf16 %v198, %v190
    %v439 = vpack.c.bf16 %v199, %v191
    %v440 = vpack.c.bf16 %v200, %v192
    %v441 = vpack.c.bf16 %v209, %v201
    %v442 = vpack.c.bf16 %v210, %v202
    %v443 = vpack.c.bf16 %v211, %v203
    %v444 = vpack.c.bf16 %v212, %v204
    %v445 = vpack.c.bf16 %v213, %v205
    %v446 = vpack.c.bf16 %v214, %v206
    %v447 = vpack.c.bf16 %v215, %v207
    %v448 = vpack.c.bf16 %v216, %v208
    %v449 = vpack.c.bf16 %v225, %v217
    %v450 = vpack.c.bf16 %v226, %v218
    %v451 = vpack.c.bf16 %v227, %v219
    %v452 = vpack.c.bf16 %v228, %v220
    %v453 = vpack.c.bf16 %v229, %v221
    %v454 = vpack.c.bf16 %v230, %v222
    %v455 = vpack.c.bf16 %v231, %v223
    %v456 = vpack.c.bf16 %v232, %v224
    %v457 = vpack.c.bf16 %v241, %v233
    %v458 = vpack.c.bf16 %v242, %v234
    %v459 = vpack.c.bf16 %v243, %v235
    %v460 = vpack.c.bf16 %v244, %v236
    %v461 = vpack.c.bf16 %v245, %v237
    %v462 = vpack.c.bf16 %v246, %v238
    %v463 = vpack.c.bf16 %v247, %v239
    %v464 = vpack.c.bf16 %v248, %v240
    %v465 = vpack.c.bf16 %v257, %v249
    %v466 = vpack.c.bf16 %v258, %v250
    %v467 = vpack.c.bf16 %v259, %v251
    %v468 = vpack.c.bf16 %v260, %v252
    %v469 = vpack.c.bf16 %v261, %v253
    %v470 = vpack.c.bf16 %v262, %v254
    %v471 = vpack.c.bf16 %v263, %v255
    %v472 = vpack.c.bf16 %v264, %v256
    %v473 = vpack.c.bf16 %v273, %v265
    %v474 = vpack.c.bf16 %v274, %v266
    %v475 = vpack.c.bf16 %v275, %v267
    %v476 = vpack.c.bf16 %v276, %v268
    %v477 = vpack.c.bf16 %v277, %v269
    %v478 = vpack.c.bf16 %v278, %v270
    %v479 = vpack.c.bf16 %v279, %v271
    %v480 = vpack.c.bf16 %v280, %v272
    %v481 = vpack.c.bf16 %v289, %v281
    %v482 = vpack.c.bf16 %v290, %v282
    %v483 = vpack.c.bf16 %v291, %v283
    %v484 = vpack.c.bf16 %v292, %v284
    %v485 = vpack.c.bf16 %v293, %v285
    %v486 = vpack.c.bf16 %v294, %v286
    %v487 = vpack.c.bf16 %v295, %v287
    %v488 = vpack.c.bf16 %v296, %v288
    %v489 = vpack.c.bf16 %v305, %v297
    %v490 = vpack.c.bf16 %v306, %v298
    %v491 = vpack.c.bf16 %v307, %v299
    %v492 = vpack.c.bf16 %v308, %v300
    %v493 = vpack.c.bf16 %v309, %v301
    %v494 = vpack.c.bf16 %v310, %v302
    %v495 = vpack.c.bf16 %v311, %v303
    %v496 = vpack.c.bf16 %v312, %v304
    %v497 = vpack.c.bf16 %v321, %v313
    %v498 = vpack.c.bf16 %v322, %v314
    %v499 = vpack.c.bf16 %v323, %v315
    %v500 = vpack.c.bf16 %v324, %v316
    %v501 = vpack.c.bf16 %v325, %v317
    %v502 = vpack.c.bf16 %v326, %v318
    %v503 = vpack.c.bf16 %v327, %v319
    %v504 = vpack.c.bf16 %v328, %v320
    %v505 = vpack.c.bf16 %v337, %v329
    %v506 = vpack.c.bf16 %v338, %v330
    %v507 = vpack.c.bf16 %v339, %v331
    %v508 = vpack.c.bf16 %v340, %v332
    %v509 = vpack.c.bf16 %v341, %v333
    %v510 = vpack.c.bf16 %v342, %v334
    %v511 = vpack.c.bf16 %v343, %v335
    %v512 = vpack.c.bf16 %v344, %v336
    %v513 = vpack.c.bf16 %v353, %v345
    %v514 = vpack.c.bf16 %v354, %v346
    %v515 = vpack.c.bf16 %v355, %v347
    %v516 = vpack.c.bf16 %v356, %v348
    %v517 = vpack.c.bf16 %v357, %v349
    %v518 = vpack.c.bf16 %v358, %v350
    %v519 = vpack.c.bf16 %v359, %v351
    %v520 = vpack.c.bf16 %v360, %v352
    %v521 = vpack.c.bf16 %v369, %v361
    %v522 = vpack.c.bf16 %v370, %v362
    %v523 = vpack.c.bf16 %v371, %v363
    %v524 = vpack.c.bf16 %v372, %v364
    %v525 = vpack.c.bf16 %v373, %v365
    %v526 = vpack.c.bf16 %v374, %v366
    %v527 = vpack.c.bf16 %v375, %v367
    %v528 = vpack.c.bf16 %v376, %v368
    %v529 = vld [vmem:[#allocation5] sm:$0xff]
    %v530 = vld [vmem:[#allocation5 + $0x8] sm:$0xff]
    %v531 = vld [vmem:[#allocation5 + $0x10] sm:$0xff]
    %v532 = vld [vmem:[#allocation5 + $0x18] sm:$0xff]
    %v533 = vld [vmem:[#allocation5 + $0x20] sm:$0xff]
    %v534 = vld [vmem:[#allocation5 + $0x28] sm:$0xff]
    %v535 = vld [vmem:[#allocation5 + $0x30] sm:$0xff]
    %v536 = vld [vmem:[#allocation5 + $0x38] sm:$0xff]
    %v537 = vld [vmem:[#allocation5 + $0x40] sm:$0xff]
    %v538 = vld [vmem:[#allocation5 + $0x48] sm:$0xff]
    %v539 = vld [vmem:[#allocation5 + $0x50] sm:$0xff]
    %v540 = vld [vmem:[#allocation5 + $0x58] sm:$0xff]
    %v541 = vld [vmem:[#allocation5 + $0x60] sm:$0xff]
    %v542 = vld [vmem:[#allocation5 + $0x68] sm:$0xff]
    %v543 = vld [vmem:[#allocation5 + $0x70] sm:$0xff]
    %v544 = vld [vmem:[#allocation5 + $0x78] sm:$0xff]
    %v545 = vld [vmem:[#allocation5 + $0x80] sm:$0xff]
    %v546 = vld [vmem:[#allocation5 + $0x88] sm:$0xff]
    %v547 = vld [vmem:[#allocation5 + $0x90] sm:$0xff]
    %v548 = vld [vmem:[#allocation5 + $0x98] sm:$0xff]
    %v549 = vld [vmem:[#allocation5 + $0xa0] sm:$0xff]
    %v550 = vld [vmem:[#allocation5 + $0xa8] sm:$0xff]
    %v551 = vld [vmem:[#allocation5 + $0xb0] sm:$0xff]
    %v552 = vld [vmem:[#allocation5 + $0xb8] sm:$0xff]
    %v553 = vld [vmem:[#allocation5 + $0xc0] sm:$0xff]
    %v554 = vld [vmem:[#allocation5 + $0xc8] sm:$0xff]
    %v555 = vld [vmem:[#allocation5 + $0xd0] sm:$0xff]
    %v556 = vld [vmem:[#allocation5 + $0xd8] sm:$0xff]
    %v557 = vld [vmem:[#allocation5 + $0xe0] sm:$0xff]
    %v558 = vld [vmem:[#allocation5 + $0xe8] sm:$0xff]
    %v559 = vld [vmem:[#allocation5 + $0xf0] sm:$0xff]
    %v560 = vld [vmem:[#allocation5 + $0xf8] sm:$0xff]
    %v561 = vld [vmem:[#allocation5 + $0x100] sm:$0xff]
    %v562 = vld [vmem:[#allocation5 + $0x108] sm:$0xff]
    %v563 = vld [vmem:[#allocation5 + $0x110] sm:$0xff]
    %v564 = vld [vmem:[#allocation5 + $0x118] sm:$0xff]
    %v565 = vld [vmem:[#allocation5 + $0x120] sm:$0xff]
    %v566 = vld [vmem:[#allocation5 + $0x128] sm:$0xff]
    %v567 = vld [vmem:[#allocation5 + $0x130] sm:$0xff]
    %v568 = vld [vmem:[#allocation5 + $0x138] sm:$0xff]
    %v569 = vld [vmem:[#allocation5 + $0x140] sm:$0xff]
    %v570 = vld [vmem:[#allocation5 + $0x148] sm:$0xff]
    %v571 = vld [vmem:[#allocation5 + $0x150] sm:$0xff]
    %v572 = vld [vmem:[#allocation5 + $0x158] sm:$0xff]
    %v573 = vld [vmem:[#allocation5 + $0x160] sm:$0xff]
    %v574 = vld [vmem:[#allocation5 + $0x168] sm:$0xff]
    %v575 = vld [vmem:[#allocation5 + $0x170] sm:$0xff]
    %v576 = vld [vmem:[#allocation5 + $0x178] sm:$0xff]
    %v577 = vld [vmem:[#allocation5 + $0x180] sm:$0xff]
    %v578 = vld [vmem:[#allocation5 + $0x188] sm:$0xff]
    %v579 = vld [vmem:[#allocation5 + $0x190] sm:$0xff]
    %v580 = vld [vmem:[#allocation5 + $0x198] sm:$0xff]
    %v581 = vld [vmem:[#allocation5 + $0x1a0] sm:$0xff]
    %v582 = vld [vmem:[#allocation5 + $0x1a8] sm:$0xff]
    %v583 = vld [vmem:[#allocation5 + $0x1b0] sm:$0xff]
    %v584 = vld [vmem:[#allocation5 + $0x1b8] sm:$0xff]
    %v585 = vld [vmem:[#allocation5 + $0x1c0] sm:$0xff]
    %v586 = vld [vmem:[#allocation5 + $0x1c8] sm:$0xff]
    %v587 = vld [vmem:[#allocation5 + $0x1d0] sm:$0xff]
    %v588 = vld [vmem:[#allocation5 + $0x1d8] sm:$0xff]
    %v589 = vld [vmem:[#allocation5 + $0x1e0] sm:$0xff]
    %v590 = vld [vmem:[#allocation5 + $0x1e8] sm:$0xff]
    %v591 = vld [vmem:[#allocation5 + $0x1f0] sm:$0xff]
    %v592 = vld [vmem:[#allocation5 + $0x1f8] sm:$0xff]
    %v593 = vld [vmem:[#allocation5 + $0x200] sm:$0xff]
    %v594 = vld [vmem:[#allocation5 + $0x208] sm:$0xff]
    %v595 = vld [vmem:[#allocation5 + $0x210] sm:$0xff]
    %v596 = vld [vmem:[#allocation5 + $0x218] sm:$0xff]
    %v597 = vld [vmem:[#allocation5 + $0x220] sm:$0xff]
    %v598 = vld [vmem:[#allocation5 + $0x228] sm:$0xff]
    %v599 = vld [vmem:[#allocation5 + $0x230] sm:$0xff]
    %v600 = vld [vmem:[#allocation5 + $0x238] sm:$0xff]
    %v601 = vld [vmem:[#allocation5 + $0x240] sm:$0xff]
    %v602 = vld [vmem:[#allocation5 + $0x248] sm:$0xff]
    %v603 = vld [vmem:[#allocation5 + $0x250] sm:$0xff]
    %v604 = vld [vmem:[#allocation5 + $0x258] sm:$0xff]
    %v605 = vld [vmem:[#allocation5 + $0x260] sm:$0xff]
    %v606 = vld [vmem:[#allocation5 + $0x268] sm:$0xff]
    %v607 = vld [vmem:[#allocation5 + $0x270] sm:$0xff]
    %v608 = vld [vmem:[#allocation5 + $0x278] sm:$0xff]
    %v609 = vld [vmem:[#allocation5 + $0x280] sm:$0xff]
    %v610 = vld [vmem:[#allocation5 + $0x288] sm:$0xff]
    %v611 = vld [vmem:[#allocation5 + $0x290] sm:$0xff]
    %v612 = vld [vmem:[#allocation5 + $0x298] sm:$0xff]
    %v613 = vld [vmem:[#allocation5 + $0x2a0] sm:$0xff]
    %v614 = vld [vmem:[#allocation5 + $0x2a8] sm:$0xff]
    %v615 = vld [vmem:[#allocation5 + $0x2b0] sm:$0xff]
    %v616 = vld [vmem:[#allocation5 + $0x2b8] sm:$0xff]
    %v617 = vld [vmem:[#allocation5 + $0x2c0] sm:$0xff]
    %v618 = vld [vmem:[#allocation5 + $0x2c8] sm:$0xff]
    %v619 = vld [vmem:[#allocation5 + $0x2d0] sm:$0xff]
    %v620 = vld [vmem:[#allocation5 + $0x2d8] sm:$0xff]
    %v621 = vld [vmem:[#allocation5 + $0x2e0] sm:$0xff]
    %v622 = vld [vmem:[#allocation5 + $0x2e8] sm:$0xff]
    %v623 = vld [vmem:[#allocation5 + $0x2f0] sm:$0xff]
    %v624 = vld [vmem:[#allocation5 + $0x2f8] sm:$0xff]
    %v625 = vld [vmem:[#allocation5 + $0x300] sm:$0xff]
    %v626 = vld [vmem:[#allocation5 + $0x308] sm:$0xff]
    %v627 = vld [vmem:[#allocation5 + $0x310] sm:$0xff]
    %v628 = vld [vmem:[#allocation5 + $0x318] sm:$0xff]
    %v629 = vld [vmem:[#allocation5 + $0x320] sm:$0xff]
    %v630 = vld [vmem:[#allocation5 + $0x328] sm:$0xff]
    %v631 = vld [vmem:[#allocation5 + $0x330] sm:$0xff]
    %v632 = vld [vmem:[#allocation5 + $0x338] sm:$0xff]
    %v633 = vld [vmem:[#allocation5 + $0x340] sm:$0xff]
    %v634 = vld [vmem:[#allocation5 + $0x348] sm:$0xff]
    %v635 = vld [vmem:[#allocation5 + $0x350] sm:$0xff]
    %v636 = vld [vmem:[#allocation5 + $0x358] sm:$0xff]
    %v637 = vld [vmem:[#allocation5 + $0x360] sm:$0xff]
    %v638 = vld [vmem:[#allocation5 + $0x368] sm:$0xff]
    %v639 = vld [vmem:[#allocation5 + $0x370] sm:$0xff]
    %v640 = vld [vmem:[#allocation5 + $0x378] sm:$0xff]
    %v641 = vld [vmem:[#allocation5 + $0x380] sm:$0xff]
    %v642 = vld [vmem:[#allocation5 + $0x388] sm:$0xff]
    %v643 = vld [vmem:[#allocation5 + $0x390] sm:$0xff]
    %v644 = vld [vmem:[#allocation5 + $0x398] sm:$0xff]
    %v645 = vld [vmem:[#allocation5 + $0x3a0] sm:$0xff]
    %v646 = vld [vmem:[#allocation5 + $0x3a8] sm:$0xff]
    %v647 = vld [vmem:[#allocation5 + $0x3b0] sm:$0xff]
    %v648 = vld [vmem:[#allocation5 + $0x3b8] sm:$0xff]
    %v649 = vld [vmem:[#allocation5 + $0x3c0] sm:$0xff]
    %v650 = vld [vmem:[#allocation5 + $0x3c8] sm:$0xff]
    %v651 = vld [vmem:[#allocation5 + $0x3d0] sm:$0xff]
    %v652 = vld [vmem:[#allocation5 + $0x3d8] sm:$0xff]
    %v653 = vld [vmem:[#allocation5 + $0x3e0] sm:$0xff]
    %v654 = vld [vmem:[#allocation5 + $0x3e8] sm:$0xff]
    %v655 = vld [vmem:[#allocation5 + $0x3f0] sm:$0xff]
    %v656 = vld [vmem:[#allocation5 + $0x3f8] sm:$0xff]
    %v657 = vld [vmem:[#allocation5 + $0x400] sm:$0xff]
    %v658 = vld [vmem:[#allocation5 + $0x408] sm:$0xff]
    %v659 = vld [vmem:[#allocation5 + $0x410] sm:$0xff]
    %v660 = vld [vmem:[#allocation5 + $0x418] sm:$0xff]
    %v661 = vld [vmem:[#allocation5 + $0x420] sm:$0xff]
    %v662 = vld [vmem:[#allocation5 + $0x428] sm:$0xff]
    %v663 = vld [vmem:[#allocation5 + $0x430] sm:$0xff]
    %v664 = vld [vmem:[#allocation5 + $0x438] sm:$0xff]
    %v665 = vld [vmem:[#allocation5 + $0x440] sm:$0xff]
    %v666 = vld [vmem:[#allocation5 + $0x448] sm:$0xff]
    %v667 = vld [vmem:[#allocation5 + $0x450] sm:$0xff]
    %v668 = vld [vmem:[#allocation5 + $0x458] sm:$0xff]
    %v669 = vld [vmem:[#allocation5 + $0x460] sm:$0xff]
    %v670 = vld [vmem:[#allocation5 + $0x468] sm:$0xff]
    %v671 = vld [vmem:[#allocation5 + $0x470] sm:$0xff]
    %v672 = vld [vmem:[#allocation5 + $0x478] sm:$0xff]
    %v673 = vld [vmem:[#allocation5 + $0x480] sm:$0xff]
    %v674 = vld [vmem:[#allocation5 + $0x488] sm:$0xff]
    %v675 = vld [vmem:[#allocation5 + $0x490] sm:$0xff]
    %v676 = vld [vmem:[#allocation5 + $0x498] sm:$0xff]
    %v677 = vld [vmem:[#allocation5 + $0x4a0] sm:$0xff]
    %v678 = vld [vmem:[#allocation5 + $0x4a8] sm:$0xff]
    %v679 = vld [vmem:[#allocation5 + $0x4b0] sm:$0xff]
    %v680 = vld [vmem:[#allocation5 + $0x4b8] sm:$0xff]
    %v681 = vld [vmem:[#allocation5 + $0x4c0] sm:$0xff]
    %v682 = vld [vmem:[#allocation5 + $0x4c8] sm:$0xff]
    %v683 = vld [vmem:[#allocation5 + $0x4d0] sm:$0xff]
    %v684 = vld [vmem:[#allocation5 + $0x4d8] sm:$0xff]
    %v685 = vld [vmem:[#allocation5 + $0x4e0] sm:$0xff]
    %v686 = vld [vmem:[#allocation5 + $0x4e8] sm:$0xff]
    %v687 = vld [vmem:[#allocation5 + $0x4f0] sm:$0xff]
    %v688 = vld [vmem:[#allocation5 + $0x4f8] sm:$0xff]
    %v689 = vld [vmem:[#allocation5 + $0x500] sm:$0xff]
    %v690 = vld [vmem:[#allocation5 + $0x508] sm:$0xff]
    %v691 = vld [vmem:[#allocation5 + $0x510] sm:$0xff]
    %v692 = vld [vmem:[#allocation5 + $0x518] sm:$0xff]
    %v693 = vld [vmem:[#allocation5 + $0x520] sm:$0xff]
    %v694 = vld [vmem:[#allocation5 + $0x528] sm:$0xff]
    %v695 = vld [vmem:[#allocation5 + $0x530] sm:$0xff]
    %v696 = vld [vmem:[#allocation5 + $0x538] sm:$0xff]
    %v697 = vld [vmem:[#allocation5 + $0x540] sm:$0xff]
    %v698 = vld [vmem:[#allocation5 + $0x548] sm:$0xff]
    %v699 = vld [vmem:[#allocation5 + $0x550] sm:$0xff]
    %v700 = vld [vmem:[#allocation5 + $0x558] sm:$0xff]
    %v701 = vld [vmem:[#allocation5 + $0x560] sm:$0xff]
    %v702 = vld [vmem:[#allocation5 + $0x568] sm:$0xff]
    %v703 = vld [vmem:[#allocation5 + $0x570] sm:$0xff]
    %v704 = vld [vmem:[#allocation5 + $0x578] sm:$0xff]
    %v705 = vld [vmem:[#allocation5 + $0x580] sm:$0xff]
    %v706 = vld [vmem:[#allocation5 + $0x588] sm:$0xff]
    %v707 = vld [vmem:[#allocation5 + $0x590] sm:$0xff]
    %v708 = vld [vmem:[#allocation5 + $0x598] sm:$0xff]
    %v709 = vld [vmem:[#allocation5 + $0x5a0] sm:$0xff]
    %v710 = vld [vmem:[#allocation5 + $0x5a8] sm:$0xff]
    %v711 = vld [vmem:[#allocation5 + $0x5b0] sm:$0xff]
    %v712 = vld [vmem:[#allocation5 + $0x5b8] sm:$0xff]
    %v713 = vld [vmem:[#allocation5 + $0x5c0] sm:$0xff]
    %v714 = vld [vmem:[#allocation5 + $0x5c8] sm:$0xff]
    %v715 = vld [vmem:[#allocation5 + $0x5d0] sm:$0xff]
    %v716 = vld [vmem:[#allocation5 + $0x5d8] sm:$0xff]
    %v717 = vld [vmem:[#allocation5 + $0x5e0] sm:$0xff]
    %v718 = vld [vmem:[#allocation5 + $0x5e8] sm:$0xff]
    %v719 = vld [vmem:[#allocation5 + $0x5f0] sm:$0xff]
    %v720 = vld [vmem:[#allocation5 + $0x5f8] sm:$0xff]
    %v721 = vld [vmem:[#allocation5 + $0x600] sm:$0xff]
    %v722 = vld [vmem:[#allocation5 + $0x608] sm:$0xff]
    %v723 = vld [vmem:[#allocation5 + $0x610] sm:$0xff]
    %v724 = vld [vmem:[#allocation5 + $0x618] sm:$0xff]
    %v725 = vld [vmem:[#allocation5 + $0x620] sm:$0xff]
    %v726 = vld [vmem:[#allocation5 + $0x628] sm:$0xff]
    %v727 = vld [vmem:[#allocation5 + $0x630] sm:$0xff]
    %v728 = vld [vmem:[#allocation5 + $0x638] sm:$0xff]
    %v729 = vld [vmem:[#allocation5 + $0x640] sm:$0xff]
    %v730 = vld [vmem:[#allocation5 + $0x648] sm:$0xff]
    %v731 = vld [vmem:[#allocation5 + $0x650] sm:$0xff]
    %v732 = vld [vmem:[#allocation5 + $0x658] sm:$0xff]
    %v733 = vld [vmem:[#allocation5 + $0x660] sm:$0xff]
    %v734 = vld [vmem:[#allocation5 + $0x668] sm:$0xff]
    %v735 = vld [vmem:[#allocation5 + $0x670] sm:$0xff]
    %v736 = vld [vmem:[#allocation5 + $0x678] sm:$0xff]
    %v737 = vld [vmem:[#allocation5 + $0x680] sm:$0xff]
    %v738 = vld [vmem:[#allocation5 + $0x688] sm:$0xff]
    %v739 = vld [vmem:[#allocation5 + $0x690] sm:$0xff]
    %v740 = vld [vmem:[#allocation5 + $0x698] sm:$0xff]
    %v741 = vld [vmem:[#allocation5 + $0x6a0] sm:$0xff]
    %v742 = vld [vmem:[#allocation5 + $0x6a8] sm:$0xff]
    %v743 = vld [vmem:[#allocation5 + $0x6b0] sm:$0xff]
    %v744 = vld [vmem:[#allocation5 + $0x6b8] sm:$0xff]
    %v745 = vld [vmem:[#allocation5 + $0x6c0] sm:$0xff]
    %v746 = vld [vmem:[#allocation5 + $0x6c8] sm:$0xff]
    %v747 = vld [vmem:[#allocation5 + $0x6d0] sm:$0xff]
    %v748 = vld [vmem:[#allocation5 + $0x6d8] sm:$0xff]
    %v749 = vld [vmem:[#allocation5 + $0x6e0] sm:$0xff]
    %v750 = vld [vmem:[#allocation5 + $0x6e8] sm:$0xff]
    %v751 = vld [vmem:[#allocation5 + $0x6f0] sm:$0xff]
    %v752 = vld [vmem:[#allocation5 + $0x6f8] sm:$0xff]
    %v753 = vld [vmem:[#allocation5 + $0x700] sm:$0xff]
    %v754 = vld [vmem:[#allocation5 + $0x708] sm:$0xff]
    %v755 = vld [vmem:[#allocation5 + $0x710] sm:$0xff]
    %v756 = vld [vmem:[#allocation5 + $0x718] sm:$0xff]
    %v757 = vld [vmem:[#allocation5 + $0x720] sm:$0xff]
    %v758 = vld [vmem:[#allocation5 + $0x728] sm:$0xff]
    %v759 = vld [vmem:[#allocation5 + $0x730] sm:$0xff]
    %v760 = vld [vmem:[#allocation5 + $0x738] sm:$0xff]
    %v761 = vld [vmem:[#allocation5 + $0x740] sm:$0xff]
    %v762 = vld [vmem:[#allocation5 + $0x748] sm:$0xff]
    %v763 = vld [vmem:[#allocation5 + $0x750] sm:$0xff]
    %v764 = vld [vmem:[#allocation5 + $0x758] sm:$0xff]
    %v765 = vld [vmem:[#allocation5 + $0x760] sm:$0xff]
    %v766 = vld [vmem:[#allocation5 + $0x768] sm:$0xff]
    %v767 = vld [vmem:[#allocation5 + $0x770] sm:$0xff]
    %v768 = vld [vmem:[#allocation5 + $0x778] sm:$0xff]
    %v769 = vld [vmem:[#allocation5 + $0x780] sm:$0xff]
    %v770 = vld [vmem:[#allocation5 + $0x788] sm:$0xff]
    %v771 = vld [vmem:[#allocation5 + $0x790] sm:$0xff]
    %v772 = vld [vmem:[#allocation5 + $0x798] sm:$0xff]
    %v773 = vld [vmem:[#allocation5 + $0x7a0] sm:$0xff]
    %v774 = vld [vmem:[#allocation5 + $0x7a8] sm:$0xff]
    %v775 = vld [vmem:[#allocation5 + $0x7b0] sm:$0xff]
    %v776 = vld [vmem:[#allocation5 + $0x7b8] sm:$0xff]
    %v777 = vld [vmem:[#allocation5 + $0x7c0] sm:$0xff]
    %v778 = vld [vmem:[#allocation5 + $0x7c8] sm:$0xff]
    %v779 = vld [vmem:[#allocation5 + $0x7d0] sm:$0xff]
    %v780 = vld [vmem:[#allocation5 + $0x7d8] sm:$0xff]
    %v781 = vld [vmem:[#allocation5 + $0x7e0] sm:$0xff]
    %v782 = vld [vmem:[#allocation5 + $0x7e8] sm:$0xff]
    %v783 = vld [vmem:[#allocation5 + $0x7f0] sm:$0xff]
    %v784 = vld [vmem:[#allocation5 + $0x7f8] sm:$0xff]
    %v785 = vld [vmem:[#allocation7] sm:$0xf]
    %v787 = vlaneseq
    %v788 = vshrl.u32 %v787, 7
    %v789 = vsub.s32 0, %v788
    %v790 = vrot.slane %v785, %v789
    %v791 = vlaneseq
    %v792 = vshrl.u32 %v791, 7
    %v793 = vsub.s32 1, %v792
    %v794 = vrot.slane %v785, %v793
    %v795 = vlaneseq
    %v796 = vshrl.u32 %v795, 7
    %v797 = vsub.s32 2, %v796
    %v798 = vrot.slane %v785, %v797
    %v799 = vlaneseq
    %v800 = vshrl.u32 %v799, 7
    %v801 = vsub.s32 3, %v800
    %v802 = vrot.slane %v785, %v801
    %v1063 = vunpack.c.l.b16 %v529
    %v1064 = vunpack.c.h.b16 %v529
    %v1065 = vunpack.c.l.b16 %v530
    %v1066 = vunpack.c.h.b16 %v530
    %v1067 = vunpack.c.l.b16 %v531
    %v1068 = vunpack.c.h.b16 %v531
    %v1069 = vunpack.c.l.b16 %v532
    %v1070 = vunpack.c.h.b16 %v532
    %v1071 = vunpack.c.l.b16 %v533
    %v1072 = vunpack.c.h.b16 %v533
    %v1073 = vunpack.c.l.b16 %v534
    %v1074 = vunpack.c.h.b16 %v534
    %v1075 = vunpack.c.l.b16 %v535
    %v1076 = vunpack.c.h.b16 %v535
    %v1077 = vunpack.c.l.b16 %v536
    %v1078 = vunpack.c.h.b16 %v536
    %v1079 = vunpack.c.l.b16 %v537
    %v1080 = vunpack.c.h.b16 %v537
    %v1081 = vunpack.c.l.b16 %v538
    %v1082 = vunpack.c.h.b16 %v538
    %v1083 = vunpack.c.l.b16 %v539
    %v1084 = vunpack.c.h.b16 %v539
    %v1085 = vunpack.c.l.b16 %v540
    %v1086 = vunpack.c.h.b16 %v540
    %v1087 = vunpack.c.l.b16 %v541
    %v1088 = vunpack.c.h.b16 %v541
    %v1089 = vunpack.c.l.b16 %v542
    %v1090 = vunpack.c.h.b16 %v542
    %v1091 = vunpack.c.l.b16 %v543
    %v1092 = vunpack.c.h.b16 %v543
    %v1093 = vunpack.c.l.b16 %v544
    %v1094 = vunpack.c.h.b16 %v544
    %v1095 = vunpack.c.l.b16 %v545
    %v1096 = vunpack.c.h.b16 %v545
    %v1097 = vunpack.c.l.b16 %v546
    %v1098 = vunpack.c.h.b16 %v546
    %v1099 = vunpack.c.l.b16 %v547
    %v1100 = vunpack.c.h.b16 %v547
    %v1101 = vunpack.c.l.b16 %v548
    %v1102 = vunpack.c.h.b16 %v548
    %v1103 = vunpack.c.l.b16 %v549
    %v1104 = vunpack.c.h.b16 %v549
    %v1105 = vunpack.c.l.b16 %v550
    %v1106 = vunpack.c.h.b16 %v550
    %v1107 = vunpack.c.l.b16 %v551
    %v1108 = vunpack.c.h.b16 %v551
    %v1109 = vunpack.c.l.b16 %v552
    %v1110 = vunpack.c.h.b16 %v552
    %v1111 = vunpack.c.l.b16 %v553
    %v1112 = vunpack.c.h.b16 %v553
    %v1113 = vunpack.c.l.b16 %v554
    %v1114 = vunpack.c.h.b16 %v554
    %v1115 = vunpack.c.l.b16 %v555
    %v1116 = vunpack.c.h.b16 %v555
    %v1117 = vunpack.c.l.b16 %v556
    %v1118 = vunpack.c.h.b16 %v556
    %v1119 = vunpack.c.l.b16 %v557
    %v1120 = vunpack.c.h.b16 %v557
    %v1121 = vunpack.c.l.b16 %v558
    %v1122 = vunpack.c.h.b16 %v558
    %v1123 = vunpack.c.l.b16 %v559
    %v1124 = vunpack.c.h.b16 %v559
    %v1125 = vunpack.c.l.b16 %v560
    %v1126 = vunpack.c.h.b16 %v560
    %v1127 = vunpack.c.l.b16 %v561
    %v1128 = vunpack.c.h.b16 %v561
    %v1129 = vunpack.c.l.b16 %v562
    %v1130 = vunpack.c.h.b16 %v562
    %v1131 = vunpack.c.l.b16 %v563
    %v1132 = vunpack.c.h.b16 %v563
    %v1133 = vunpack.c.l.b16 %v564
    %v1134 = vunpack.c.h.b16 %v564
    %v1135 = vunpack.c.l.b16 %v565
    %v1136 = vunpack.c.h.b16 %v565
    %v1137 = vunpack.c.l.b16 %v566
    %v1138 = vunpack.c.h.b16 %v566
    %v1139 = vunpack.c.l.b16 %v567
    %v1140 = vunpack.c.h.b16 %v567
    %v1141 = vunpack.c.l.b16 %v568
    %v1142 = vunpack.c.h.b16 %v568
    %v1143 = vunpack.c.l.b16 %v569
    %v1144 = vunpack.c.h.b16 %v569
    %v1145 = vunpack.c.l.b16 %v570
    %v1146 = vunpack.c.h.b16 %v570
    %v1147 = vunpack.c.l.b16 %v571
    %v1148 = vunpack.c.h.b16 %v571
    %v1149 = vunpack.c.l.b16 %v572
    %v1150 = vunpack.c.h.b16 %v572
    %v1151 = vunpack.c.l.b16 %v573
    %v1152 = vunpack.c.h.b16 %v573
    %v1153 = vunpack.c.l.b16 %v574
    %v1154 = vunpack.c.h.b16 %v574
    %v1155 = vunpack.c.l.b16 %v575
    %v1156 = vunpack.c.h.b16 %v575
    %v1157 = vunpack.c.l.b16 %v576
    %v1158 = vunpack.c.h.b16 %v576
    %v1159 = vunpack.c.l.b16 %v577
    %v1160 = vunpack.c.h.b16 %v577
    %v1161 = vunpack.c.l.b16 %v578
    %v1162 = vunpack.c.h.b16 %v578
    %v1163 = vunpack.c.l.b16 %v579
    %v1164 = vunpack.c.h.b16 %v579
    %v1165 = vunpack.c.l.b16 %v580
    %v1166 = vunpack.c.h.b16 %v580
    %v1167 = vunpack.c.l.b16 %v581
    %v1168 = vunpack.c.h.b16 %v581
    %v1169 = vunpack.c.l.b16 %v582
    %v1170 = vunpack.c.h.b16 %v582
    %v1171 = vunpack.c.l.b16 %v583
    %v1172 = vunpack.c.h.b16 %v583
    %v1173 = vunpack.c.l.b16 %v584
    %v1174 = vunpack.c.h.b16 %v584
    %v1175 = vunpack.c.l.b16 %v585
    %v1176 = vunpack.c.h.b16 %v585
    %v1177 = vunpack.c.l.b16 %v586
    %v1178 = vunpack.c.h.b16 %v586
    %v1179 = vunpack.c.l.b16 %v587
    %v1180 = vunpack.c.h.b16 %v587
    %v1181 = vunpack.c.l.b16 %v588
    %v1182 = vunpack.c.h.b16 %v588
    %v1183 = vunpack.c.l.b16 %v589
    %v1184 = vunpack.c.h.b16 %v589
    %v1185 = vunpack.c.l.b16 %v590
    %v1186 = vunpack.c.h.b16 %v590
    %v1187 = vunpack.c.l.b16 %v591
    %v1188 = vunpack.c.h.b16 %v591
    %v1189 = vunpack.c.l.b16 %v592
    %v1190 = vunpack.c.h.b16 %v592
    %v1191 = vunpack.c.l.b16 %v593
    %v1192 = vunpack.c.h.b16 %v593
    %v1193 = vunpack.c.l.b16 %v594
    %v1194 = vunpack.c.h.b16 %v594
    %v1195 = vunpack.c.l.b16 %v595
    %v1196 = vunpack.c.h.b16 %v595
    %v1197 = vunpack.c.l.b16 %v596
    %v1198 = vunpack.c.h.b16 %v596
    %v1199 = vunpack.c.l.b16 %v597
    %v1200 = vunpack.c.h.b16 %v597
    %v1201 = vunpack.c.l.b16 %v598
    %v1202 = vunpack.c.h.b16 %v598
    %v1203 = vunpack.c.l.b16 %v599
    %v1204 = vunpack.c.h.b16 %v599
    %v1205 = vunpack.c.l.b16 %v600
    %v1206 = vunpack.c.h.b16 %v600
    %v1207 = vunpack.c.l.b16 %v601
    %v1208 = vunpack.c.h.b16 %v601
    %v1209 = vunpack.c.l.b16 %v602
    %v1210 = vunpack.c.h.b16 %v602
    %v1211 = vunpack.c.l.b16 %v603
    %v1212 = vunpack.c.h.b16 %v603
    %v1213 = vunpack.c.l.b16 %v604
    %v1214 = vunpack.c.h.b16 %v604
    %v1215 = vunpack.c.l.b16 %v605
    %v1216 = vunpack.c.h.b16 %v605
    %v1217 = vunpack.c.l.b16 %v606
    %v1218 = vunpack.c.h.b16 %v606
    %v1219 = vunpack.c.l.b16 %v607
    %v1220 = vunpack.c.h.b16 %v607
    %v1221 = vunpack.c.l.b16 %v608
    %v1222 = vunpack.c.h.b16 %v608
    %v1223 = vunpack.c.l.b16 %v609
    %v1224 = vunpack.c.h.b16 %v609
    %v1225 = vunpack.c.l.b16 %v610
    %v1226 = vunpack.c.h.b16 %v610
    %v1227 = vunpack.c.l.b16 %v611
    %v1228 = vunpack.c.h.b16 %v611
    %v1229 = vunpack.c.l.b16 %v612
    %v1230 = vunpack.c.h.b16 %v612
    %v1231 = vunpack.c.l.b16 %v613
    %v1232 = vunpack.c.h.b16 %v613
    %v1233 = vunpack.c.l.b16 %v614
    %v1234 = vunpack.c.h.b16 %v614
    %v1235 = vunpack.c.l.b16 %v615
    %v1236 = vunpack.c.h.b16 %v615
    %v1237 = vunpack.c.l.b16 %v616
    %v1238 = vunpack.c.h.b16 %v616
    %v1239 = vunpack.c.l.b16 %v617
    %v1240 = vunpack.c.h.b16 %v617
    %v1241 = vunpack.c.l.b16 %v618
    %v1242 = vunpack.c.h.b16 %v618
    %v1243 = vunpack.c.l.b16 %v619
    %v1244 = vunpack.c.h.b16 %v619
    %v1245 = vunpack.c.l.b16 %v620
    %v1246 = vunpack.c.h.b16 %v620
    %v1247 = vunpack.c.l.b16 %v621
    %v1248 = vunpack.c.h.b16 %v621
    %v1249 = vunpack.c.l.b16 %v622
    %v1250 = vunpack.c.h.b16 %v622
    %v1251 = vunpack.c.l.b16 %v623
    %v1252 = vunpack.c.h.b16 %v623
    %v1253 = vunpack.c.l.b16 %v624
    %v1254 = vunpack.c.h.b16 %v624
    %v1255 = vunpack.c.l.b16 %v625
    %v1256 = vunpack.c.h.b16 %v625
    %v1257 = vunpack.c.l.b16 %v626
    %v1258 = vunpack.c.h.b16 %v626
    %v1259 = vunpack.c.l.b16 %v627
    %v1260 = vunpack.c.h.b16 %v627
    %v1261 = vunpack.c.l.b16 %v628
    %v1262 = vunpack.c.h.b16 %v628
    %v1263 = vunpack.c.l.b16 %v629
    %v1264 = vunpack.c.h.b16 %v629
    %v1265 = vunpack.c.l.b16 %v630
    %v1266 = vunpack.c.h.b16 %v630
    %v1267 = vunpack.c.l.b16 %v631
    %v1268 = vunpack.c.h.b16 %v631
    %v1269 = vunpack.c.l.b16 %v632
    %v1270 = vunpack.c.h.b16 %v632
    %v1271 = vunpack.c.l.b16 %v633
    %v1272 = vunpack.c.h.b16 %v633
    %v1273 = vunpack.c.l.b16 %v634
    %v1274 = vunpack.c.h.b16 %v634
    %v1275 = vunpack.c.l.b16 %v635
    %v1276 = vunpack.c.h.b16 %v635
    %v1277 = vunpack.c.l.b16 %v636
    %v1278 = vunpack.c.h.b16 %v636
    %v1279 = vunpack.c.l.b16 %v637
    %v1280 = vunpack.c.h.b16 %v637
    %v1281 = vunpack.c.l.b16 %v638
    %v1282 = vunpack.c.h.b16 %v638
    %v1283 = vunpack.c.l.b16 %v639
    %v1284 = vunpack.c.h.b16 %v639
    %v1285 = vunpack.c.l.b16 %v640
    %v1286 = vunpack.c.h.b16 %v640
    %v1287 = vunpack.c.l.b16 %v641
    %v1288 = vunpack.c.h.b16 %v641
    %v1289 = vunpack.c.l.b16 %v642
    %v1290 = vunpack.c.h.b16 %v642
    %v1291 = vunpack.c.l.b16 %v643
    %v1292 = vunpack.c.h.b16 %v643
    %v1293 = vunpack.c.l.b16 %v644
    %v1294 = vunpack.c.h.b16 %v644
    %v1295 = vunpack.c.l.b16 %v645
    %v1296 = vunpack.c.h.b16 %v645
    %v1297 = vunpack.c.l.b16 %v646
    %v1298 = vunpack.c.h.b16 %v646
    %v1299 = vunpack.c.l.b16 %v647
    %v1300 = vunpack.c.h.b16 %v647
    %v1301 = vunpack.c.l.b16 %v648
    %v1302 = vunpack.c.h.b16 %v648
    %v1303 = vunpack.c.l.b16 %v649
    %v1304 = vunpack.c.h.b16 %v649
    %v1305 = vunpack.c.l.b16 %v650
    %v1306 = vunpack.c.h.b16 %v650
    %v1307 = vunpack.c.l.b16 %v651
    %v1308 = vunpack.c.h.b16 %v651
    %v1309 = vunpack.c.l.b16 %v652
    %v1310 = vunpack.c.h.b16 %v652
    %v1311 = vunpack.c.l.b16 %v653
    %v1312 = vunpack.c.h.b16 %v653
    %v1313 = vunpack.c.l.b16 %v654
    %v1314 = vunpack.c.h.b16 %v654
    %v1315 = vunpack.c.l.b16 %v655
    %v1316 = vunpack.c.h.b16 %v655
    %v1317 = vunpack.c.l.b16 %v656
    %v1318 = vunpack.c.h.b16 %v656
    %v1319 = vunpack.c.l.b16 %v657
    %v1320 = vunpack.c.h.b16 %v657
    %v1321 = vunpack.c.l.b16 %v658
    %v1322 = vunpack.c.h.b16 %v658
    %v1323 = vunpack.c.l.b16 %v659
    %v1324 = vunpack.c.h.b16 %v659
    %v1325 = vunpack.c.l.b16 %v660
    %v1326 = vunpack.c.h.b16 %v660
    %v1327 = vunpack.c.l.b16 %v661
    %v1328 = vunpack.c.h.b16 %v661
    %v1329 = vunpack.c.l.b16 %v662
    %v1330 = vunpack.c.h.b16 %v662
    %v1331 = vunpack.c.l.b16 %v663
    %v1332 = vunpack.c.h.b16 %v663
    %v1333 = vunpack.c.l.b16 %v664
    %v1334 = vunpack.c.h.b16 %v664
    %v1335 = vunpack.c.l.b16 %v665
    %v1336 = vunpack.c.h.b16 %v665
    %v1337 = vunpack.c.l.b16 %v666
    %v1338 = vunpack.c.h.b16 %v666
    %v1339 = vunpack.c.l.b16 %v667
    %v1340 = vunpack.c.h.b16 %v667
    %v1341 = vunpack.c.l.b16 %v668
    %v1342 = vunpack.c.h.b16 %v668
    %v1343 = vunpack.c.l.b16 %v669
    %v1344 = vunpack.c.h.b16 %v669
    %v1345 = vunpack.c.l.b16 %v670
    %v1346 = vunpack.c.h.b16 %v670
    %v1347 = vunpack.c.l.b16 %v671
    %v1348 = vunpack.c.h.b16 %v671
    %v1349 = vunpack.c.l.b16 %v672
    %v1350 = vunpack.c.h.b16 %v672
    %v1351 = vunpack.c.l.b16 %v673
    %v1352 = vunpack.c.h.b16 %v673
    %v1353 = vunpack.c.l.b16 %v674
    %v1354 = vunpack.c.h.b16 %v674
    %v1355 = vunpack.c.l.b16 %v675
    %v1356 = vunpack.c.h.b16 %v675
    %v1357 = vunpack.c.l.b16 %v676
    %v1358 = vunpack.c.h.b16 %v676
    %v1359 = vunpack.c.l.b16 %v677
    %v1360 = vunpack.c.h.b16 %v677
    %v1361 = vunpack.c.l.b16 %v678
    %v1362 = vunpack.c.h.b16 %v678
    %v1363 = vunpack.c.l.b16 %v679
    %v1364 = vunpack.c.h.b16 %v679
    %v1365 = vunpack.c.l.b16 %v680
    %v1366 = vunpack.c.h.b16 %v680
    %v1367 = vunpack.c.l.b16 %v681
    %v1368 = vunpack.c.h.b16 %v681
    %v1369 = vunpack.c.l.b16 %v682
    %v1370 = vunpack.c.h.b16 %v682
    %v1371 = vunpack.c.l.b16 %v683
    %v1372 = vunpack.c.h.b16 %v683
    %v1373 = vunpack.c.l.b16 %v684
    %v1374 = vunpack.c.h.b16 %v684
    %v1375 = vunpack.c.l.b16 %v685
    %v1376 = vunpack.c.h.b16 %v685
    %v1377 = vunpack.c.l.b16 %v686
    %v1378 = vunpack.c.h.b16 %v686
    %v1379 = vunpack.c.l.b16 %v687
    %v1380 = vunpack.c.h.b16 %v687
    %v1381 = vunpack.c.l.b16 %v688
    %v1382 = vunpack.c.h.b16 %v688
    %v1383 = vunpack.c.l.b16 %v689
    %v1384 = vunpack.c.h.b16 %v689
    %v1385 = vunpack.c.l.b16 %v690
    %v1386 = vunpack.c.h.b16 %v690
    %v1387 = vunpack.c.l.b16 %v691
    %v1388 = vunpack.c.h.b16 %v691
    %v1389 = vunpack.c.l.b16 %v692
    %v1390 = vunpack.c.h.b16 %v692
    %v1391 = vunpack.c.l.b16 %v693
    %v1392 = vunpack.c.h.b16 %v693
    %v1393 = vunpack.c.l.b16 %v694
    %v1394 = vunpack.c.h.b16 %v694
    %v1395 = vunpack.c.l.b16 %v695
    %v1396 = vunpack.c.h.b16 %v695
    %v1397 = vunpack.c.l.b16 %v696
    %v1398 = vunpack.c.h.b16 %v696
    %v1399 = vunpack.c.l.b16 %v697
    %v1400 = vunpack.c.h.b16 %v697
    %v1401 = vunpack.c.l.b16 %v698
    %v1402 = vunpack.c.h.b16 %v698
    %v1403 = vunpack.c.l.b16 %v699
    %v1404 = vunpack.c.h.b16 %v699
    %v1405 = vunpack.c.l.b16 %v700
    %v1406 = vunpack.c.h.b16 %v700
    %v1407 = vunpack.c.l.b16 %v701
    %v1408 = vunpack.c.h.b16 %v701
    %v1409 = vunpack.c.l.b16 %v702
    %v1410 = vunpack.c.h.b16 %v702
    %v1411 = vunpack.c.l.b16 %v703
    %v1412 = vunpack.c.h.b16 %v703
    %v1413 = vunpack.c.l.b16 %v704
    %v1414 = vunpack.c.h.b16 %v704
    %v1415 = vunpack.c.l.b16 %v705
    %v1416 = vunpack.c.h.b16 %v705
    %v1417 = vunpack.c.l.b16 %v706
    %v1418 = vunpack.c.h.b16 %v706
    %v1419 = vunpack.c.l.b16 %v707
    %v1420 = vunpack.c.h.b16 %v707
    %v1421 = vunpack.c.l.b16 %v708
    %v1422 = vunpack.c.h.b16 %v708
    %v1423 = vunpack.c.l.b16 %v709
    %v1424 = vunpack.c.h.b16 %v709
    %v1425 = vunpack.c.l.b16 %v710
    %v1426 = vunpack.c.h.b16 %v710
    %v1427 = vunpack.c.l.b16 %v711
    %v1428 = vunpack.c.h.b16 %v711
    %v1429 = vunpack.c.l.b16 %v712
    %v1430 = vunpack.c.h.b16 %v712
    %v1431 = vunpack.c.l.b16 %v713
    %v1432 = vunpack.c.h.b16 %v713
    %v1433 = vunpack.c.l.b16 %v714
    %v1434 = vunpack.c.h.b16 %v714
    %v1435 = vunpack.c.l.b16 %v715
    %v1436 = vunpack.c.h.b16 %v715
    %v1437 = vunpack.c.l.b16 %v716
    %v1438 = vunpack.c.h.b16 %v716
    %v1439 = vunpack.c.l.b16 %v717
    %v1440 = vunpack.c.h.b16 %v717
    %v1441 = vunpack.c.l.b16 %v718
    %v1442 = vunpack.c.h.b16 %v718
    %v1443 = vunpack.c.l.b16 %v719
    %v1444 = vunpack.c.h.b16 %v719
    %v1445 = vunpack.c.l.b16 %v720
    %v1446 = vunpack.c.h.b16 %v720
    %v1447 = vunpack.c.l.b16 %v721
    %v1448 = vunpack.c.h.b16 %v721
    %v1449 = vunpack.c.l.b16 %v722
    %v1450 = vunpack.c.h.b16 %v722
    %v1451 = vunpack.c.l.b16 %v723
    %v1452 = vunpack.c.h.b16 %v723
    %v1453 = vunpack.c.l.b16 %v724
    %v1454 = vunpack.c.h.b16 %v724
    %v1455 = vunpack.c.l.b16 %v725
    %v1456 = vunpack.c.h.b16 %v725
    %v1457 = vunpack.c.l.b16 %v726
    %v1458 = vunpack.c.h.b16 %v726
    %v1459 = vunpack.c.l.b16 %v727
    %v1460 = vunpack.c.h.b16 %v727
    %v1461 = vunpack.c.l.b16 %v728
    %v1462 = vunpack.c.h.b16 %v728
    %v1463 = vunpack.c.l.b16 %v729
    %v1464 = vunpack.c.h.b16 %v729
    %v1465 = vunpack.c.l.b16 %v730
    %v1466 = vunpack.c.h.b16 %v730
    %v1467 = vunpack.c.l.b16 %v731
    %v1468 = vunpack.c.h.b16 %v731
    %v1469 = vunpack.c.l.b16 %v732
    %v1470 = vunpack.c.h.b16 %v732
    %v1471 = vunpack.c.l.b16 %v733
    %v1472 = vunpack.c.h.b16 %v733
    %v1473 = vunpack.c.l.b16 %v734
    %v1474 = vunpack.c.h.b16 %v734
    %v1475 = vunpack.c.l.b16 %v735
    %v1476 = vunpack.c.h.b16 %v735
    %v1477 = vunpack.c.l.b16 %v736
    %v1478 = vunpack.c.h.b16 %v736
    %v1479 = vunpack.c.l.b16 %v737
    %v1480 = vunpack.c.h.b16 %v737
    %v1481 = vunpack.c.l.b16 %v738
    %v1482 = vunpack.c.h.b16 %v738
    %v1483 = vunpack.c.l.b16 %v739
    %v1484 = vunpack.c.h.b16 %v739
    %v1485 = vunpack.c.l.b16 %v740
    %v1486 = vunpack.c.h.b16 %v740
    %v1487 = vunpack.c.l.b16 %v741
    %v1488 = vunpack.c.h.b16 %v741
    %v1489 = vunpack.c.l.b16 %v742
    %v1490 = vunpack.c.h.b16 %v742
    %v1491 = vunpack.c.l.b16 %v743
    %v1492 = vunpack.c.h.b16 %v743
    %v1493 = vunpack.c.l.b16 %v744
    %v1494 = vunpack.c.h.b16 %v744
    %v1495 = vunpack.c.l.b16 %v745
    %v1496 = vunpack.c.h.b16 %v745
    %v1497 = vunpack.c.l.b16 %v746
    %v1498 = vunpack.c.h.b16 %v746
    %v1499 = vunpack.c.l.b16 %v747
    %v1500 = vunpack.c.h.b16 %v747
    %v1501 = vunpack.c.l.b16 %v748
    %v1502 = vunpack.c.h.b16 %v748
    %v1503 = vunpack.c.l.b16 %v749
    %v1504 = vunpack.c.h.b16 %v749
    %v1505 = vunpack.c.l.b16 %v750
    %v1506 = vunpack.c.h.b16 %v750
    %v1507 = vunpack.c.l.b16 %v751
    %v1508 = vunpack.c.h.b16 %v751
    %v1509 = vunpack.c.l.b16 %v752
    %v1510 = vunpack.c.h.b16 %v752
    %v1511 = vunpack.c.l.b16 %v753
    %v1512 = vunpack.c.h.b16 %v753
    %v1513 = vunpack.c.l.b16 %v754
    %v1514 = vunpack.c.h.b16 %v754
    %v1515 = vunpack.c.l.b16 %v755
    %v1516 = vunpack.c.h.b16 %v755
    %v1517 = vunpack.c.l.b16 %v756
    %v1518 = vunpack.c.h.b16 %v756
    %v1519 = vunpack.c.l.b16 %v757
    %v1520 = vunpack.c.h.b16 %v757
    %v1521 = vunpack.c.l.b16 %v758
    %v1522 = vunpack.c.h.b16 %v758
    %v1523 = vunpack.c.l.b16 %v759
    %v1524 = vunpack.c.h.b16 %v759
    %v1525 = vunpack.c.l.b16 %v760
    %v1526 = vunpack.c.h.b16 %v760
    %v1527 = vunpack.c.l.b16 %v761
    %v1528 = vunpack.c.h.b16 %v761
    %v1529 = vunpack.c.l.b16 %v762
    %v1530 = vunpack.c.h.b16 %v762
    %v1531 = vunpack.c.l.b16 %v763
    %v1532 = vunpack.c.h.b16 %v763
    %v1533 = vunpack.c.l.b16 %v764
    %v1534 = vunpack.c.h.b16 %v764
    %v1535 = vunpack.c.l.b16 %v765
    %v1536 = vunpack.c.h.b16 %v765
    %v1537 = vunpack.c.l.b16 %v766
    %v1538 = vunpack.c.h.b16 %v766
    %v1539 = vunpack.c.l.b16 %v767
    %v1540 = vunpack.c.h.b16 %v767
    %v1541 = vunpack.c.l.b16 %v768
    %v1542 = vunpack.c.h.b16 %v768
    %v1543 = vunpack.c.l.b16 %v769
    %v1544 = vunpack.c.h.b16 %v769
    %v1545 = vunpack.c.l.b16 %v770
    %v1546 = vunpack.c.h.b16 %v770
    %v1547 = vunpack.c.l.b16 %v771
    %v1548 = vunpack.c.h.b16 %v771
    %v1549 = vunpack.c.l.b16 %v772
    %v1550 = vunpack.c.h.b16 %v772
    %v1551 = vunpack.c.l.b16 %v773
    %v1552 = vunpack.c.h.b16 %v773
    %v1553 = vunpack.c.l.b16 %v774
    %v1554 = vunpack.c.h.b16 %v774
    %v1555 = vunpack.c.l.b16 %v775
    %v1556 = vunpack.c.h.b16 %v775
    %v1557 = vunpack.c.l.b16 %v776
    %v1558 = vunpack.c.h.b16 %v776
    %v1559 = vunpack.c.l.b16 %v777
    %v1560 = vunpack.c.h.b16 %v777
    %v1561 = vunpack.c.l.b16 %v778
    %v1562 = vunpack.c.h.b16 %v778
    %v1563 = vunpack.c.l.b16 %v779
    %v1564 = vunpack.c.h.b16 %v779
    %v1565 = vunpack.c.l.b16 %v780
    %v1566 = vunpack.c.h.b16 %v780
    %v1567 = vunpack.c.l.b16 %v781
    %v1568 = vunpack.c.h.b16 %v781
    %v1569 = vunpack.c.l.b16 %v782
    %v1570 = vunpack.c.h.b16 %v782
    %v1571 = vunpack.c.l.b16 %v783
    %v1572 = vunpack.c.h.b16 %v783
    %v1573 = vunpack.c.l.b16 %v784
    %v1574 = vunpack.c.h.b16 %v784
    %v1575 = vpack.c.b16 %v1067, %v1063
    %v1576 = vpack.c.b16 %v1068, %v1064
    %v1577 = vpack.c.b16 %v1069, %v1065
    %v1578 = vpack.c.b16 %v1070, %v1066
    %v1579 = vpack.c.b16 %v1075, %v1071
    %v1580 = vpack.c.b16 %v1076, %v1072
    %v1581 = vpack.c.b16 %v1077, %v1073
    %v1582 = vpack.c.b16 %v1078, %v1074
    %v1583 = vpack.c.b16 %v1083, %v1079
    %v1584 = vpack.c.b16 %v1084, %v1080
    %v1585 = vpack.c.b16 %v1085, %v1081
    %v1586 = vpack.c.b16 %v1086, %v1082
    %v1587 = vpack.c.b16 %v1091, %v1087
    %v1588 = vpack.c.b16 %v1092, %v1088
    %v1589 = vpack.c.b16 %v1093, %v1089
    %v1590 = vpack.c.b16 %v1094, %v1090
    %v1591 = vpack.c.b16 %v1099, %v1095
    %v1592 = vpack.c.b16 %v1100, %v1096
    %v1593 = vpack.c.b16 %v1101, %v1097
    %v1594 = vpack.c.b16 %v1102, %v1098
    %v1595 = vpack.c.b16 %v1107, %v1103
    %v1596 = vpack.c.b16 %v1108, %v1104
    %v1597 = vpack.c.b16 %v1109, %v1105
    %v1598 = vpack.c.b16 %v1110, %v1106
    %v1599 = vpack.c.b16 %v1115, %v1111
    %v1600 = vpack.c.b16 %v1116, %v1112
    %v1601 = vpack.c.b16 %v1117, %v1113
    %v1602 = vpack.c.b16 %v1118, %v1114
    %v1603 = vpack.c.b16 %v1123, %v1119
    %v1604 = vpack.c.b16 %v1124, %v1120
    %v1605 = vpack.c.b16 %v1125, %v1121
    %v1606 = vpack.c.b16 %v1126, %v1122
    %v1607 = vpack.c.b16 %v1131, %v1127
    %v1608 = vpack.c.b16 %v1132, %v1128
    %v1609 = vpack.c.b16 %v1133, %v1129
    %v1610 = vpack.c.b16 %v1134, %v1130
    %v1611 = vpack.c.b16 %v1139, %v1135
    %v1612 = vpack.c.b16 %v1140, %v1136
    %v1613 = vpack.c.b16 %v1141, %v1137
    %v1614 = vpack.c.b16 %v1142, %v1138
    %v1615 = vpack.c.b16 %v1147, %v1143
    %v1616 = vpack.c.b16 %v1148, %v1144
    %v1617 = vpack.c.b16 %v1149, %v1145
    %v1618 = vpack.c.b16 %v1150, %v1146
    %v1619 = vpack.c.b16 %v1155, %v1151
    %v1620 = vpack.c.b16 %v1156, %v1152
    %v1621 = vpack.c.b16 %v1157, %v1153
    %v1622 = vpack.c.b16 %v1158, %v1154
    %v1623 = vpack.c.b16 %v1163, %v1159
    %v1624 = vpack.c.b16 %v1164, %v1160
    %v1625 = vpack.c.b16 %v1165, %v1161
    %v1626 = vpack.c.b16 %v1166, %v1162
    %v1627 = vpack.c.b16 %v1171, %v1167
    %v1628 = vpack.c.b16 %v1172, %v1168
    %v1629 = vpack.c.b16 %v1173, %v1169
    %v1630 = vpack.c.b16 %v1174, %v1170
    %v1631 = vpack.c.b16 %v1179, %v1175
    %v1632 = vpack.c.b16 %v1180, %v1176
    %v1633 = vpack.c.b16 %v1181, %v1177
    %v1634 = vpack.c.b16 %v1182, %v1178
    %v1635 = vpack.c.b16 %v1187, %v1183
    %v1636 = vpack.c.b16 %v1188, %v1184
    %v1637 = vpack.c.b16 %v1189, %v1185
    %v1638 = vpack.c.b16 %v1190, %v1186
    %v1639 = vpack.c.b16 %v1195, %v1191
    %v1640 = vpack.c.b16 %v1196, %v1192
    %v1641 = vpack.c.b16 %v1197, %v1193
    %v1642 = vpack.c.b16 %v1198, %v1194
    %v1643 = vpack.c.b16 %v1203, %v1199
    %v1644 = vpack.c.b16 %v1204, %v1200
    %v1645 = vpack.c.b16 %v1205, %v1201
    %v1646 = vpack.c.b16 %v1206, %v1202
    %v1647 = vpack.c.b16 %v1211, %v1207
    %v1648 = vpack.c.b16 %v1212, %v1208
    %v1649 = vpack.c.b16 %v1213, %v1209
    %v1650 = vpack.c.b16 %v1214, %v1210
    %v1651 = vpack.c.b16 %v1219, %v1215
    %v1652 = vpack.c.b16 %v1220, %v1216
    %v1653 = vpack.c.b16 %v1221, %v1217
    %v1654 = vpack.c.b16 %v1222, %v1218
    %v1655 = vpack.c.b16 %v1227, %v1223
    %v1656 = vpack.c.b16 %v1228, %v1224
    %v1657 = vpack.c.b16 %v1229, %v1225
    %v1658 = vpack.c.b16 %v1230, %v1226
    %v1659 = vpack.c.b16 %v1235, %v1231
    %v1660 = vpack.c.b16 %v1236, %v1232
    %v1661 = vpack.c.b16 %v1237, %v1233
    %v1662 = vpack.c.b16 %v1238, %v1234
    %v1663 = vpack.c.b16 %v1243, %v1239
    %v1664 = vpack.c.b16 %v1244, %v1240
    %v1665 = vpack.c.b16 %v1245, %v1241
    %v1666 = vpack.c.b16 %v1246, %v1242
    %v1667 = vpack.c.b16 %v1251, %v1247
    %v1668 = vpack.c.b16 %v1252, %v1248
    %v1669 = vpack.c.b16 %v1253, %v1249
    %v1670 = vpack.c.b16 %v1254, %v1250
    %v1671 = vpack.c.b16 %v1259, %v1255
    %v1672 = vpack.c.b16 %v1260, %v1256
    %v1673 = vpack.c.b16 %v1261, %v1257
    %v1674 = vpack.c.b16 %v1262, %v1258
    %v1675 = vpack.c.b16 %v1267, %v1263
    %v1676 = vpack.c.b16 %v1268, %v1264
    %v1677 = vpack.c.b16 %v1269, %v1265
    %v1678 = vpack.c.b16 %v1270, %v1266
    %v1679 = vpack.c.b16 %v1275, %v1271
    %v1680 = vpack.c.b16 %v1276, %v1272
    %v1681 = vpack.c.b16 %v1277, %v1273
    %v1682 = vpack.c.b16 %v1278, %v1274
    %v1683 = vpack.c.b16 %v1283, %v1279
    %v1684 = vpack.c.b16 %v1284, %v1280
    %v1685 = vpack.c.b16 %v1285, %v1281
    %v1686 = vpack.c.b16 %v1286, %v1282
    %v1687 = vpack.c.b16 %v1291, %v1287
    %v1688 = vpack.c.b16 %v1292, %v1288
    %v1689 = vpack.c.b16 %v1293, %v1289
    %v1690 = vpack.c.b16 %v1294, %v1290
    %v1691 = vpack.c.b16 %v1299, %v1295
    %v1692 = vpack.c.b16 %v1300, %v1296
    %v1693 = vpack.c.b16 %v1301, %v1297
    %v1694 = vpack.c.b16 %v1302, %v1298
    %v1695 = vpack.c.b16 %v1307, %v1303
    %v1696 = vpack.c.b16 %v1308, %v1304
    %v1697 = vpack.c.b16 %v1309, %v1305
    %v1698 = vpack.c.b16 %v1310, %v1306
    %v1699 = vpack.c.b16 %v1315, %v1311
    %v1700 = vpack.c.b16 %v1316, %v1312
    %v1701 = vpack.c.b16 %v1317, %v1313
    %v1702 = vpack.c.b16 %v1318, %v1314
    %v1703 = vpack.c.b16 %v1323, %v1319
    %v1704 = vpack.c.b16 %v1324, %v1320
    %v1705 = vpack.c.b16 %v1325, %v1321
    %v1706 = vpack.c.b16 %v1326, %v1322
    %v1707 = vpack.c.b16 %v1331, %v1327
    %v1708 = vpack.c.b16 %v1332, %v1328
    %v1709 = vpack.c.b16 %v1333, %v1329
    %v1710 = vpack.c.b16 %v1334, %v1330
    %v1711 = vpack.c.b16 %v1339, %v1335
    %v1712 = vpack.c.b16 %v1340, %v1336
    %v1713 = vpack.c.b16 %v1341, %v1337
    %v1714 = vpack.c.b16 %v1342, %v1338
    %v1715 = vpack.c.b16 %v1347, %v1343
    %v1716 = vpack.c.b16 %v1348, %v1344
    %v1717 = vpack.c.b16 %v1349, %v1345
    %v1718 = vpack.c.b16 %v1350, %v1346
    %v1719 = vpack.c.b16 %v1355, %v1351
    %v1720 = vpack.c.b16 %v1356, %v1352
    %v1721 = vpack.c.b16 %v1357, %v1353
    %v1722 = vpack.c.b16 %v1358, %v1354
    %v1723 = vpack.c.b16 %v1363, %v1359
    %v1724 = vpack.c.b16 %v1364, %v1360
    %v1725 = vpack.c.b16 %v1365, %v1361
    %v1726 = vpack.c.b16 %v1366, %v1362
    %v1727 = vpack.c.b16 %v1371, %v1367
    %v1728 = vpack.c.b16 %v1372, %v1368
    %v1729 = vpack.c.b16 %v1373, %v1369
    %v1730 = vpack.c.b16 %v1374, %v1370
    %v1731 = vpack.c.b16 %v1379, %v1375
    %v1732 = vpack.c.b16 %v1380, %v1376
    %v1733 = vpack.c.b16 %v1381, %v1377
    %v1734 = vpack.c.b16 %v1382, %v1378
    %v1735 = vpack.c.b16 %v1387, %v1383
    %v1736 = vpack.c.b16 %v1388, %v1384
    %v1737 = vpack.c.b16 %v1389, %v1385
    %v1738 = vpack.c.b16 %v1390, %v1386
    %v1739 = vpack.c.b16 %v1395, %v1391
    %v1740 = vpack.c.b16 %v1396, %v1392
    %v1741 = vpack.c.b16 %v1397, %v1393
    %v1742 = vpack.c.b16 %v1398, %v1394
    %v1743 = vpack.c.b16 %v1403, %v1399
    %v1744 = vpack.c.b16 %v1404, %v1400
    %v1745 = vpack.c.b16 %v1405, %v1401
    %v1746 = vpack.c.b16 %v1406, %v1402
    %v1747 = vpack.c.b16 %v1411, %v1407
    %v1748 = vpack.c.b16 %v1412, %v1408
    %v1749 = vpack.c.b16 %v1413, %v1409
    %v1750 = vpack.c.b16 %v1414, %v1410
    %v1751 = vpack.c.b16 %v1419, %v1415
    %v1752 = vpack.c.b16 %v1420, %v1416
    %v1753 = vpack.c.b16 %v1421, %v1417
    %v1754 = vpack.c.b16 %v1422, %v1418
    %v1755 = vpack.c.b16 %v1427, %v1423
    %v1756 = vpack.c.b16 %v1428, %v1424
    %v1757 = vpack.c.b16 %v1429, %v1425
    %v1758 = vpack.c.b16 %v1430, %v1426
    %v1759 = vpack.c.b16 %v1435, %v1431
    %v1760 = vpack.c.b16 %v1436, %v1432
    %v1761 = vpack.c.b16 %v1437, %v1433
    %v1762 = vpack.c.b16 %v1438, %v1434
    %v1763 = vpack.c.b16 %v1443, %v1439
    %v1764 = vpack.c.b16 %v1444, %v1440
    %v1765 = vpack.c.b16 %v1445, %v1441
    %v1766 = vpack.c.b16 %v1446, %v1442
    %v1767 = vpack.c.b16 %v1451, %v1447
    %v1768 = vpack.c.b16 %v1452, %v1448
    %v1769 = vpack.c.b16 %v1453, %v1449
    %v1770 = vpack.c.b16 %v1454, %v1450
    %v1771 = vpack.c.b16 %v1459, %v1455
    %v1772 = vpack.c.b16 %v1460, %v1456
    %v1773 = vpack.c.b16 %v1461, %v1457
    %v1774 = vpack.c.b16 %v1462, %v1458
    %v1775 = vpack.c.b16 %v1467, %v1463
    %v1776 = vpack.c.b16 %v1468, %v1464
    %v1777 = vpack.c.b16 %v1469, %v1465
    %v1778 = vpack.c.b16 %v1470, %v1466
    %v1779 = vpack.c.b16 %v1475, %v1471
    %v1780 = vpack.c.b16 %v1476, %v1472
    %v1781 = vpack.c.b16 %v1477, %v1473
    %v1782 = vpack.c.b16 %v1478, %v1474
    %v1783 = vpack.c.b16 %v1483, %v1479
    %v1784 = vpack.c.b16 %v1484, %v1480
    %v1785 = vpack.c.b16 %v1485, %v1481
    %v1786 = vpack.c.b16 %v1486, %v1482
    %v1787 = vpack.c.b16 %v1491, %v1487
    %v1788 = vpack.c.b16 %v1492, %v1488
    %v1789 = vpack.c.b16 %v1493, %v1489
    %v1790 = vpack.c.b16 %v1494, %v1490
    %v1791 = vpack.c.b16 %v1499, %v1495
    %v1792 = vpack.c.b16 %v1500, %v1496
    %v1793 = vpack.c.b16 %v1501, %v1497
    %v1794 = vpack.c.b16 %v1502, %v1498
    %v1795 = vpack.c.b16 %v1507, %v1503
    %v1796 = vpack.c.b16 %v1508, %v1504
    %v1797 = vpack.c.b16 %v1509, %v1505
    %v1798 = vpack.c.b16 %v1510, %v1506
    %v1799 = vpack.c.b16 %v1515, %v1511
    %v1800 = vpack.c.b16 %v1516, %v1512
    %v1801 = vpack.c.b16 %v1517, %v1513
    %v1802 = vpack.c.b16 %v1518, %v1514
    %v1803 = vpack.c.b16 %v1523, %v1519
    %v1804 = vpack.c.b16 %v1524, %v1520
    %v1805 = vpack.c.b16 %v1525, %v1521
    %v1806 = vpack.c.b16 %v1526, %v1522
    %v1807 = vpack.c.b16 %v1531, %v1527
    %v1808 = vpack.c.b16 %v1532, %v1528
    %v1809 = vpack.c.b16 %v1533, %v1529
    %v1810 = vpack.c.b16 %v1534, %v1530
    %v1811 = vpack.c.b16 %v1539, %v1535
    %v1812 = vpack.c.b16 %v1540, %v1536
    %v1813 = vpack.c.b16 %v1541, %v1537
    %v1814 = vpack.c.b16 %v1542, %v1538
    %v1815 = vpack.c.b16 %v1547, %v1543
    %v1816 = vpack.c.b16 %v1548, %v1544
    %v1817 = vpack.c.b16 %v1549, %v1545
    %v1818 = vpack.c.b16 %v1550, %v1546
    %v1819 = vpack.c.b16 %v1555, %v1551
    %v1820 = vpack.c.b16 %v1556, %v1552
    %v1821 = vpack.c.b16 %v1557, %v1553
    %v1822 = vpack.c.b16 %v1558, %v1554
    %v1823 = vpack.c.b16 %v1563, %v1559
    %v1824 = vpack.c.b16 %v1564, %v1560
    %v1825 = vpack.c.b16 %v1565, %v1561
    %v1826 = vpack.c.b16 %v1566, %v1562
    %v1827 = vpack.c.b16 %v1571, %v1567
    %v1828 = vpack.c.b16 %v1572, %v1568
    %v1829 = vpack.c.b16 %v1573, %v1569
    %v1830 = vpack.c.b16 %v1574, %v1570
    %2087 = vmatprep.subr.bf16.mxu0 %v1576
    %2088 = vmatpush1.bf16.msra.mxu0 %v1575
    %2089 = vmatprep.subr.bf16.mxu0 %v1580
    %2090 = vmatpush1.bf16.msra.mxu0 %v1579
    %2091 = vmatprep.subr.bf16.mxu0 %v1584
    %2092 = vmatpush1.bf16.msra.mxu0 %v1583
    %2093 = vmatprep.subr.bf16.mxu0 %v1588
    %2094 = vmatpush1.bf16.msra.mxu0 %v1587
    %2095 = vmatprep.subr.bf16.mxu0 %v1592
    %2096 = vmatpush1.bf16.msra.mxu0 %v1591
    %2097 = vmatprep.subr.bf16.mxu0 %v1596
    %2098 = vmatpush1.bf16.msra.mxu0 %v1595
    %2099 = vmatprep.subr.bf16.mxu0 %v1600
    %2100 = vmatpush1.bf16.msra.mxu0 %v1599
    %2101 = vmatprep.subr.bf16.mxu0 %v1604
    %2102 = vmatpush1.bf16.msra.mxu0 %v1603
    %2103 = vmatprep.subr.bf16.mxu0 %v1608
    %2104 = vmatpush1.bf16.msra.mxu0 %v1607
    %2105 = vmatprep.subr.bf16.mxu0 %v1612
    %2106 = vmatpush1.bf16.msra.mxu0 %v1611
    %2107 = vmatprep.subr.bf16.mxu0 %v1616
    %2108 = vmatpush1.bf16.msra.mxu0 %v1615
    %2109 = vmatprep.subr.bf16.mxu0 %v1620
    %2110 = vmatpush1.bf16.msra.mxu0 %v1619
    %2111 = vmatprep.subr.bf16.mxu0 %v1624
    %2112 = vmatpush1.bf16.msra.mxu0 %v1623
    %2113 = vmatprep.subr.bf16.mxu0 %v1628
    %2114 = vmatpush1.bf16.msra.mxu0 %v1627
    %2115 = vmatprep.subr.bf16.mxu0 %v1632
    %2116 = vmatpush1.bf16.msra.mxu0 %v1631
    %2117 = vmatprep.subr.bf16.mxu0 %v1636
    %2118 = vmatpush1.bf16.msra.mxu0 %v1635
    %2119 = vmatprep.mubr.bf16.mxu0 %v378
    %2120 = vmatmul.mubr.bf16.gmra.mrb[0].mxu0 %v377
    %v2121 = vpop.f32.mrb[0].mxu0
    %v2122 = vadd.f32 %v790, %v2121
    %v2123 = vpop.f32.mrb[0].mxu0
    %v2124 = vadd.f32 %v794, %v2123
    %v2125 = vpop.f32.mrb[0].mxu0
    %v2126 = vadd.f32 %v790, %v2125
    %v2127 = vpop.f32.mrb[0].mxu0
    %v2128 = vadd.f32 %v794, %v2127
    %2129 = vmatprep.mubr.bf16.mxu0 %v386
    %2130 = vmatmul.mubr.bf16.gmra.mrb[0].mxu0 %v385
    %v2131 = vpop.f32.mrb[0].mxu0
    %v2132 = vadd.f32 %v790, %v2131
    %v2133 = vpop.f32.mrb[0].mxu0
    %v2134 = vadd.f32 %v794, %v2133
    %v2135 = vpop.f32.mrb[0].mxu0
    %v2136 = vadd.f32 %v790, %v2135
    %v2137 = vpop.f32.mrb[0].mxu0
    %v2138 = vadd.f32 %v794, %v2137
    %2139 = vmatprep.mubr.bf16.mxu0 %v394
    %2140 = vmatmul.mubr.bf16.gmra.mrb[0].mxu0 %v393
    %v2141 = vpop.f32.mrb[0].mxu0
    %v2142 = vadd.f32 %v790, %v2141
    %v2143 = vpop.f32.mrb[0].mxu0
    %v2144 = vadd.f32 %v794, %v2143
    %v2145 = vpop.f32.mrb[0].mxu0
    %v2146 = vadd.f32 %v790, %v2145
    %v2147 = vpop.f32.mrb[0].mxu0
    %v2148 = vadd.f32 %v794, %v2147
    %2149 = vmatprep.mubr.bf16.mxu0 %v402
    %2150 = vmatmul.mubr.bf16.gmra.mrb[0].mxu0 %v401
    %v2151 = vpop.f32.mrb[0].mxu0
    %v2152 = vadd.f32 %v790, %v2151
    %v2153 = vpop.f32.mrb[0].mxu0
    %v2154 = vadd.f32 %v794, %v2153
    %v2155 = vpop.f32.mrb[0].mxu0
    %v2156 = vadd.f32 %v790, %v2155
    %v2157 = vpop.f32.mrb[0].mxu0
    %v2158 = vadd.f32 %v794, %v2157
    %2159 = vmatprep.mubr.bf16.mxu0 %v410
    %2160 = vmatmul.mubr.bf16.gmra.mrb[0].mxu0 %v409
    %v2161 = vpop.f32.mrb[0].mxu0
    %v2162 = vadd.f32 %v790, %v2161
    %v2163 = vpop.f32.mrb[0].mxu0
    %v2164 = vadd.f32 %v794, %v2163
    %v2165 = vpop.f32.mrb[0].mxu0
    %v2166 = vadd.f32 %v790, %v2165
    %v2167 = vpop.f32.mrb[0].mxu0
    %v2168 = vadd.f32 %v794, %v2167
    %2169 = vmatprep.mubr.bf16.mxu0 %v418
    %2170 = vmatmul.mubr.bf16.gmra.mrb[0].mxu0 %v417
    %v2171 = vpop.f32.mrb[0].mxu0
    %v2172 = vadd.f32 %v790, %v2171
    %v2173 = vpop.f32.mrb[0].mxu0
    %v2174 = vadd.f32 %v794, %v2173
    %v2175 = vpop.f32.mrb[0].mxu0
    %v2176 = vadd.f32 %v790, %v2175
    %v2177 = vpop.f32.mrb[0].mxu0
    %v2178 = vadd.f32 %v794, %v2177
    %2179 = vmatprep.mubr.bf16.mxu0 %v426
    %2180 = vmatmul.mubr.bf16.gmra.mrb[0].mxu0 %v425
    %v2181 = vpop.f32.mrb[0].mxu0
    %v2182 = vadd.f32 %v790, %v2181
    %v2183 = vpop.f32.mrb[0].mxu0
    %v2184 = vadd.f32 %v794, %v2183
    %v2185 = vpop.f32.mrb[0].mxu0
    %v2186 = vadd.f32 %v790, %v2185
    %v2187 = vpop.f32.mrb[0].mxu0
    %v2188 = vadd.f32 %v794, %v2187
    %2189 = vmatprep.mubr.bf16.mxu0 %v434
    %2190 = vmatmul.mubr.bf16.gmra.mrb[0].mxu0 %v433
    %v2191 = vpop.f32.mrb[0].mxu0
    %v2192 = vadd.f32 %v790, %v2191
    %v2193 = vpop.f32.mrb[0].mxu0
    %v2194 = vadd.f32 %v794, %v2193
    %v2195 = vpop.f32.mrb[0].mxu0
    %v2196 = vadd.f32 %v790, %v2195
    %v2197 = vpop.f32.mrb[0].mxu0
    %v2198 = vadd.f32 %v794, %v2197
    %2199 = vmatprep.mubr.bf16.mxu0 %v442
    %2200 = vmatmul.mubr.bf16.gmra.mrb[0].mxu0 %v441
    %v2201 = vpop.f32.mrb[0].mxu0
    %v2202 = vadd.f32 %v790, %v2201
    %v2203 = vpop.f32.mrb[0].mxu0
    %v2204 = vadd.f32 %v794, %v2203
    %v2205 = vpop.f32.mrb[0].mxu0
    %v2206 = vadd.f32 %v790, %v2205
    %v2207 = vpop.f32.mrb[0].mxu0
    %v2208 = vadd.f32 %v794, %v2207
    %2209 = vmatprep.mubr.bf16.mxu0 %v450
    %2210 = vmatmul.mubr.bf16.gmra.mrb[0].mxu0 %v449
    %v2211 = vpop.f32.mrb[0].mxu0
    %v2212 = vadd.f32 %v790, %v2211
    %v2213 = vpop.f32.mrb[0].mxu0
    %v2214 = vadd.f32 %v794, %v2213
    %v2215 = vpop.f32.mrb[0].mxu0
    %v2216 = vadd.f32 %v790, %v2215
    %v2217 = vpop.f32.mrb[0].mxu0
    %v2218 = vadd.f32 %v794, %v2217
    %2219 = vmatprep.mubr.bf16.mxu0 %v458
    %2220 = vmatmul.mubr.bf16.gmra.mrb[0].mxu0 %v457
    %v2221 = vpop.f32.mrb[0].mxu0
    %v2222 = vadd.f32 %v790, %v2221
    %v2223 = vpop.f32.mrb[0].mxu0
    %v2224 = vadd.f32 %v794, %v2223
    %v2225 = vpop.f32.mrb[0].mxu0
    %v2226 = vadd.f32 %v790, %v2225
    %v2227 = vpop.f32.mrb[0].mxu0
    %v2228 = vadd.f32 %v794, %v2227
    %2229 = vmatprep.mubr.bf16.mxu0 %v466
    %2230 = vmatmul.mubr.bf16.gmra.mrb[0].mxu0 %v465
    %v2231 = vpop.f32.mrb[0].mxu0
    %v2232 = vadd.f32 %v790, %v2231
    %v2233 = vpop.f32.mrb[0].mxu0
    %v2234 = vadd.f32 %v794, %v2233
    %v2235 = vpop.f32.mrb[0].mxu0
    %v2236 = vadd.f32 %v790, %v2235
    %v2237 = vpop.f32.mrb[0].mxu0
    %v2238 = vadd.f32 %v794, %v2237
    %2239 = vmatprep.mubr.bf16.mxu0 %v474
    %2240 = vmatmul.mubr.bf16.gmra.mrb[0].mxu0 %v473
    %v2241 = vpop.f32.mrb[0].mxu0
    %v2242 = vadd.f32 %v790, %v2241
    %v2243 = vpop.f32.mrb[0].mxu0
    %v2244 = vadd.f32 %v794, %v2243
    %v2245 = vpop.f32.mrb[0].mxu0
    %v2246 = vadd.f32 %v790, %v2245
    %v2247 = vpop.f32.mrb[0].mxu0
    %v2248 = vadd.f32 %v794, %v2247
    %2249 = vmatprep.mubr.bf16.mxu0 %v482
    %2250 = vmatmul.mubr.bf16.gmra.mrb[0].mxu0 %v481
    %v2251 = vpop.f32.mrb[0].mxu0
    %v2252 = vadd.f32 %v790, %v2251
    %v2253 = vpop.f32.mrb[0].mxu0
    %v2254 = vadd.f32 %v794, %v2253
    %v2255 = vpop.f32.mrb[0].mxu0
    %v2256 = vadd.f32 %v790, %v2255
    %v2257 = vpop.f32.mrb[0].mxu0
    %v2258 = vadd.f32 %v794, %v2257
    %2259 = vmatprep.mubr.bf16.mxu0 %v490
    %2260 = vmatmul.mubr.bf16.gmra.mrb[0].mxu0 %v489
    %v2261 = vpop.f32.mrb[0].mxu0
    %v2262 = vadd.f32 %v790, %v2261
    %v2263 = vpop.f32.mrb[0].mxu0
    %v2264 = vadd.f32 %v794, %v2263
    %v2265 = vpop.f32.mrb[0].mxu0
    %v2266 = vadd.f32 %v790, %v2265
    %v2267 = vpop.f32.mrb[0].mxu0
    %v2268 = vadd.f32 %v794, %v2267
    %2269 = vmatprep.mubr.bf16.mxu0 %v498
    %2270 = vmatmul.mubr.bf16.gmra.mrb[0].mxu0 %v497
    %v2271 = vpop.f32.mrb[0].mxu0
    %v2272 = vadd.f32 %v790, %v2271
    %v2273 = vpop.f32.mrb[0].mxu0
    %v2274 = vadd.f32 %v794, %v2273
    %v2275 = vpop.f32.mrb[0].mxu0
    %v2276 = vadd.f32 %v790, %v2275
    %v2277 = vpop.f32.mrb[0].mxu0
    %v2278 = vadd.f32 %v794, %v2277
    %2279 = vmatprep.mubr.bf16.mxu0 %v506
    %2280 = vmatmul.mubr.bf16.gmra.mrb[0].mxu0 %v505
    %v2281 = vpop.f32.mrb[0].mxu0
    %v2282 = vadd.f32 %v790, %v2281
    %v2283 = vpop.f32.mrb[0].mxu0
    %v2284 = vadd.f32 %v794, %v2283
    %v2285 = vpop.f32.mrb[0].mxu0
    %v2286 = vadd.f32 %v790, %v2285
    %v2287 = vpop.f32.mrb[0].mxu0
    %v2288 = vadd.f32 %v794, %v2287
    %2289 = vmatprep.mubr.bf16.mxu0 %v514
    %2290 = vmatmul.mubr.bf16.gmra.mrb[0].mxu0 %v513
    %v2291 = vpop.f32.mrb[0].mxu0
    %v2292 = vadd.f32 %v790, %v2291
    %v2293 = vpop.f32.mrb[0].mxu0
    %v2294 = vadd.f32 %v794, %v2293
    %v2295 = vpop.f32.mrb[0].mxu0
    %v2296 = vadd.f32 %v790, %v2295
    %v2297 = vpop.f32.mrb[0].mxu0
    %v2298 = vadd.f32 %v794, %v2297
    %2299 = vmatprep.mubr.bf16.mxu0 %v522
    %2300 = vmatmul.mubr.bf16.gmra.mrb[0].mxu0 %v521
    %v2301 = vpop.f32.mrb[0].mxu0
    %v2302 = vadd.f32 %v790, %v2301
    %v2303 = vpop.f32.mrb[0].mxu0
    %v2304 = vadd.f32 %v794, %v2303
    %v2305 = vpop.f32.mrb[0].mxu0
    %v2306 = vadd.f32 %v790, %v2305
    %v2307 = vpop.f32.mrb[0].mxu0
    %v2308 = vadd.f32 %v794, %v2307
    %2309 = vdwg.mxu0
    %2310 = vmatprep.subr.bf16.mxu0 %v1640
    %2311 = vmatpush1.bf16.msra.mxu0 %v1639
    %2312 = vmatprep.subr.bf16.mxu0 %v1644
    %2313 = vmatpush1.bf16.msra.mxu0 %v1643
    %2314 = vmatprep.subr.bf16.mxu0 %v1648
    %2315 = vmatpush1.bf16.msra.mxu0 %v1647
    %2316 = vmatprep.subr.bf16.mxu0 %v1652
    %2317 = vmatpush1.bf16.msra.mxu0 %v1651
    %2318 = vmatprep.subr.bf16.mxu0 %v1656
    %2319 = vmatpush1.bf16.msra.mxu0 %v1655
    %2320 = vmatprep.subr.bf16.mxu0 %v1660
    %2321 = vmatpush1.bf16.msra.mxu0 %v1659
    %2322 = vmatprep.subr.bf16.mxu0 %v1664
    %2323 = vmatpush1.bf16.msra.mxu0 %v1663
    %2324 = vmatprep.subr.bf16.mxu0 %v1668
    %2325 = vmatpush1.bf16.msra.mxu0 %v1667
    %2326 = vmatprep.subr.bf16.mxu0 %v1672
    %2327 = vmatpush1.bf16.msra.mxu0 %v1671
    %2328 = vmatprep.subr.bf16.mxu0 %v1676
    %2329 = vmatpush1.bf16.msra.mxu0 %v1675
    %2330 = vmatprep.subr.bf16.mxu0 %v1680
    %2331 = vmatpush1.bf16.msra.mxu0 %v1679
    %2332 = vmatprep.subr.bf16.mxu0 %v1684
    %2333 = vmatpush1.bf16.msra.mxu0 %v1683
    %2334 = vmatprep.subr.bf16.mxu0 %v1688
    %2335 = vmatpush1.bf16.msra.mxu0 %v1687
    %2336 = vmatprep.subr.bf16.mxu0 %v1692
    %2337 = vmatpush1.bf16.msra.mxu0 %v1691
    %2338 = vmatprep.subr.bf16.mxu0 %v1696
    %2339 = vmatpush1.bf16.msra.mxu0 %v1695
    %2340 = vmatprep.subr.bf16.mxu0 %v1700
    %2341 = vmatpush1.bf16.msra.mxu0 %v1699
    %2342 = vmatprep.mubr.bf16.mxu0 %v380
    %2343 = vmatmul.mubr.bf16.gmra.mrb[0].mxu0 %v379
    %v2344 = vpop.f32.mrb[0].mxu0
    %v2345 = vadd.f32 %v2122, %v2344
    %v2346 = vpop.f32.mrb[0].mxu0
    %v2347 = vadd.f32 %v2124, %v2346
    %v2348 = vpop.f32.mrb[0].mxu0
    %v2349 = vadd.f32 %v2126, %v2348
    %v2350 = vpop.f32.mrb[0].mxu0
    %v2351 = vadd.f32 %v2128, %v2350
    %2352 = vmatprep.mubr.bf16.mxu0 %v388
    %2353 = vmatmul.mubr.bf16.gmra.mrb[0].mxu0 %v387
    %v2354 = vpop.f32.mrb[0].mxu0
    %v2355 = vadd.f32 %v2132, %v2354
    %v2356 = vpop.f32.mrb[0].mxu0
    %v2357 = vadd.f32 %v2134, %v2356
    %v2358 = vpop.f32.mrb[0].mxu0
    %v2359 = vadd.f32 %v2136, %v2358
    %v2360 = vpop.f32.mrb[0].mxu0
    %v2361 = vadd.f32 %v2138, %v2360
    %2362 = vmatprep.mubr.bf16.mxu0 %v396
    %2363 = vmatmul.mubr.bf16.gmra.mrb[0].mxu0 %v395
    %v2364 = vpop.f32.mrb[0].mxu0
    %v2365 = vadd.f32 %v2142, %v2364
    %v2366 = vpop.f32.mrb[0].mxu0
    %v2367 = vadd.f32 %v2144, %v2366
    %v2368 = vpop.f32.mrb[0].mxu0
    %v2369 = vadd.f32 %v2146, %v2368
    %v2370 = vpop.f32.mrb[0].mxu0
    %v2371 = vadd.f32 %v2148, %v2370
    %2372 = vmatprep.mubr.bf16.mxu0 %v404
    %2373 = vmatmul.mubr.bf16.gmra.mrb[0].mxu0 %v403
    %v2374 = vpop.f32.mrb[0].mxu0
    %v2375 = vadd.f32 %v2152, %v2374
    %v2376 = vpop.f32.mrb[0].mxu0
    %v2377 = vadd.f32 %v2154, %v2376
    %v2378 = vpop.f32.mrb[0].mxu0
    %v2379 = vadd.f32 %v2156, %v2378
    %v2380 = vpop.f32.mrb[0].mxu0
    %v2381 = vadd.f32 %v2158, %v2380
    %2382 = vmatprep.mubr.bf16.mxu0 %v412
    %2383 = vmatmul.mubr.bf16.gmra.mrb[0].mxu0 %v411
    %v2384 = vpop.f32.mrb[0].mxu0
    %v2385 = vadd.f32 %v2162, %v2384
    %v2386 = vpop.f32.mrb[0].mxu0
    %v2387 = vadd.f32 %v2164, %v2386
    %v2388 = vpop.f32.mrb[0].mxu0
    %v2389 = vadd.f32 %v2166, %v2388
    %v2390 = vpop.f32.mrb[0].mxu0
    %v2391 = vadd.f32 %v2168, %v2390
    %2392 = vmatprep.mubr.bf16.mxu0 %v420
    %2393 = vmatmul.mubr.bf16.gmra.mrb[0].mxu0 %v419
    %v2394 = vpop.f32.mrb[0].mxu0
    %v2395 = vadd.f32 %v2172, %v2394
    %v2396 = vpop.f32.mrb[0].mxu0
    %v2397 = vadd.f32 %v2174, %v2396
    %v2398 = vpop.f32.mrb[0].mxu0
    %v2399 = vadd.f32 %v2176, %v2398
    %v2400 = vpop.f32.mrb[0].mxu0
    %v2401 = vadd.f32 %v2178, %v2400
    %2402 = vmatprep.mubr.bf16.mxu0 %v428
    %2403 = vmatmul.mubr.bf16.gmra.mrb[0].mxu0 %v427
    %v2404 = vpop.f32.mrb[0].mxu0
    %v2405 = vadd.f32 %v2182, %v2404
    %v2406 = vpop.f32.mrb[0].mxu0
    %v2407 = vadd.f32 %v2184, %v2406
    %v2408 = vpop.f32.mrb[0].mxu0
    %v2409 = vadd.f32 %v2186, %v2408
    %v2410 = vpop.f32.mrb[0].mxu0
    %v2411 = vadd.f32 %v2188, %v2410
    %2412 = vmatprep.mubr.bf16.mxu0 %v436
    %2413 = vmatmul.mubr.bf16.gmra.mrb[0].mxu0 %v435
    %v2414 = vpop.f32.mrb[0].mxu0
    %v2415 = vadd.f32 %v2192, %v2414
    %v2416 = vpop.f32.mrb[0].mxu0
    %v2417 = vadd.f32 %v2194, %v2416
    %v2418 = vpop.f32.mrb[0].mxu0
    %v2419 = vadd.f32 %v2196, %v2418
    %v2420 = vpop.f32.mrb[0].mxu0
    %v2421 = vadd.f32 %v2198, %v2420
    %2422 = vmatprep.mubr.bf16.mxu0 %v444
    %2423 = vmatmul.mubr.bf16.gmra.mrb[0].mxu0 %v443
    %v2424 = vpop.f32.mrb[0].mxu0
    %v2425 = vadd.f32 %v2202, %v2424
    %v2426 = vpop.f32.mrb[0].mxu0
    %v2427 = vadd.f32 %v2204, %v2426
    %v2428 = vpop.f32.mrb[0].mxu0
    %v2429 = vadd.f32 %v2206, %v2428
    %v2430 = vpop.f32.mrb[0].mxu0
    %v2431 = vadd.f32 %v2208, %v2430
    %2432 = vmatprep.mubr.bf16.mxu0 %v452
    %2433 = vmatmul.mubr.bf16.gmra.mrb[0].mxu0 %v451
    %v2434 = vpop.f32.mrb[0].mxu0
    %v2435 = vadd.f32 %v2212, %v2434
    %v2436 = vpop.f32.mrb[0].mxu0
    %v2437 = vadd.f32 %v2214, %v2436
    %v2438 = vpop.f32.mrb[0].mxu0
    %v2439 = vadd.f32 %v2216, %v2438
    %v2440 = vpop.f32.mrb[0].mxu0
    %v2441 = vadd.f32 %v2218, %v2440
    %2442 = vmatprep.mubr.bf16.mxu0 %v460
    %2443 = vmatmul.mubr.bf16.gmra.mrb[0].mxu0 %v459
    %v2444 = vpop.f32.mrb[0].mxu0
    %v2445 = vadd.f32 %v2222, %v2444
    %v2446 = vpop.f32.mrb[0].mxu0
    %v2447 = vadd.f32 %v2224, %v2446
    %v2448 = vpop.f32.mrb[0].mxu0
    %v2449 = vadd.f32 %v2226, %v2448
    %v2450 = vpop.f32.mrb[0].mxu0
    %v2451 = vadd.f32 %v2228, %v2450
    %2452 = vmatprep.mubr.bf16.mxu0 %v468
    %2453 = vmatmul.mubr.bf16.gmra.mrb[0].mxu0 %v467
    %v2454 = vpop.f32.mrb[0].mxu0
    %v2455 = vadd.f32 %v2232, %v2454
    %v2456 = vpop.f32.mrb[0].mxu0
    %v2457 = vadd.f32 %v2234, %v2456
    %v2458 = vpop.f32.mrb[0].mxu0
    %v2459 = vadd.f32 %v2236, %v2458
    %v2460 = vpop.f32.mrb[0].mxu0
    %v2461 = vadd.f32 %v2238, %v2460
    %2462 = vmatprep.mubr.bf16.mxu0 %v476
    %2463 = vmatmul.mubr.bf16.gmra.mrb[0].mxu0 %v475
    %v2464 = vpop.f32.mrb[0].mxu0
    %v2465 = vadd.f32 %v2242, %v2464
    %v2466 = vpop.f32.mrb[0].mxu0
    %v2467 = vadd.f32 %v2244, %v2466
    %v2468 = vpop.f32.mrb[0].mxu0
    %v2469 = vadd.f32 %v2246, %v2468
    %v2470 = vpop.f32.mrb[0].mxu0
    %v2471 = vadd.f32 %v2248, %v2470
    %2472 = vmatprep.mubr.bf16.mxu0 %v484
    %2473 = vmatmul.mubr.bf16.gmra.mrb[0].mxu0 %v483
    %v2474 = vpop.f32.mrb[0].mxu0
    %v2475 = vadd.f32 %v2252, %v2474
    %v2476 = vpop.f32.mrb[0].mxu0
    %v2477 = vadd.f32 %v2254, %v2476
    %v2478 = vpop.f32.mrb[0].mxu0
    %v2479 = vadd.f32 %v2256, %v2478
    %v2480 = vpop.f32.mrb[0].mxu0
    %v2481 = vadd.f32 %v2258, %v2480
    %2482 = vmatprep.mubr.bf16.mxu0 %v492
    %2483 = vmatmul.mubr.bf16.gmra.mrb[0].mxu0 %v491
    %v2484 = vpop.f32.mrb[0].mxu0
    %v2485 = vadd.f32 %v2262, %v2484
    %v2486 = vpop.f32.mrb[0].mxu0
    %v2487 = vadd.f32 %v2264, %v2486
    %v2488 = vpop.f32.mrb[0].mxu0
    %v2489 = vadd.f32 %v2266, %v2488
    %v2490 = vpop.f32.mrb[0].mxu0
    %v2491 = vadd.f32 %v2268, %v2490
    %2492 = vmatprep.mubr.bf16.mxu0 %v500
    %2493 = vmatmul.mubr.bf16.gmra.mrb[0].mxu0 %v499
    %v2494 = vpop.f32.mrb[0].mxu0
    %v2495 = vadd.f32 %v2272, %v2494
    %v2496 = vpop.f32.mrb[0].mxu0
    %v2497 = vadd.f32 %v2274, %v2496
    %v2498 = vpop.f32.mrb[0].mxu0
    %v2499 = vadd.f32 %v2276, %v2498
    %v2500 = vpop.f32.mrb[0].mxu0
    %v2501 = vadd.f32 %v2278, %v2500
    %2502 = vmatprep.mubr.bf16.mxu0 %v508
    %2503 = vmatmul.mubr.bf16.gmra.mrb[0].mxu0 %v507
    %v2504 = vpop.f32.mrb[0].mxu0
    %v2505 = vadd.f32 %v2282, %v2504
    %v2506 = vpop.f32.mrb[0].mxu0
    %v2507 = vadd.f32 %v2284, %v2506
    %v2508 = vpop.f32.mrb[0].mxu0
    %v2509 = vadd.f32 %v2286, %v2508
    %v2510 = vpop.f32.mrb[0].mxu0
    %v2511 = vadd.f32 %v2288, %v2510
    %2512 = vmatprep.mubr.bf16.mxu0 %v516
    %2513 = vmatmul.mubr.bf16.gmra.mrb[0].mxu0 %v515
    %v2514 = vpop.f32.mrb[0].mxu0
    %v2515 = vadd.f32 %v2292, %v2514
    %v2516 = vpop.f32.mrb[0].mxu0
    %v2517 = vadd.f32 %v2294, %v2516
    %v2518 = vpop.f32.mrb[0].mxu0
    %v2519 = vadd.f32 %v2296, %v2518
    %v2520 = vpop.f32.mrb[0].mxu0
    %v2521 = vadd.f32 %v2298, %v2520
    %2522 = vmatprep.mubr.bf16.mxu0 %v524
    %2523 = vmatmul.mubr.bf16.gmra.mrb[0].mxu0 %v523
    %v2524 = vpop.f32.mrb[0].mxu0
    %v2525 = vadd.f32 %v2302, %v2524
    %v2526 = vpop.f32.mrb[0].mxu0
    %v2527 = vadd.f32 %v2304, %v2526
    %v2528 = vpop.f32.mrb[0].mxu0
    %v2529 = vadd.f32 %v2306, %v2528
    %v2530 = vpop.f32.mrb[0].mxu0
    %v2531 = vadd.f32 %v2308, %v2530
    %2532 = vdwg.mxu0
    %2533 = vmatprep.subr.bf16.mxu0 %v1704
    %2534 = vmatpush1.bf16.msra.mxu0 %v1703
    %2535 = vmatprep.subr.bf16.mxu0 %v1708
    %2536 = vmatpush1.bf16.msra.mxu0 %v1707
    %2537 = vmatprep.subr.bf16.mxu0 %v1712
    %2538 = vmatpush1.bf16.msra.mxu0 %v1711
    %2539 = vmatprep.subr.bf16.mxu0 %v1716
    %2540 = vmatpush1.bf16.msra.mxu0 %v1715
    %2541 = vmatprep.subr.bf16.mxu0 %v1720
    %2542 = vmatpush1.bf16.msra.mxu0 %v1719
    %2543 = vmatprep.subr.bf16.mxu0 %v1724
    %2544 = vmatpush1.bf16.msra.mxu0 %v1723
    %2545 = vmatprep.subr.bf16.mxu0 %v1728
    %2546 = vmatpush1.bf16.msra.mxu0 %v1727
    %2547 = vmatprep.subr.bf16.mxu0 %v1732
    %2548 = vmatpush1.bf16.msra.mxu0 %v1731
    %2549 = vmatprep.subr.bf16.mxu0 %v1736
    %2550 = vmatpush1.bf16.msra.mxu0 %v1735
    %2551 = vmatprep.subr.bf16.mxu0 %v1740
    %2552 = vmatpush1.bf16.msra.mxu0 %v1739
    %2553 = vmatprep.subr.bf16.mxu0 %v1744
    %2554 = vmatpush1.bf16.msra.mxu0 %v1743
    %2555 = vmatprep.subr.bf16.mxu0 %v1748
    %2556 = vmatpush1.bf16.msra.mxu0 %v1747
    %2557 = vmatprep.subr.bf16.mxu0 %v1752
    %2558 = vmatpush1.bf16.msra.mxu0 %v1751
    %2559 = vmatprep.subr.bf16.mxu0 %v1756
    %2560 = vmatpush1.bf16.msra.mxu0 %v1755
    %2561 = vmatprep.subr.bf16.mxu0 %v1760
    %2562 = vmatpush1.bf16.msra.mxu0 %v1759
    %2563 = vmatprep.subr.bf16.mxu0 %v1764
    %2564 = vmatpush1.bf16.msra.mxu0 %v1763
    %2565 = vmatprep.mubr.bf16.mxu0 %v382
    %2566 = vmatmul.mubr.bf16.gmra.mrb[0].mxu0 %v381
    %v2567 = vpop.f32.mrb[0].mxu0
    %v2568 = vadd.f32 %v2345, %v2567
    %v2569 = vpop.f32.mrb[0].mxu0
    %v2570 = vadd.f32 %v2347, %v2569
    %v2571 = vpop.f32.mrb[0].mxu0
    %v2572 = vadd.f32 %v2349, %v2571
    %v2573 = vpop.f32.mrb[0].mxu0
    %v2574 = vadd.f32 %v2351, %v2573
    %2575 = vmatprep.mubr.bf16.mxu0 %v390
    %2576 = vmatmul.mubr.bf16.gmra.mrb[0].mxu0 %v389
    %v2577 = vpop.f32.mrb[0].mxu0
    %v2578 = vadd.f32 %v2355, %v2577
    %v2579 = vpop.f32.mrb[0].mxu0
    %v2580 = vadd.f32 %v2357, %v2579
    %v2581 = vpop.f32.mrb[0].mxu0
    %v2582 = vadd.f32 %v2359, %v2581
    %v2583 = vpop.f32.mrb[0].mxu0
    %v2584 = vadd.f32 %v2361, %v2583
    %2585 = vmatprep.mubr.bf16.mxu0 %v398
    %2586 = vmatmul.mubr.bf16.gmra.mrb[0].mxu0 %v397
    %v2587 = vpop.f32.mrb[0].mxu0
    %v2588 = vadd.f32 %v2365, %v2587
    %v2589 = vpop.f32.mrb[0].mxu0
    %v2590 = vadd.f32 %v2367, %v2589
    %v2591 = vpop.f32.mrb[0].mxu0
    %v2592 = vadd.f32 %v2369, %v2591
    %v2593 = vpop.f32.mrb[0].mxu0
    %v2594 = vadd.f32 %v2371, %v2593
    %2595 = vmatprep.mubr.bf16.mxu0 %v406
    %2596 = vmatmul.mubr.bf16.gmra.mrb[0].mxu0 %v405
    %v2597 = vpop.f32.mrb[0].mxu0
    %v2598 = vadd.f32 %v2375, %v2597
    %v2599 = vpop.f32.mrb[0].mxu0
    %v2600 = vadd.f32 %v2377, %v2599
    %v2601 = vpop.f32.mrb[0].mxu0
    %v2602 = vadd.f32 %v2379, %v2601
    %v2603 = vpop.f32.mrb[0].mxu0
    %v2604 = vadd.f32 %v2381, %v2603
    %2605 = vmatprep.mubr.bf16.mxu0 %v414
    %2606 = vmatmul.mubr.bf16.gmra.mrb[0].mxu0 %v413
    %v2607 = vpop.f32.mrb[0].mxu0
    %v2608 = vadd.f32 %v2385, %v2607
    %v2609 = vpop.f32.mrb[0].mxu0
    %v2610 = vadd.f32 %v2387, %v2609
    %v2611 = vpop.f32.mrb[0].mxu0
    %v2612 = vadd.f32 %v2389, %v2611
    %v2613 = vpop.f32.mrb[0].mxu0
    %v2614 = vadd.f32 %v2391, %v2613
    %2615 = vmatprep.mubr.bf16.mxu0 %v422
    %2616 = vmatmul.mubr.bf16.gmra.mrb[0].mxu0 %v421
    %v2617 = vpop.f32.mrb[0].mxu0
    %v2618 = vadd.f32 %v2395, %v2617
    %v2619 = vpop.f32.mrb[0].mxu0
    %v2620 = vadd.f32 %v2397, %v2619
    %v2621 = vpop.f32.mrb[0].mxu0
    %v2622 = vadd.f32 %v2399, %v2621
    %v2623 = vpop.f32.mrb[0].mxu0
    %v2624 = vadd.f32 %v2401, %v2623
    %2625 = vmatprep.mubr.bf16.mxu0 %v430
    %2626 = vmatmul.mubr.bf16.gmra.mrb[0].mxu0 %v429
    %v2627 = vpop.f32.mrb[0].mxu0
    %v2628 = vadd.f32 %v2405, %v2627
    %v2629 = vpop.f32.mrb[0].mxu0
    %v2630 = vadd.f32 %v2407, %v2629
    %v2631 = vpop.f32.mrb[0].mxu0
    %v2632 = vadd.f32 %v2409, %v2631
    %v2633 = vpop.f32.mrb[0].mxu0
    %v2634 = vadd.f32 %v2411, %v2633
    %2635 = vmatprep.mubr.bf16.mxu0 %v438
    %2636 = vmatmul.mubr.bf16.gmra.mrb[0].mxu0 %v437
    %v2637 = vpop.f32.mrb[0].mxu0
    %v2638 = vadd.f32 %v2415, %v2637
    %v2639 = vpop.f32.mrb[0].mxu0
    %v2640 = vadd.f32 %v2417, %v2639
    %v2641 = vpop.f32.mrb[0].mxu0
    %v2642 = vadd.f32 %v2419, %v2641
    %v2643 = vpop.f32.mrb[0].mxu0
    %v2644 = vadd.f32 %v2421, %v2643
    %2645 = vmatprep.mubr.bf16.mxu0 %v446
    %2646 = vmatmul.mubr.bf16.gmra.mrb[0].mxu0 %v445
    %v2647 = vpop.f32.mrb[0].mxu0
    %v2648 = vadd.f32 %v2425, %v2647
    %v2649 = vpop.f32.mrb[0].mxu0
    %v2650 = vadd.f32 %v2427, %v2649
    %v2651 = vpop.f32.mrb[0].mxu0
    %v2652 = vadd.f32 %v2429, %v2651
    %v2653 = vpop.f32.mrb[0].mxu0
    %v2654 = vadd.f32 %v2431, %v2653
    %2655 = vmatprep.mubr.bf16.mxu0 %v454
    %2656 = vmatmul.mubr.bf16.gmra.mrb[0].mxu0 %v453
    %v2657 = vpop.f32.mrb[0].mxu0
    %v2658 = vadd.f32 %v2435, %v2657
    %v2659 = vpop.f32.mrb[0].mxu0
    %v2660 = vadd.f32 %v2437, %v2659
    %v2661 = vpop.f32.mrb[0].mxu0
    %v2662 = vadd.f32 %v2439, %v2661
    %v2663 = vpop.f32.mrb[0].mxu0
    %v2664 = vadd.f32 %v2441, %v2663
    %2665 = vmatprep.mubr.bf16.mxu0 %v462
    %2666 = vmatmul.mubr.bf16.gmra.mrb[0].mxu0 %v461
    %v2667 = vpop.f32.mrb[0].mxu0
    %v2668 = vadd.f32 %v2445, %v2667
    %v2669 = vpop.f32.mrb[0].mxu0
    %v2670 = vadd.f32 %v2447, %v2669
    %v2671 = vpop.f32.mrb[0].mxu0
    %v2672 = vadd.f32 %v2449, %v2671
    %v2673 = vpop.f32.mrb[0].mxu0
    %v2674 = vadd.f32 %v2451, %v2673
    %2675 = vmatprep.mubr.bf16.mxu0 %v470
    %2676 = vmatmul.mubr.bf16.gmra.mrb[0].mxu0 %v469
    %v2677 = vpop.f32.mrb[0].mxu0
    %v2678 = vadd.f32 %v2455, %v2677
    %v2679 = vpop.f32.mrb[0].mxu0
    %v2680 = vadd.f32 %v2457, %v2679
    %v2681 = vpop.f32.mrb[0].mxu0
    %v2682 = vadd.f32 %v2459, %v2681
    %v2683 = vpop.f32.mrb[0].mxu0
    %v2684 = vadd.f32 %v2461, %v2683
    %2685 = vmatprep.mubr.bf16.mxu0 %v478
    %2686 = vmatmul.mubr.bf16.gmra.mrb[0].mxu0 %v477
    %v2687 = vpop.f32.mrb[0].mxu0
    %v2688 = vadd.f32 %v2465, %v2687
    %v2689 = vpop.f32.mrb[0].mxu0
    %v2690 = vadd.f32 %v2467, %v2689
    %v2691 = vpop.f32.mrb[0].mxu0
    %v2692 = vadd.f32 %v2469, %v2691
    %v2693 = vpop.f32.mrb[0].mxu0
    %v2694 = vadd.f32 %v2471, %v2693
    %2695 = vmatprep.mubr.bf16.mxu0 %v486
    %2696 = vmatmul.mubr.bf16.gmra.mrb[0].mxu0 %v485
    %v2697 = vpop.f32.mrb[0].mxu0
    %v2698 = vadd.f32 %v2475, %v2697
    %v2699 = vpop.f32.mrb[0].mxu0
    %v2700 = vadd.f32 %v2477, %v2699
    %v2701 = vpop.f32.mrb[0].mxu0
    %v2702 = vadd.f32 %v2479, %v2701
    %v2703 = vpop.f32.mrb[0].mxu0
    %v2704 = vadd.f32 %v2481, %v2703
    %2705 = vmatprep.mubr.bf16.mxu0 %v494
    %2706 = vmatmul.mubr.bf16.gmra.mrb[0].mxu0 %v493
    %v2707 = vpop.f32.mrb[0].mxu0
    %v2708 = vadd.f32 %v2485, %v2707
    %v2709 = vpop.f32.mrb[0].mxu0
    %v2710 = vadd.f32 %v2487, %v2709
    %v2711 = vpop.f32.mrb[0].mxu0
    %v2712 = vadd.f32 %v2489, %v2711
    %v2713 = vpop.f32.mrb[0].mxu0
    %v2714 = vadd.f32 %v2491, %v2713
    %2715 = vmatprep.mubr.bf16.mxu0 %v502
    %2716 = vmatmul.mubr.bf16.gmra.mrb[0].mxu0 %v501
    %v2717 = vpop.f32.mrb[0].mxu0
    %v2718 = vadd.f32 %v2495, %v2717
    %v2719 = vpop.f32.mrb[0].mxu0
    %v2720 = vadd.f32 %v2497, %v2719
    %v2721 = vpop.f32.mrb[0].mxu0
    %v2722 = vadd.f32 %v2499, %v2721
    %v2723 = vpop.f32.mrb[0].mxu0
    %v2724 = vadd.f32 %v2501, %v2723
    %2725 = vmatprep.mubr.bf16.mxu0 %v510
    %2726 = vmatmul.mubr.bf16.gmra.mrb[0].mxu0 %v509
    %v2727 = vpop.f32.mrb[0].mxu0
    %v2728 = vadd.f32 %v2505, %v2727
    %v2729 = vpop.f32.mrb[0].mxu0
    %v2730 = vadd.f32 %v2507, %v2729
    %v2731 = vpop.f32.mrb[0].mxu0
    %v2732 = vadd.f32 %v2509, %v2731
    %v2733 = vpop.f32.mrb[0].mxu0
    %v2734 = vadd.f32 %v2511, %v2733
    %2735 = vmatprep.mubr.bf16.mxu0 %v518
    %2736 = vmatmul.mubr.bf16.gmra.mrb[0].mxu0 %v517
    %v2737 = vpop.f32.mrb[0].mxu0
    %v2738 = vadd.f32 %v2515, %v2737
    %v2739 = vpop.f32.mrb[0].mxu0
    %v2740 = vadd.f32 %v2517, %v2739
    %v2741 = vpop.f32.mrb[0].mxu0
    %v2742 = vadd.f32 %v2519, %v2741
    %v2743 = vpop.f32.mrb[0].mxu0
    %v2744 = vadd.f32 %v2521, %v2743
    %2745 = vmatprep.mubr.bf16.mxu0 %v526
    %2746 = vmatmul.mubr.bf16.gmra.mrb[0].mxu0 %v525
    %v2747 = vpop.f32.mrb[0].mxu0
    %v2748 = vadd.f32 %v2525, %v2747
    %v2749 = vpop.f32.mrb[0].mxu0
    %v2750 = vadd.f32 %v2527, %v2749
    %v2751 = vpop.f32.mrb[0].mxu0
    %v2752 = vadd.f32 %v2529, %v2751
    %v2753 = vpop.f32.mrb[0].mxu0
    %v2754 = vadd.f32 %v2531, %v2753
    %2755 = vdwg.mxu0
    %2756 = vmatprep.subr.bf16.mxu0 %v1768
    %2757 = vmatpush1.bf16.msra.mxu0 %v1767
    %2758 = vmatprep.subr.bf16.mxu0 %v1772
    %2759 = vmatpush1.bf16.msra.mxu0 %v1771
    %2760 = vmatprep.subr.bf16.mxu0 %v1776
    %2761 = vmatpush1.bf16.msra.mxu0 %v1775
    %2762 = vmatprep.subr.bf16.mxu0 %v1780
    %2763 = vmatpush1.bf16.msra.mxu0 %v1779
    %2764 = vmatprep.subr.bf16.mxu0 %v1784
    %2765 = vmatpush1.bf16.msra.mxu0 %v1783
    %2766 = vmatprep.subr.bf16.mxu0 %v1788
    %2767 = vmatpush1.bf16.msra.mxu0 %v1787
    %2768 = vmatprep.subr.bf16.mxu0 %v1792
    %2769 = vmatpush1.bf16.msra.mxu0 %v1791
    %2770 = vmatprep.subr.bf16.mxu0 %v1796
    %2771 = vmatpush1.bf16.msra.mxu0 %v1795
    %2772 = vmatprep.subr.bf16.mxu0 %v1800
    %2773 = vmatpush1.bf16.msra.mxu0 %v1799
    %2774 = vmatprep.subr.bf16.mxu0 %v1804
    %2775 = vmatpush1.bf16.msra.mxu0 %v1803
    %2776 = vmatprep.subr.bf16.mxu0 %v1808
    %2777 = vmatpush1.bf16.msra.mxu0 %v1807
    %2778 = vmatprep.subr.bf16.mxu0 %v1812
    %2779 = vmatpush1.bf16.msra.mxu0 %v1811
    %2780 = vmatprep.subr.bf16.mxu0 %v1816
    %2781 = vmatpush1.bf16.msra.mxu0 %v1815
    %2782 = vmatprep.subr.bf16.mxu0 %v1820
    %2783 = vmatpush1.bf16.msra.mxu0 %v1819
    %2784 = vmatprep.subr.bf16.mxu0 %v1824
    %2785 = vmatpush1.bf16.msra.mxu0 %v1823
    %2786 = vmatprep.subr.bf16.mxu0 %v1828
    %2787 = vmatpush1.bf16.msra.mxu0 %v1827
    %2788 = vmatprep.mubr.bf16.mxu0 %v384
    %2789 = vmatmul.mubr.bf16.gmra.mrb[0].mxu0 %v383
    %v2790 = vpop.f32.mrb[0].mxu0
    %v2791 = vadd.f32 %v2568, %v2790
    %v2792 = vpop.f32.mrb[0].mxu0
    %v2793 = vadd.f32 %v2570, %v2792
    %v2794 = vpop.f32.mrb[0].mxu0
    %v2795 = vadd.f32 %v2572, %v2794
    %v2796 = vpop.f32.mrb[0].mxu0
    %v2797 = vadd.f32 %v2574, %v2796
    %2798 = vmatprep.mubr.bf16.mxu0 %v392
    %2799 = vmatmul.mubr.bf16.gmra.mrb[0].mxu0 %v391
    %v2800 = vpop.f32.mrb[0].mxu0
    %v2801 = vadd.f32 %v2578, %v2800
    %v2802 = vpop.f32.mrb[0].mxu0
    %v2803 = vadd.f32 %v2580, %v2802
    %v2804 = vpop.f32.mrb[0].mxu0
    %v2805 = vadd.f32 %v2582, %v2804
    %v2806 = vpop.f32.mrb[0].mxu0
    %v2807 = vadd.f32 %v2584, %v2806
    %2808 = vmatprep.mubr.bf16.mxu0 %v400
    %2809 = vmatmul.mubr.bf16.gmra.mrb[0].mxu0 %v399
    %v2810 = vpop.f32.mrb[0].mxu0
    %v2811 = vadd.f32 %v2588, %v2810
    %v2812 = vpop.f32.mrb[0].mxu0
    %v2813 = vadd.f32 %v2590, %v2812
    %v2814 = vpop.f32.mrb[0].mxu0
    %v2815 = vadd.f32 %v2592, %v2814
    %v2816 = vpop.f32.mrb[0].mxu0
    %v2817 = vadd.f32 %v2594, %v2816
    %2818 = vmatprep.mubr.bf16.mxu0 %v408
    %2819 = vmatmul.mubr.bf16.gmra.mrb[0].mxu0 %v407
    %v2820 = vpop.f32.mrb[0].mxu0
    %v2821 = vadd.f32 %v2598, %v2820
    %v2822 = vpop.f32.mrb[0].mxu0
    %v2823 = vadd.f32 %v2600, %v2822
    %v2824 = vpop.f32.mrb[0].mxu0
    %v2825 = vadd.f32 %v2602, %v2824
    %v2826 = vpop.f32.mrb[0].mxu0
    %v2827 = vadd.f32 %v2604, %v2826
    %2828 = vmatprep.mubr.bf16.mxu0 %v416
    %2829 = vmatmul.mubr.bf16.gmra.mrb[0].mxu0 %v415
    %v2830 = vpop.f32.mrb[0].mxu0
    %v2831 = vadd.f32 %v2608, %v2830
    %v2832 = vpop.f32.mrb[0].mxu0
    %v2833 = vadd.f32 %v2610, %v2832
    %v2834 = vpop.f32.mrb[0].mxu0
    %v2835 = vadd.f32 %v2612, %v2834
    %v2836 = vpop.f32.mrb[0].mxu0
    %v2837 = vadd.f32 %v2614, %v2836
    %2838 = vmatprep.mubr.bf16.mxu0 %v424
    %2839 = vmatmul.mubr.bf16.gmra.mrb[0].mxu0 %v423
    %v2840 = vpop.f32.mrb[0].mxu0
    %v2841 = vadd.f32 %v2618, %v2840
    %v2842 = vpop.f32.mrb[0].mxu0
    %v2843 = vadd.f32 %v2620, %v2842
    %v2844 = vpop.f32.mrb[0].mxu0
    %v2845 = vadd.f32 %v2622, %v2844
    %v2846 = vpop.f32.mrb[0].mxu0
    %v2847 = vadd.f32 %v2624, %v2846
    %2848 = vmatprep.mubr.bf16.mxu0 %v432
    %2849 = vmatmul.mubr.bf16.gmra.mrb[0].mxu0 %v431
    %v2850 = vpop.f32.mrb[0].mxu0
    %v2851 = vadd.f32 %v2628, %v2850
    %v2852 = vpop.f32.mrb[0].mxu0
    %v2853 = vadd.f32 %v2630, %v2852
    %v2854 = vpop.f32.mrb[0].mxu0
    %v2855 = vadd.f32 %v2632, %v2854
    %v2856 = vpop.f32.mrb[0].mxu0
    %v2857 = vadd.f32 %v2634, %v2856
    %2858 = vmatprep.mubr.bf16.mxu0 %v440
    %2859 = vmatmul.mubr.bf16.gmra.mrb[0].mxu0 %v439
    %v2860 = vpop.f32.mrb[0].mxu0
    %v2861 = vadd.f32 %v2638, %v2860
    %v2862 = vpop.f32.mrb[0].mxu0
    %v2863 = vadd.f32 %v2640, %v2862
    %v2864 = vpop.f32.mrb[0].mxu0
    %v2865 = vadd.f32 %v2642, %v2864
    %v2866 = vpop.f32.mrb[0].mxu0
    %v2867 = vadd.f32 %v2644, %v2866
    %2868 = vmatprep.mubr.bf16.mxu0 %v448
    %2869 = vmatmul.mubr.bf16.gmra.mrb[0].mxu0 %v447
    %v2870 = vpop.f32.mrb[0].mxu0
    %v2871 = vadd.f32 %v2648, %v2870
    %v2872 = vpop.f32.mrb[0].mxu0
    %v2873 = vadd.f32 %v2650, %v2872
    %v2874 = vpop.f32.mrb[0].mxu0
    %v2875 = vadd.f32 %v2652, %v2874
    %v2876 = vpop.f32.mrb[0].mxu0
    %v2877 = vadd.f32 %v2654, %v2876
    %2878 = vmatprep.mubr.bf16.mxu0 %v456
    %2879 = vmatmul.mubr.bf16.gmra.mrb[0].mxu0 %v455
    %v2880 = vpop.f32.mrb[0].mxu0
    %v2881 = vadd.f32 %v2658, %v2880
    %v2882 = vpop.f32.mrb[0].mxu0
    %v2883 = vadd.f32 %v2660, %v2882
    %v2884 = vpop.f32.mrb[0].mxu0
    %v2885 = vadd.f32 %v2662, %v2884
    %v2886 = vpop.f32.mrb[0].mxu0
    %v2887 = vadd.f32 %v2664, %v2886
    %2888 = vmatprep.mubr.bf16.mxu0 %v464
    %2889 = vmatmul.mubr.bf16.gmra.mrb[0].mxu0 %v463
    %v2890 = vpop.f32.mrb[0].mxu0
    %v2891 = vadd.f32 %v2668, %v2890
    %v2892 = vpop.f32.mrb[0].mxu0
    %v2893 = vadd.f32 %v2670, %v2892
    %v2894 = vpop.f32.mrb[0].mxu0
    %v2895 = vadd.f32 %v2672, %v2894
    %v2896 = vpop.f32.mrb[0].mxu0
    %v2897 = vadd.f32 %v2674, %v2896
    %2898 = vmatprep.mubr.bf16.mxu0 %v472
    %2899 = vmatmul.mubr.bf16.gmra.mrb[0].mxu0 %v471
    %v2900 = vpop.f32.mrb[0].mxu0
    %v2901 = vadd.f32 %v2678, %v2900
    %v2902 = vpop.f32.mrb[0].mxu0
    %v2903 = vadd.f32 %v2680, %v2902
    %v2904 = vpop.f32.mrb[0].mxu0
    %v2905 = vadd.f32 %v2682, %v2904
    %v2906 = vpop.f32.mrb[0].mxu0
    %v2907 = vadd.f32 %v2684, %v2906
    %2908 = vmatprep.mubr.bf16.mxu0 %v480
    %2909 = vmatmul.mubr.bf16.gmra.mrb[0].mxu0 %v479
    %v2910 = vpop.f32.mrb[0].mxu0
    %v2911 = vadd.f32 %v2688, %v2910
    %v2912 = vpop.f32.mrb[0].mxu0
    %v2913 = vadd.f32 %v2690, %v2912
    %v2914 = vpop.f32.mrb[0].mxu0
    %v2915 = vadd.f32 %v2692, %v2914
    %v2916 = vpop.f32.mrb[0].mxu0
    %v2917 = vadd.f32 %v2694, %v2916
    %2918 = vmatprep.mubr.bf16.mxu0 %v488
    %2919 = vmatmul.mubr.bf16.gmra.mrb[0].mxu0 %v487
    %v2920 = vpop.f32.mrb[0].mxu0
    %v2921 = vadd.f32 %v2698, %v2920
    %v2922 = vpop.f32.mrb[0].mxu0
    %v2923 = vadd.f32 %v2700, %v2922
    %v2924 = vpop.f32.mrb[0].mxu0
    %v2925 = vadd.f32 %v2702, %v2924
    %v2926 = vpop.f32.mrb[0].mxu0
    %v2927 = vadd.f32 %v2704, %v2926
    %2928 = vmatprep.mubr.bf16.mxu0 %v496
    %2929 = vmatmul.mubr.bf16.gmra.mrb[0].mxu0 %v495
    %v2930 = vpop.f32.mrb[0].mxu0
    %v2931 = vadd.f32 %v2708, %v2930
    %v2932 = vpop.f32.mrb[0].mxu0
    %v2933 = vadd.f32 %v2710, %v2932
    %v2934 = vpop.f32.mrb[0].mxu0
    %v2935 = vadd.f32 %v2712, %v2934
    %v2936 = vpop.f32.mrb[0].mxu0
    %v2937 = vadd.f32 %v2714, %v2936
    %2938 = vmatprep.mubr.bf16.mxu0 %v504
    %2939 = vmatmul.mubr.bf16.gmra.mrb[0].mxu0 %v503
    %v2940 = vpop.f32.mrb[0].mxu0
    %v2941 = vadd.f32 %v2718, %v2940
    %v2942 = vpop.f32.mrb[0].mxu0
    %v2943 = vadd.f32 %v2720, %v2942
    %v2944 = vpop.f32.mrb[0].mxu0
    %v2945 = vadd.f32 %v2722, %v2944
    %v2946 = vpop.f32.mrb[0].mxu0
    %v2947 = vadd.f32 %v2724, %v2946
    %2948 = vmatprep.mubr.bf16.mxu0 %v512
    %2949 = vmatmul.mubr.bf16.gmra.mrb[0].mxu0 %v511
    %v2950 = vpop.f32.mrb[0].mxu0
    %v2951 = vadd.f32 %v2728, %v2950
    %v2952 = vpop.f32.mrb[0].mxu0
    %v2953 = vadd.f32 %v2730, %v2952
    %v2954 = vpop.f32.mrb[0].mxu0
    %v2955 = vadd.f32 %v2732, %v2954
    %v2956 = vpop.f32.mrb[0].mxu0
    %v2957 = vadd.f32 %v2734, %v2956
    %2958 = vmatprep.mubr.bf16.mxu0 %v520
    %2959 = vmatmul.mubr.bf16.gmra.mrb[0].mxu0 %v519
    %v2960 = vpop.f32.mrb[0].mxu0
    %v2961 = vadd.f32 %v2738, %v2960
    %v2962 = vpop.f32.mrb[0].mxu0
    %v2963 = vadd.f32 %v2740, %v2962
    %v2964 = vpop.f32.mrb[0].mxu0
    %v2965 = vadd.f32 %v2742, %v2964
    %v2966 = vpop.f32.mrb[0].mxu0
    %v2967 = vadd.f32 %v2744, %v2966
    %2968 = vmatprep.mubr.bf16.mxu0 %v528
    %2969 = vmatmul.mubr.bf16.gmra.mrb[0].mxu0 %v527
    %v2970 = vpop.f32.mrb[0].mxu0
    %v2971 = vadd.f32 %v2748, %v2970
    %v2972 = vpop.f32.mrb[0].mxu0
    %v2973 = vadd.f32 %v2750, %v2972
    %v2974 = vpop.f32.mrb[0].mxu0
    %v2975 = vadd.f32 %v2752, %v2974
    %v2976 = vpop.f32.mrb[0].mxu0
    %v2977 = vadd.f32 %v2754, %v2976
    %2978 = vdwg.mxu0
    %2979 = vmatprep.subr.bf16.mxu0 %v1578
    %2980 = vmatpush1.bf16.msra.mxu0 %v1577
    %2981 = vmatprep.subr.bf16.mxu0 %v1582
    %2982 = vmatpush1.bf16.msra.mxu0 %v1581
    %2983 = vmatprep.subr.bf16.mxu0 %v1586
    %2984 = vmatpush1.bf16.msra.mxu0 %v1585
    %2985 = vmatprep.subr.bf16.mxu0 %v1590
    %2986 = vmatpush1.bf16.msra.mxu0 %v1589
    %2987 = vmatprep.subr.bf16.mxu0 %v1594
    %2988 = vmatpush1.bf16.msra.mxu0 %v1593
    %2989 = vmatprep.subr.bf16.mxu0 %v1598
    %2990 = vmatpush1.bf16.msra.mxu0 %v1597
    %2991 = vmatprep.subr.bf16.mxu0 %v1602
    %2992 = vmatpush1.bf16.msra.mxu0 %v1601
    %2993 = vmatprep.subr.bf16.mxu0 %v1606
    %2994 = vmatpush1.bf16.msra.mxu0 %v1605
    %2995 = vmatprep.subr.bf16.mxu0 %v1610
    %2996 = vmatpush1.bf16.msra.mxu0 %v1609
    %2997 = vmatprep.subr.bf16.mxu0 %v1614
    %2998 = vmatpush1.bf16.msra.mxu0 %v1613
    %2999 = vmatprep.subr.bf16.mxu0 %v1618
    %3000 = vmatpush1.bf16.msra.mxu0 %v1617
    %3001 = vmatprep.subr.bf16.mxu0 %v1622
    %3002 = vmatpush1.bf16.msra.mxu0 %v1621
    %3003 = vmatprep.subr.bf16.mxu0 %v1626
    %3004 = vmatpush1.bf16.msra.mxu0 %v1625
    %3005 = vmatprep.subr.bf16.mxu0 %v1630
    %3006 = vmatpush1.bf16.msra.mxu0 %v1629
    %3007 = vmatprep.subr.bf16.mxu0 %v1634
    %3008 = vmatpush1.bf16.msra.mxu0 %v1633
    %3009 = vmatprep.subr.bf16.mxu0 %v1638
    %3010 = vmatpush1.bf16.msra.mxu0 %v1637
    %3011 = vmatprep.mubr.bf16.mxu0 %v378
    %3012 = vmatmul.mubr.bf16.gmra.mrb[0].mxu0 %v377
    %v3013 = vpop.f32.mrb[0].mxu0
    %v3014 = vadd.f32 %v798, %v3013
    %v3015 = vpop.f32.mrb[0].mxu0
    %v3016 = vadd.f32 %v802, %v3015
    %v3017 = vpop.f32.mrb[0].mxu0
    %v3018 = vadd.f32 %v798, %v3017
    %v3019 = vpop.f32.mrb[0].mxu0
    %v3020 = vadd.f32 %v802, %v3019
    %3021 = vmatprep.mubr.bf16.mxu0 %v386
    %3022 = vmatmul.mubr.bf16.gmra.mrb[0].mxu0 %v385
    %v3023 = vpop.f32.mrb[0].mxu0
    %v3024 = vadd.f32 %v798, %v3023
    %v3025 = vpop.f32.mrb[0].mxu0
    %v3026 = vadd.f32 %v802, %v3025
    %v3027 = vpop.f32.mrb[0].mxu0
    %v3028 = vadd.f32 %v798, %v3027
    %v3029 = vpop.f32.mrb[0].mxu0
    %v3030 = vadd.f32 %v802, %v3029
    %3031 = vmatprep.mubr.bf16.mxu0 %v394
    %3032 = vmatmul.mubr.bf16.gmra.mrb[0].mxu0 %v393
    %v3033 = vpop.f32.mrb[0].mxu0
    %v3034 = vadd.f32 %v798, %v3033
    %v3035 = vpop.f32.mrb[0].mxu0
    %v3036 = vadd.f32 %v802, %v3035
    %v3037 = vpop.f32.mrb[0].mxu0
    %v3038 = vadd.f32 %v798, %v3037
    %v3039 = vpop.f32.mrb[0].mxu0
    %v3040 = vadd.f32 %v802, %v3039
    %3041 = vmatprep.mubr.bf16.mxu0 %v402
    %3042 = vmatmul.mubr.bf16.gmra.mrb[0].mxu0 %v401
    %v3043 = vpop.f32.mrb[0].mxu0
    %v3044 = vadd.f32 %v798, %v3043
    %v3045 = vpop.f32.mrb[0].mxu0
    %v3046 = vadd.f32 %v802, %v3045
    %v3047 = vpop.f32.mrb[0].mxu0
    %v3048 = vadd.f32 %v798, %v3047
    %v3049 = vpop.f32.mrb[0].mxu0
    %v3050 = vadd.f32 %v802, %v3049
    %3051 = vmatprep.mubr.bf16.mxu0 %v410
    %3052 = vmatmul.mubr.bf16.gmra.mrb[0].mxu0 %v409
    %v3053 = vpop.f32.mrb[0].mxu0
    %v3054 = vadd.f32 %v798, %v3053
    %v3055 = vpop.f32.mrb[0].mxu0
    %v3056 = vadd.f32 %v802, %v3055
    %v3057 = vpop.f32.mrb[0].mxu0
    %v3058 = vadd.f32 %v798, %v3057
    %v3059 = vpop.f32.mrb[0].mxu0
    %v3060 = vadd.f32 %v802, %v3059
    %3061 = vmatprep.mubr.bf16.mxu0 %v418
    %3062 = vmatmul.mubr.bf16.gmra.mrb[0].mxu0 %v417
    %v3063 = vpop.f32.mrb[0].mxu0
    %v3064 = vadd.f32 %v798, %v3063
    %v3065 = vpop.f32.mrb[0].mxu0
    %v3066 = vadd.f32 %v802, %v3065
    %v3067 = vpop.f32.mrb[0].mxu0
    %v3068 = vadd.f32 %v798, %v3067
    %v3069 = vpop.f32.mrb[0].mxu0
    %v3070 = vadd.f32 %v802, %v3069
    %3071 = vmatprep.mubr.bf16.mxu0 %v426
    %3072 = vmatmul.mubr.bf16.gmra.mrb[0].mxu0 %v425
    %v3073 = vpop.f32.mrb[0].mxu0
    %v3074 = vadd.f32 %v798, %v3073
    %v3075 = vpop.f32.mrb[0].mxu0
    %v3076 = vadd.f32 %v802, %v3075
    %v3077 = vpop.f32.mrb[0].mxu0
    %v3078 = vadd.f32 %v798, %v3077
    %v3079 = vpop.f32.mrb[0].mxu0
    %v3080 = vadd.f32 %v802, %v3079
    %3081 = vmatprep.mubr.bf16.mxu0 %v434
    %3082 = vmatmul.mubr.bf16.gmra.mrb[0].mxu0 %v433
    %v3083 = vpop.f32.mrb[0].mxu0
    %v3084 = vadd.f32 %v798, %v3083
    %v3085 = vpop.f32.mrb[0].mxu0
    %v3086 = vadd.f32 %v802, %v3085
    %v3087 = vpop.f32.mrb[0].mxu0
    %v3088 = vadd.f32 %v798, %v3087
    %v3089 = vpop.f32.mrb[0].mxu0
    %v3090 = vadd.f32 %v802, %v3089
    %3091 = vmatprep.mubr.bf16.mxu0 %v442
    %3092 = vmatmul.mubr.bf16.gmra.mrb[0].mxu0 %v441
    %v3093 = vpop.f32.mrb[0].mxu0
    %v3094 = vadd.f32 %v798, %v3093
    %v3095 = vpop.f32.mrb[0].mxu0
    %v3096 = vadd.f32 %v802, %v3095
    %v3097 = vpop.f32.mrb[0].mxu0
    %v3098 = vadd.f32 %v798, %v3097
    %v3099 = vpop.f32.mrb[0].mxu0
    %v3100 = vadd.f32 %v802, %v3099
    %3101 = vmatprep.mubr.bf16.mxu0 %v450
    %3102 = vmatmul.mubr.bf16.gmra.mrb[0].mxu0 %v449
    %v3103 = vpop.f32.mrb[0].mxu0
    %v3104 = vadd.f32 %v798, %v3103
    %v3105 = vpop.f32.mrb[0].mxu0
    %v3106 = vadd.f32 %v802, %v3105
    %v3107 = vpop.f32.mrb[0].mxu0
    %v3108 = vadd.f32 %v798, %v3107
    %v3109 = vpop.f32.mrb[0].mxu0
    %v3110 = vadd.f32 %v802, %v3109
    %3111 = vmatprep.mubr.bf16.mxu0 %v458
    %3112 = vmatmul.mubr.bf16.gmra.mrb[0].mxu0 %v457
    %v3113 = vpop.f32.mrb[0].mxu0
    %v3114 = vadd.f32 %v798, %v3113
    %v3115 = vpop.f32.mrb[0].mxu0
    %v3116 = vadd.f32 %v802, %v3115
    %v3117 = vpop.f32.mrb[0].mxu0
    %v3118 = vadd.f32 %v798, %v3117
    %v3119 = vpop.f32.mrb[0].mxu0
    %v3120 = vadd.f32 %v802, %v3119
    %3121 = vmatprep.mubr.bf16.mxu0 %v466
    %3122 = vmatmul.mubr.bf16.gmra.mrb[0].mxu0 %v465
    %v3123 = vpop.f32.mrb[0].mxu0
    %v3124 = vadd.f32 %v798, %v3123
    %v3125 = vpop.f32.mrb[0].mxu0
    %v3126 = vadd.f32 %v802, %v3125
    %v3127 = vpop.f32.mrb[0].mxu0
    %v3128 = vadd.f32 %v798, %v3127
    %v3129 = vpop.f32.mrb[0].mxu0
    %v3130 = vadd.f32 %v802, %v3129
    %3131 = vmatprep.mubr.bf16.mxu0 %v474
    %3132 = vmatmul.mubr.bf16.gmra.mrb[0].mxu0 %v473
    %v3133 = vpop.f32.mrb[0].mxu0
    %v3134 = vadd.f32 %v798, %v3133
    %v3135 = vpop.f32.mrb[0].mxu0
    %v3136 = vadd.f32 %v802, %v3135
    %v3137 = vpop.f32.mrb[0].mxu0
    %v3138 = vadd.f32 %v798, %v3137
    %v3139 = vpop.f32.mrb[0].mxu0
    %v3140 = vadd.f32 %v802, %v3139
    %3141 = vmatprep.mubr.bf16.mxu0 %v482
    %3142 = vmatmul.mubr.bf16.gmra.mrb[0].mxu0 %v481
    %v3143 = vpop.f32.mrb[0].mxu0
    %v3144 = vadd.f32 %v798, %v3143
    %v3145 = vpop.f32.mrb[0].mxu0
    %v3146 = vadd.f32 %v802, %v3145
    %v3147 = vpop.f32.mrb[0].mxu0
    %v3148 = vadd.f32 %v798, %v3147
    %v3149 = vpop.f32.mrb[0].mxu0
    %v3150 = vadd.f32 %v802, %v3149
    %3151 = vmatprep.mubr.bf16.mxu0 %v490
    %3152 = vmatmul.mubr.bf16.gmra.mrb[0].mxu0 %v489
    %v3153 = vpop.f32.mrb[0].mxu0
    %v3154 = vadd.f32 %v798, %v3153
    %v3155 = vpop.f32.mrb[0].mxu0
    %v3156 = vadd.f32 %v802, %v3155
    %v3157 = vpop.f32.mrb[0].mxu0
    %v3158 = vadd.f32 %v798, %v3157
    %v3159 = vpop.f32.mrb[0].mxu0
    %v3160 = vadd.f32 %v802, %v3159
    %3161 = vmatprep.mubr.bf16.mxu0 %v498
    %3162 = vmatmul.mubr.bf16.gmra.mrb[0].mxu0 %v497
    %v3163 = vpop.f32.mrb[0].mxu0
    %v3164 = vadd.f32 %v798, %v3163
    %v3165 = vpop.f32.mrb[0].mxu0
    %v3166 = vadd.f32 %v802, %v3165
    %v3167 = vpop.f32.mrb[0].mxu0
    %v3168 = vadd.f32 %v798, %v3167
    %v3169 = vpop.f32.mrb[0].mxu0
    %v3170 = vadd.f32 %v802, %v3169
    %3171 = vmatprep.mubr.bf16.mxu0 %v506
    %3172 = vmatmul.mubr.bf16.gmra.mrb[0].mxu0 %v505
    %v3173 = vpop.f32.mrb[0].mxu0
    %v3174 = vadd.f32 %v798, %v3173
    %v3175 = vpop.f32.mrb[0].mxu0
    %v3176 = vadd.f32 %v802, %v3175
    %v3177 = vpop.f32.mrb[0].mxu0
    %v3178 = vadd.f32 %v798, %v3177
    %v3179 = vpop.f32.mrb[0].mxu0
    %v3180 = vadd.f32 %v802, %v3179
    %3181 = vmatprep.mubr.bf16.mxu0 %v514
    %3182 = vmatmul.mubr.bf16.gmra.mrb[0].mxu0 %v513
    %v3183 = vpop.f32.mrb[0].mxu0
    %v3184 = vadd.f32 %v798, %v3183
    %v3185 = vpop.f32.mrb[0].mxu0
    %v3186 = vadd.f32 %v802, %v3185
    %v3187 = vpop.f32.mrb[0].mxu0
    %v3188 = vadd.f32 %v798, %v3187
    %v3189 = vpop.f32.mrb[0].mxu0
    %v3190 = vadd.f32 %v802, %v3189
    %3191 = vmatprep.mubr.bf16.mxu0 %v522
    %3192 = vmatmul.mubr.bf16.gmra.mrb[0].mxu0 %v521
    %v3193 = vpop.f32.mrb[0].mxu0
    %v3194 = vadd.f32 %v798, %v3193
    %v3195 = vpop.f32.mrb[0].mxu0
    %v3196 = vadd.f32 %v802, %v3195
    %v3197 = vpop.f32.mrb[0].mxu0
    %v3198 = vadd.f32 %v798, %v3197
    %v3199 = vpop.f32.mrb[0].mxu0
    %v3200 = vadd.f32 %v802, %v3199
    %3201 = vdwg.mxu0
    %3202 = vmatprep.subr.bf16.mxu0 %v1642
    %3203 = vmatpush1.bf16.msra.mxu0 %v1641
    %3204 = vmatprep.subr.bf16.mxu0 %v1646
    %3205 = vmatpush1.bf16.msra.mxu0 %v1645
    %3206 = vmatprep.subr.bf16.mxu0 %v1650
    %3207 = vmatpush1.bf16.msra.mxu0 %v1649
    %3208 = vmatprep.subr.bf16.mxu0 %v1654
    %3209 = vmatpush1.bf16.msra.mxu0 %v1653
    %3210 = vmatprep.subr.bf16.mxu0 %v1658
    %3211 = vmatpush1.bf16.msra.mxu0 %v1657
    %3212 = vmatprep.subr.bf16.mxu0 %v1662
    %3213 = vmatpush1.bf16.msra.mxu0 %v1661
    %3214 = vmatprep.subr.bf16.mxu0 %v1666
    %3215 = vmatpush1.bf16.msra.mxu0 %v1665
    %3216 = vmatprep.subr.bf16.mxu0 %v1670
    %3217 = vmatpush1.bf16.msra.mxu0 %v1669
    %3218 = vmatprep.subr.bf16.mxu0 %v1674
    %3219 = vmatpush1.bf16.msra.mxu0 %v1673
    %3220 = vmatprep.subr.bf16.mxu0 %v1678
    %3221 = vmatpush1.bf16.msra.mxu0 %v1677
    %3222 = vmatprep.subr.bf16.mxu0 %v1682
    %3223 = vmatpush1.bf16.msra.mxu0 %v1681
    %3224 = vmatprep.subr.bf16.mxu0 %v1686
    %3225 = vmatpush1.bf16.msra.mxu0 %v1685
    %3226 = vmatprep.subr.bf16.mxu0 %v1690
    %3227 = vmatpush1.bf16.msra.mxu0 %v1689
    %3228 = vmatprep.subr.bf16.mxu0 %v1694
    %3229 = vmatpush1.bf16.msra.mxu0 %v1693
    %3230 = vmatprep.subr.bf16.mxu0 %v1698
    %3231 = vmatpush1.bf16.msra.mxu0 %v1697
    %3232 = vmatprep.subr.bf16.mxu0 %v1702
    %3233 = vmatpush1.bf16.msra.mxu0 %v1701
    %3234 = vmatprep.mubr.bf16.mxu0 %v380
    %3235 = vmatmul.mubr.bf16.gmra.mrb[0].mxu0 %v379
    %v3236 = vpop.f32.mrb[0].mxu0
    %v3237 = vadd.f32 %v3014, %v3236
    %v3238 = vpop.f32.mrb[0].mxu0
    %v3239 = vadd.f32 %v3016, %v3238
    %v3240 = vpop.f32.mrb[0].mxu0
    %v3241 = vadd.f32 %v3018, %v3240
    %v3242 = vpop.f32.mrb[0].mxu0
    %v3243 = vadd.f32 %v3020, %v3242
    %3244 = vmatprep.mubr.bf16.mxu0 %v388
    %3245 = vmatmul.mubr.bf16.gmra.mrb[0].mxu0 %v387
    %v3246 = vpop.f32.mrb[0].mxu0
    %v3247 = vadd.f32 %v3024, %v3246
    %v3248 = vpop.f32.mrb[0].mxu0
    %v3249 = vadd.f32 %v3026, %v3248
    %v3250 = vpop.f32.mrb[0].mxu0
    %v3251 = vadd.f32 %v3028, %v3250
    %v3252 = vpop.f32.mrb[0].mxu0
    %v3253 = vadd.f32 %v3030, %v3252
    %3254 = vmatprep.mubr.bf16.mxu0 %v396
    %3255 = vmatmul.mubr.bf16.gmra.mrb[0].mxu0 %v395
    %v3256 = vpop.f32.mrb[0].mxu0
    %v3257 = vadd.f32 %v3034, %v3256
    %v3258 = vpop.f32.mrb[0].mxu0
    %v3259 = vadd.f32 %v3036, %v3258
    %v3260 = vpop.f32.mrb[0].mxu0
    %v3261 = vadd.f32 %v3038, %v3260
    %v3262 = vpop.f32.mrb[0].mxu0
    %v3263 = vadd.f32 %v3040, %v3262
    %3264 = vmatprep.mubr.bf16.mxu0 %v404
    %3265 = vmatmul.mubr.bf16.gmra.mrb[0].mxu0 %v403
    %v3266 = vpop.f32.mrb[0].mxu0
    %v3267 = vadd.f32 %v3044, %v3266
    %v3268 = vpop.f32.mrb[0].mxu0
    %v3269 = vadd.f32 %v3046, %v3268
    %v3270 = vpop.f32.mrb[0].mxu0
    %v3271 = vadd.f32 %v3048, %v3270
    %v3272 = vpop.f32.mrb[0].mxu0
    %v3273 = vadd.f32 %v3050, %v3272
    %3274 = vmatprep.mubr.bf16.mxu0 %v412
    %3275 = vmatmul.mubr.bf16.gmra.mrb[0].mxu0 %v411
    %v3276 = vpop.f32.mrb[0].mxu0
    %v3277 = vadd.f32 %v3054, %v3276
    %v3278 = vpop.f32.mrb[0].mxu0
    %v3279 = vadd.f32 %v3056, %v3278
    %v3280 = vpop.f32.mrb[0].mxu0
    %v3281 = vadd.f32 %v3058, %v3280
    %v3282 = vpop.f32.mrb[0].mxu0
    %v3283 = vadd.f32 %v3060, %v3282
    %3284 = vmatprep.mubr.bf16.mxu0 %v420
    %3285 = vmatmul.mubr.bf16.gmra.mrb[0].mxu0 %v419
    %v3286 = vpop.f32.mrb[0].mxu0
    %v3287 = vadd.f32 %v3064, %v3286
    %v3288 = vpop.f32.mrb[0].mxu0
    %v3289 = vadd.f32 %v3066, %v3288
    %v3290 = vpop.f32.mrb[0].mxu0
    %v3291 = vadd.f32 %v3068, %v3290
    %v3292 = vpop.f32.mrb[0].mxu0
    %v3293 = vadd.f32 %v3070, %v3292
    %3294 = vmatprep.mubr.bf16.mxu0 %v428
    %3295 = vmatmul.mubr.bf16.gmra.mrb[0].mxu0 %v427
    %v3296 = vpop.f32.mrb[0].mxu0
    %v3297 = vadd.f32 %v3074, %v3296
    %v3298 = vpop.f32.mrb[0].mxu0
    %v3299 = vadd.f32 %v3076, %v3298
    %v3300 = vpop.f32.mrb[0].mxu0
    %v3301 = vadd.f32 %v3078, %v3300
    %v3302 = vpop.f32.mrb[0].mxu0
    %v3303 = vadd.f32 %v3080, %v3302
    %3304 = vmatprep.mubr.bf16.mxu0 %v436
    %3305 = vmatmul.mubr.bf16.gmra.mrb[0].mxu0 %v435
    %v3306 = vpop.f32.mrb[0].mxu0
    %v3307 = vadd.f32 %v3084, %v3306
    %v3308 = vpop.f32.mrb[0].mxu0
    %v3309 = vadd.f32 %v3086, %v3308
    %v3310 = vpop.f32.mrb[0].mxu0
    %v3311 = vadd.f32 %v3088, %v3310
    %v3312 = vpop.f32.mrb[0].mxu0
    %v3313 = vadd.f32 %v3090, %v3312
    %3314 = vmatprep.mubr.bf16.mxu0 %v444
    %3315 = vmatmul.mubr.bf16.gmra.mrb[0].mxu0 %v443
    %v3316 = vpop.f32.mrb[0].mxu0
    %v3317 = vadd.f32 %v3094, %v3316
    %v3318 = vpop.f32.mrb[0].mxu0
    %v3319 = vadd.f32 %v3096, %v3318
    %v3320 = vpop.f32.mrb[0].mxu0
    %v3321 = vadd.f32 %v3098, %v3320
    %v3322 = vpop.f32.mrb[0].mxu0
    %v3323 = vadd.f32 %v3100, %v3322
    %3324 = vmatprep.mubr.bf16.mxu0 %v452
    %3325 = vmatmul.mubr.bf16.gmra.mrb[0].mxu0 %v451
    %v3326 = vpop.f32.mrb[0].mxu0
    %v3327 = vadd.f32 %v3104, %v3326
    %v3328 = vpop.f32.mrb[0].mxu0
    %v3329 = vadd.f32 %v3106, %v3328
    %v3330 = vpop.f32.mrb[0].mxu0
    %v3331 = vadd.f32 %v3108, %v3330
    %v3332 = vpop.f32.mrb[0].mxu0
    %v3333 = vadd.f32 %v3110, %v3332
    %3334 = vmatprep.mubr.bf16.mxu0 %v460
    %3335 = vmatmul.mubr.bf16.gmra.mrb[0].mxu0 %v459
    %v3336 = vpop.f32.mrb[0].mxu0
    %v3337 = vadd.f32 %v3114, %v3336
    %v3338 = vpop.f32.mrb[0].mxu0
    %v3339 = vadd.f32 %v3116, %v3338
    %v3340 = vpop.f32.mrb[0].mxu0
    %v3341 = vadd.f32 %v3118, %v3340
    %v3342 = vpop.f32.mrb[0].mxu0
    %v3343 = vadd.f32 %v3120, %v3342
    %3344 = vmatprep.mubr.bf16.mxu0 %v468
    %3345 = vmatmul.mubr.bf16.gmra.mrb[0].mxu0 %v467
    %v3346 = vpop.f32.mrb[0].mxu0
    %v3347 = vadd.f32 %v3124, %v3346
    %v3348 = vpop.f32.mrb[0].mxu0
    %v3349 = vadd.f32 %v3126, %v3348
    %v3350 = vpop.f32.mrb[0].mxu0
    %v3351 = vadd.f32 %v3128, %v3350
    %v3352 = vpop.f32.mrb[0].mxu0
    %v3353 = vadd.f32 %v3130, %v3352
    %3354 = vmatprep.mubr.bf16.mxu0 %v476
    %3355 = vmatmul.mubr.bf16.gmra.mrb[0].mxu0 %v475
    %v3356 = vpop.f32.mrb[0].mxu0
    %v3357 = vadd.f32 %v3134, %v3356
    %v3358 = vpop.f32.mrb[0].mxu0
    %v3359 = vadd.f32 %v3136, %v3358
    %v3360 = vpop.f32.mrb[0].mxu0
    %v3361 = vadd.f32 %v3138, %v3360
    %v3362 = vpop.f32.mrb[0].mxu0
    %v3363 = vadd.f32 %v3140, %v3362
    %3364 = vmatprep.mubr.bf16.mxu0 %v484
    %3365 = vmatmul.mubr.bf16.gmra.mrb[0].mxu0 %v483
    %v3366 = vpop.f32.mrb[0].mxu0
    %v3367 = vadd.f32 %v3144, %v3366
    %v3368 = vpop.f32.mrb[0].mxu0
    %v3369 = vadd.f32 %v3146, %v3368
    %v3370 = vpop.f32.mrb[0].mxu0
    %v3371 = vadd.f32 %v3148, %v3370
    %v3372 = vpop.f32.mrb[0].mxu0
    %v3373 = vadd.f32 %v3150, %v3372
    %3374 = vmatprep.mubr.bf16.mxu0 %v492
    %3375 = vmatmul.mubr.bf16.gmra.mrb[0].mxu0 %v491
    %v3376 = vpop.f32.mrb[0].mxu0
    %v3377 = vadd.f32 %v3154, %v3376
    %v3378 = vpop.f32.mrb[0].mxu0
    %v3379 = vadd.f32 %v3156, %v3378
    %v3380 = vpop.f32.mrb[0].mxu0
    %v3381 = vadd.f32 %v3158, %v3380
    %v3382 = vpop.f32.mrb[0].mxu0
    %v3383 = vadd.f32 %v3160, %v3382
    %3384 = vmatprep.mubr.bf16.mxu0 %v500
    %3385 = vmatmul.mubr.bf16.gmra.mrb[0].mxu0 %v499
    %v3386 = vpop.f32.mrb[0].mxu0
    %v3387 = vadd.f32 %v3164, %v3386
    %v3388 = vpop.f32.mrb[0].mxu0
    %v3389 = vadd.f32 %v3166, %v3388
    %v3390 = vpop.f32.mrb[0].mxu0
    %v3391 = vadd.f32 %v3168, %v3390
    %v3392 = vpop.f32.mrb[0].mxu0
    %v3393 = vadd.f32 %v3170, %v3392
    %3394 = vmatprep.mubr.bf16.mxu0 %v508
    %3395 = vmatmul.mubr.bf16.gmra.mrb[0].mxu0 %v507
    %v3396 = vpop.f32.mrb[0].mxu0
    %v3397 = vadd.f32 %v3174, %v3396
    %v3398 = vpop.f32.mrb[0].mxu0
    %v3399 = vadd.f32 %v3176, %v3398
    %v3400 = vpop.f32.mrb[0].mxu0
    %v3401 = vadd.f32 %v3178, %v3400
    %v3402 = vpop.f32.mrb[0].mxu0
    %v3403 = vadd.f32 %v3180, %v3402
    %3404 = vmatprep.mubr.bf16.mxu0 %v516
    %3405 = vmatmul.mubr.bf16.gmra.mrb[0].mxu0 %v515
    %v3406 = vpop.f32.mrb[0].mxu0
    %v3407 = vadd.f32 %v3184, %v3406
    %v3408 = vpop.f32.mrb[0].mxu0
    %v3409 = vadd.f32 %v3186, %v3408
    %v3410 = vpop.f32.mrb[0].mxu0
    %v3411 = vadd.f32 %v3188, %v3410
    %v3412 = vpop.f32.mrb[0].mxu0
    %v3413 = vadd.f32 %v3190, %v3412
    %3414 = vmatprep.mubr.bf16.mxu0 %v524
    %3415 = vmatmul.mubr.bf16.gmra.mrb[0].mxu0 %v523
    %v3416 = vpop.f32.mrb[0].mxu0
    %v3417 = vadd.f32 %v3194, %v3416
    %v3418 = vpop.f32.mrb[0].mxu0
    %v3419 = vadd.f32 %v3196, %v3418
    %v3420 = vpop.f32.mrb[0].mxu0
    %v3421 = vadd.f32 %v3198, %v3420
    %v3422 = vpop.f32.mrb[0].mxu0
    %v3423 = vadd.f32 %v3200, %v3422
    %3424 = vdwg.mxu0
    %3425 = vmatprep.subr.bf16.mxu0 %v1706
    %3426 = vmatpush1.bf16.msra.mxu0 %v1705
    %3427 = vmatprep.subr.bf16.mxu0 %v1710
    %3428 = vmatpush1.bf16.msra.mxu0 %v1709
    %3429 = vmatprep.subr.bf16.mxu0 %v1714
    %3430 = vmatpush1.bf16.msra.mxu0 %v1713
    %3431 = vmatprep.subr.bf16.mxu0 %v1718
    %3432 = vmatpush1.bf16.msra.mxu0 %v1717
    %3433 = vmatprep.subr.bf16.mxu0 %v1722
    %3434 = vmatpush1.bf16.msra.mxu0 %v1721
    %3435 = vmatprep.subr.bf16.mxu0 %v1726
    %3436 = vmatpush1.bf16.msra.mxu0 %v1725
    %3437 = vmatprep.subr.bf16.mxu0 %v1730
    %3438 = vmatpush1.bf16.msra.mxu0 %v1729
    %3439 = vmatprep.subr.bf16.mxu0 %v1734
    %3440 = vmatpush1.bf16.msra.mxu0 %v1733
    %3441 = vmatprep.subr.bf16.mxu0 %v1738
    %3442 = vmatpush1.bf16.msra.mxu0 %v1737
    %3443 = vmatprep.subr.bf16.mxu0 %v1742
    %3444 = vmatpush1.bf16.msra.mxu0 %v1741
    %3445 = vmatprep.subr.bf16.mxu0 %v1746
    %3446 = vmatpush1.bf16.msra.mxu0 %v1745
    %3447 = vmatprep.subr.bf16.mxu0 %v1750
    %3448 = vmatpush1.bf16.msra.mxu0 %v1749
    %3449 = vmatprep.subr.bf16.mxu0 %v1754
    %3450 = vmatpush1.bf16.msra.mxu0 %v1753
    %3451 = vmatprep.subr.bf16.mxu0 %v1758
    %3452 = vmatpush1.bf16.msra.mxu0 %v1757
    %3453 = vmatprep.subr.bf16.mxu0 %v1762
    %3454 = vmatpush1.bf16.msra.mxu0 %v1761
    %3455 = vmatprep.subr.bf16.mxu0 %v1766
    %3456 = vmatpush1.bf16.msra.mxu0 %v1765
    %3457 = vmatprep.mubr.bf16.mxu0 %v382
    %3458 = vmatmul.mubr.bf16.gmra.mrb[0].mxu0 %v381
    %v3459 = vpop.f32.mrb[0].mxu0
    %v3460 = vadd.f32 %v3237, %v3459
    %v3461 = vpop.f32.mrb[0].mxu0
    %v3462 = vadd.f32 %v3239, %v3461
    %v3463 = vpop.f32.mrb[0].mxu0
    %v3464 = vadd.f32 %v3241, %v3463
    %v3465 = vpop.f32.mrb[0].mxu0
    %v3466 = vadd.f32 %v3243, %v3465
    %3467 = vmatprep.mubr.bf16.mxu0 %v390
    %3468 = vmatmul.mubr.bf16.gmra.mrb[0].mxu0 %v389
    %v3469 = vpop.f32.mrb[0].mxu0
    %v3470 = vadd.f32 %v3247, %v3469
    %v3471 = vpop.f32.mrb[0].mxu0
    %v3472 = vadd.f32 %v3249, %v3471
    %v3473 = vpop.f32.mrb[0].mxu0
    %v3474 = vadd.f32 %v3251, %v3473
    %v3475 = vpop.f32.mrb[0].mxu0
    %v3476 = vadd.f32 %v3253, %v3475
    %3477 = vmatprep.mubr.bf16.mxu0 %v398
    %3478 = vmatmul.mubr.bf16.gmra.mrb[0].mxu0 %v397
    %v3479 = vpop.f32.mrb[0].mxu0
    %v3480 = vadd.f32 %v3257, %v3479
    %v3481 = vpop.f32.mrb[0].mxu0
    %v3482 = vadd.f32 %v3259, %v3481
    %v3483 = vpop.f32.mrb[0].mxu0
    %v3484 = vadd.f32 %v3261, %v3483
    %v3485 = vpop.f32.mrb[0].mxu0
    %v3486 = vadd.f32 %v3263, %v3485
    %3487 = vmatprep.mubr.bf16.mxu0 %v406
    %3488 = vmatmul.mubr.bf16.gmra.mrb[0].mxu0 %v405
    %v3489 = vpop.f32.mrb[0].mxu0
    %v3490 = vadd.f32 %v3267, %v3489
    %v3491 = vpop.f32.mrb[0].mxu0
    %v3492 = vadd.f32 %v3269, %v3491
    %v3493 = vpop.f32.mrb[0].mxu0
    %v3494 = vadd.f32 %v3271, %v3493
    %v3495 = vpop.f32.mrb[0].mxu0
    %v3496 = vadd.f32 %v3273, %v3495
    %3497 = vmatprep.mubr.bf16.mxu0 %v414
    %3498 = vmatmul.mubr.bf16.gmra.mrb[0].mxu0 %v413
    %v3499 = vpop.f32.mrb[0].mxu0
    %v3500 = vadd.f32 %v3277, %v3499
    %v3501 = vpop.f32.mrb[0].mxu0
    %v3502 = vadd.f32 %v3279, %v3501
    %v3503 = vpop.f32.mrb[0].mxu0
    %v3504 = vadd.f32 %v3281, %v3503
    %v3505 = vpop.f32.mrb[0].mxu0
    %v3506 = vadd.f32 %v3283, %v3505
    %3507 = vmatprep.mubr.bf16.mxu0 %v422
    %3508 = vmatmul.mubr.bf16.gmra.mrb[0].mxu0 %v421
    %v3509 = vpop.f32.mrb[0].mxu0
    %v3510 = vadd.f32 %v3287, %v3509
    %v3511 = vpop.f32.mrb[0].mxu0
    %v3512 = vadd.f32 %v3289, %v3511
    %v3513 = vpop.f32.mrb[0].mxu0
    %v3514 = vadd.f32 %v3291, %v3513
    %v3515 = vpop.f32.mrb[0].mxu0
    %v3516 = vadd.f32 %v3293, %v3515
    %3517 = vmatprep.mubr.bf16.mxu0 %v430
    %3518 = vmatmul.mubr.bf16.gmra.mrb[0].mxu0 %v429
    %v3519 = vpop.f32.mrb[0].mxu0
    %v3520 = vadd.f32 %v3297, %v3519
    %v3521 = vpop.f32.mrb[0].mxu0
    %v3522 = vadd.f32 %v3299, %v3521
    %v3523 = vpop.f32.mrb[0].mxu0
    %v3524 = vadd.f32 %v3301, %v3523
    %v3525 = vpop.f32.mrb[0].mxu0
    %v3526 = vadd.f32 %v3303, %v3525
    %3527 = vmatprep.mubr.bf16.mxu0 %v438
    %3528 = vmatmul.mubr.bf16.gmra.mrb[0].mxu0 %v437
    %v3529 = vpop.f32.mrb[0].mxu0
    %v3530 = vadd.f32 %v3307, %v3529
    %v3531 = vpop.f32.mrb[0].mxu0
    %v3532 = vadd.f32 %v3309, %v3531
    %v3533 = vpop.f32.mrb[0].mxu0
    %v3534 = vadd.f32 %v3311, %v3533
    %v3535 = vpop.f32.mrb[0].mxu0
    %v3536 = vadd.f32 %v3313, %v3535
    %3537 = vmatprep.mubr.bf16.mxu0 %v446
    %3538 = vmatmul.mubr.bf16.gmra.mrb[0].mxu0 %v445
    %v3539 = vpop.f32.mrb[0].mxu0
    %v3540 = vadd.f32 %v3317, %v3539
    %v3541 = vpop.f32.mrb[0].mxu0
    %v3542 = vadd.f32 %v3319, %v3541
    %v3543 = vpop.f32.mrb[0].mxu0
    %v3544 = vadd.f32 %v3321, %v3543
    %v3545 = vpop.f32.mrb[0].mxu0
    %v3546 = vadd.f32 %v3323, %v3545
    %3547 = vmatprep.mubr.bf16.mxu0 %v454
    %3548 = vmatmul.mubr.bf16.gmra.mrb[0].mxu0 %v453
    %v3549 = vpop.f32.mrb[0].mxu0
    %v3550 = vadd.f32 %v3327, %v3549
    %v3551 = vpop.f32.mrb[0].mxu0
    %v3552 = vadd.f32 %v3329, %v3551
    %v3553 = vpop.f32.mrb[0].mxu0
    %v3554 = vadd.f32 %v3331, %v3553
    %v3555 = vpop.f32.mrb[0].mxu0
    %v3556 = vadd.f32 %v3333, %v3555
    %3557 = vmatprep.mubr.bf16.mxu0 %v462
    %3558 = vmatmul.mubr.bf16.gmra.mrb[0].mxu0 %v461
    %v3559 = vpop.f32.mrb[0].mxu0
    %v3560 = vadd.f32 %v3337, %v3559
    %v3561 = vpop.f32.mrb[0].mxu0
    %v3562 = vadd.f32 %v3339, %v3561
    %v3563 = vpop.f32.mrb[0].mxu0
    %v3564 = vadd.f32 %v3341, %v3563
    %v3565 = vpop.f32.mrb[0].mxu0
    %v3566 = vadd.f32 %v3343, %v3565
    %3567 = vmatprep.mubr.bf16.mxu0 %v470
    %3568 = vmatmul.mubr.bf16.gmra.mrb[0].mxu0 %v469
    %v3569 = vpop.f32.mrb[0].mxu0
    %v3570 = vadd.f32 %v3347, %v3569
    %v3571 = vpop.f32.mrb[0].mxu0
    %v3572 = vadd.f32 %v3349, %v3571
    %v3573 = vpop.f32.mrb[0].mxu0
    %v3574 = vadd.f32 %v3351, %v3573
    %v3575 = vpop.f32.mrb[0].mxu0
    %v3576 = vadd.f32 %v3353, %v3575
    %3577 = vmatprep.mubr.bf16.mxu0 %v478
    %3578 = vmatmul.mubr.bf16.gmra.mrb[0].mxu0 %v477
    %v3579 = vpop.f32.mrb[0].mxu0
    %v3580 = vadd.f32 %v3357, %v3579
    %v3581 = vpop.f32.mrb[0].mxu0
    %v3582 = vadd.f32 %v3359, %v3581
    %v3583 = vpop.f32.mrb[0].mxu0
    %v3584 = vadd.f32 %v3361, %v3583
    %v3585 = vpop.f32.mrb[0].mxu0
    %v3586 = vadd.f32 %v3363, %v3585
    %3587 = vmatprep.mubr.bf16.mxu0 %v486
    %3588 = vmatmul.mubr.bf16.gmra.mrb[0].mxu0 %v485
    %v3589 = vpop.f32.mrb[0].mxu0
    %v3590 = vadd.f32 %v3367, %v3589
    %v3591 = vpop.f32.mrb[0].mxu0
    %v3592 = vadd.f32 %v3369, %v3591
    %v3593 = vpop.f32.mrb[0].mxu0
    %v3594 = vadd.f32 %v3371, %v3593
    %v3595 = vpop.f32.mrb[0].mxu0
    %v3596 = vadd.f32 %v3373, %v3595
    %3597 = vmatprep.mubr.bf16.mxu0 %v494
    %3598 = vmatmul.mubr.bf16.gmra.mrb[0].mxu0 %v493
    %v3599 = vpop.f32.mrb[0].mxu0
    %v3600 = vadd.f32 %v3377, %v3599
    %v3601 = vpop.f32.mrb[0].mxu0
    %v3602 = vadd.f32 %v3379, %v3601
    %v3603 = vpop.f32.mrb[0].mxu0
    %v3604 = vadd.f32 %v3381, %v3603
    %v3605 = vpop.f32.mrb[0].mxu0
    %v3606 = vadd.f32 %v3383, %v3605
    %3607 = vmatprep.mubr.bf16.mxu0 %v502
    %3608 = vmatmul.mubr.bf16.gmra.mrb[0].mxu0 %v501
    %v3609 = vpop.f32.mrb[0].mxu0
    %v3610 = vadd.f32 %v3387, %v3609
    %v3611 = vpop.f32.mrb[0].mxu0
    %v3612 = vadd.f32 %v3389, %v3611
    %v3613 = vpop.f32.mrb[0].mxu0
    %v3614 = vadd.f32 %v3391, %v3613
    %v3615 = vpop.f32.mrb[0].mxu0
    %v3616 = vadd.f32 %v3393, %v3615
    %3617 = vmatprep.mubr.bf16.mxu0 %v510
    %3618 = vmatmul.mubr.bf16.gmra.mrb[0].mxu0 %v509
    %v3619 = vpop.f32.mrb[0].mxu0
    %v3620 = vadd.f32 %v3397, %v3619
    %v3621 = vpop.f32.mrb[0].mxu0
    %v3622 = vadd.f32 %v3399, %v3621
    %v3623 = vpop.f32.mrb[0].mxu0
    %v3624 = vadd.f32 %v3401, %v3623
    %v3625 = vpop.f32.mrb[0].mxu0
    %v3626 = vadd.f32 %v3403, %v3625
    %3627 = vmatprep.mubr.bf16.mxu0 %v518
    %3628 = vmatmul.mubr.bf16.gmra.mrb[0].mxu0 %v517
    %v3629 = vpop.f32.mrb[0].mxu0
    %v3630 = vadd.f32 %v3407, %v3629
    %v3631 = vpop.f32.mrb[0].mxu0
    %v3632 = vadd.f32 %v3409, %v3631
    %v3633 = vpop.f32.mrb[0].mxu0
    %v3634 = vadd.f32 %v3411, %v3633
    %v3635 = vpop.f32.mrb[0].mxu0
    %v3636 = vadd.f32 %v3413, %v3635
    %3637 = vmatprep.mubr.bf16.mxu0 %v526
    %3638 = vmatmul.mubr.bf16.gmra.mrb[0].mxu0 %v525
    %v3639 = vpop.f32.mrb[0].mxu0
    %v3640 = vadd.f32 %v3417, %v3639
    %v3641 = vpop.f32.mrb[0].mxu0
    %v3642 = vadd.f32 %v3419, %v3641
    %v3643 = vpop.f32.mrb[0].mxu0
    %v3644 = vadd.f32 %v3421, %v3643
    %v3645 = vpop.f32.mrb[0].mxu0
    %v3646 = vadd.f32 %v3423, %v3645
    %3647 = vdwg.mxu0
    %3648 = vmatprep.subr.bf16.mxu0 %v1770
    %3649 = vmatpush1.bf16.msra.mxu0 %v1769
    %3650 = vmatprep.subr.bf16.mxu0 %v1774
    %3651 = vmatpush1.bf16.msra.mxu0 %v1773
    %3652 = vmatprep.subr.bf16.mxu0 %v1778
    %3653 = vmatpush1.bf16.msra.mxu0 %v1777
    %3654 = vmatprep.subr.bf16.mxu0 %v1782
    %3655 = vmatpush1.bf16.msra.mxu0 %v1781
    %3656 = vmatprep.subr.bf16.mxu0 %v1786
    %3657 = vmatpush1.bf16.msra.mxu0 %v1785
    %3658 = vmatprep.subr.bf16.mxu0 %v1790
    %3659 = vmatpush1.bf16.msra.mxu0 %v1789
    %3660 = vmatprep.subr.bf16.mxu0 %v1794
    %3661 = vmatpush1.bf16.msra.mxu0 %v1793
    %3662 = vmatprep.subr.bf16.mxu0 %v1798
    %3663 = vmatpush1.bf16.msra.mxu0 %v1797
    %3664 = vmatprep.subr.bf16.mxu0 %v1802
    %3665 = vmatpush1.bf16.msra.mxu0 %v1801
    %3666 = vmatprep.subr.bf16.mxu0 %v1806
    %3667 = vmatpush1.bf16.msra.mxu0 %v1805
    %3668 = vmatprep.subr.bf16.mxu0 %v1810
    %3669 = vmatpush1.bf16.msra.mxu0 %v1809
    %3670 = vmatprep.subr.bf16.mxu0 %v1814
    %3671 = vmatpush1.bf16.msra.mxu0 %v1813
    %3672 = vmatprep.subr.bf16.mxu0 %v1818
    %3673 = vmatpush1.bf16.msra.mxu0 %v1817
    %3674 = vmatprep.subr.bf16.mxu0 %v1822
    %3675 = vmatpush1.bf16.msra.mxu0 %v1821
    %3676 = vmatprep.subr.bf16.mxu0 %v1826
    %3677 = vmatpush1.bf16.msra.mxu0 %v1825
    %3678 = vmatprep.subr.bf16.mxu0 %v1830
    %3679 = vmatpush1.bf16.msra.mxu0 %v1829
    %3680 = vmatprep.mubr.bf16.mxu0 %v384
    %3681 = vmatmul.mubr.bf16.gmra.mrb[0].mxu0 %v383
    %v3682 = vpop.f32.mrb[0].mxu0
    %v3683 = vadd.f32 %v3460, %v3682
    %v3684 = vpop.f32.mrb[0].mxu0
    %v3685 = vadd.f32 %v3462, %v3684
    %v3686 = vpop.f32.mrb[0].mxu0
    %v3687 = vadd.f32 %v3464, %v3686
    %v3688 = vpop.f32.mrb[0].mxu0
    %v3689 = vadd.f32 %v3466, %v3688
    %3690 = vmatprep.mubr.bf16.mxu0 %v392
    %3691 = vmatmul.mubr.bf16.gmra.mrb[0].mxu0 %v391
    %v3692 = vpop.f32.mrb[0].mxu0
    %v3693 = vadd.f32 %v3470, %v3692
    %v3694 = vpop.f32.mrb[0].mxu0
    %v3695 = vadd.f32 %v3472, %v3694
    %v3696 = vpop.f32.mrb[0].mxu0
    %v3697 = vadd.f32 %v3474, %v3696
    %v3698 = vpop.f32.mrb[0].mxu0
    %v3699 = vadd.f32 %v3476, %v3698
    %3700 = vmatprep.mubr.bf16.mxu0 %v400
    %3701 = vmatmul.mubr.bf16.gmra.mrb[0].mxu0 %v399
    %v3702 = vpop.f32.mrb[0].mxu0
    %v3703 = vadd.f32 %v3480, %v3702
    %v3704 = vpop.f32.mrb[0].mxu0
    %v3705 = vadd.f32 %v3482, %v3704
    %v3706 = vpop.f32.mrb[0].mxu0
    %v3707 = vadd.f32 %v3484, %v3706
    %v3708 = vpop.f32.mrb[0].mxu0
    %v3709 = vadd.f32 %v3486, %v3708
    %3710 = vmatprep.mubr.bf16.mxu0 %v408
    %3711 = vmatmul.mubr.bf16.gmra.mrb[0].mxu0 %v407
    %v3712 = vpop.f32.mrb[0].mxu0
    %v3713 = vadd.f32 %v3490, %v3712
    %v3714 = vpop.f32.mrb[0].mxu0
    %v3715 = vadd.f32 %v3492, %v3714
    %v3716 = vpop.f32.mrb[0].mxu0
    %v3717 = vadd.f32 %v3494, %v3716
    %v3718 = vpop.f32.mrb[0].mxu0
    %v3719 = vadd.f32 %v3496, %v3718
    %3720 = vmatprep.mubr.bf16.mxu0 %v416
    %3721 = vmatmul.mubr.bf16.gmra.mrb[0].mxu0 %v415
    %v3722 = vpop.f32.mrb[0].mxu0
    %v3723 = vadd.f32 %v3500, %v3722
    %v3724 = vpop.f32.mrb[0].mxu0
    %v3725 = vadd.f32 %v3502, %v3724
    %v3726 = vpop.f32.mrb[0].mxu0
    %v3727 = vadd.f32 %v3504, %v3726
    %v3728 = vpop.f32.mrb[0].mxu0
    %v3729 = vadd.f32 %v3506, %v3728
    %3730 = vmatprep.mubr.bf16.mxu0 %v424
    %3731 = vmatmul.mubr.bf16.gmra.mrb[0].mxu0 %v423
    %v3732 = vpop.f32.mrb[0].mxu0
    %v3733 = vadd.f32 %v3510, %v3732
    %v3734 = vpop.f32.mrb[0].mxu0
    %v3735 = vadd.f32 %v3512, %v3734
    %v3736 = vpop.f32.mrb[0].mxu0
    %v3737 = vadd.f32 %v3514, %v3736
    %v3738 = vpop.f32.mrb[0].mxu0
    %v3739 = vadd.f32 %v3516, %v3738
    %3740 = vmatprep.mubr.bf16.mxu0 %v432
    %3741 = vmatmul.mubr.bf16.gmra.mrb[0].mxu0 %v431
    %v3742 = vpop.f32.mrb[0].mxu0
    %v3743 = vadd.f32 %v3520, %v3742
    %v3744 = vpop.f32.mrb[0].mxu0
    %v3745 = vadd.f32 %v3522, %v3744
    %v3746 = vpop.f32.mrb[0].mxu0
    %v3747 = vadd.f32 %v3524, %v3746
    %v3748 = vpop.f32.mrb[0].mxu0
    %v3749 = vadd.f32 %v3526, %v3748
    %3750 = vmatprep.mubr.bf16.mxu0 %v440
    %3751 = vmatmul.mubr.bf16.gmra.mrb[0].mxu0 %v439
    %v3752 = vpop.f32.mrb[0].mxu0
    %v3753 = vadd.f32 %v3530, %v3752
    %v3754 = vpop.f32.mrb[0].mxu0
    %v3755 = vadd.f32 %v3532, %v3754
    %v3756 = vpop.f32.mrb[0].mxu0
    %v3757 = vadd.f32 %v3534, %v3756
    %v3758 = vpop.f32.mrb[0].mxu0
    %v3759 = vadd.f32 %v3536, %v3758
    %3760 = vmatprep.mubr.bf16.mxu0 %v448
    %3761 = vmatmul.mubr.bf16.gmra.mrb[0].mxu0 %v447
    %v3762 = vpop.f32.mrb[0].mxu0
    %v3763 = vadd.f32 %v3540, %v3762
    %v3764 = vpop.f32.mrb[0].mxu0
    %v3765 = vadd.f32 %v3542, %v3764
    %v3766 = vpop.f32.mrb[0].mxu0
    %v3767 = vadd.f32 %v3544, %v3766
    %v3768 = vpop.f32.mrb[0].mxu0
    %v3769 = vadd.f32 %v3546, %v3768
    %3770 = vmatprep.mubr.bf16.mxu0 %v456
    %3771 = vmatmul.mubr.bf16.gmra.mrb[0].mxu0 %v455
    %v3772 = vpop.f32.mrb[0].mxu0
    %v3773 = vadd.f32 %v3550, %v3772
    %v3774 = vpop.f32.mrb[0].mxu0
    %v3775 = vadd.f32 %v3552, %v3774
    %v3776 = vpop.f32.mrb[0].mxu0
    %v3777 = vadd.f32 %v3554, %v3776
    %v3778 = vpop.f32.mrb[0].mxu0
    %v3779 = vadd.f32 %v3556, %v3778
    %3780 = vmatprep.mubr.bf16.mxu0 %v464
    %3781 = vmatmul.mubr.bf16.gmra.mrb[0].mxu0 %v463
    %v3782 = vpop.f32.mrb[0].mxu0
    %v3783 = vadd.f32 %v3560, %v3782
    %v3784 = vpop.f32.mrb[0].mxu0
    %v3785 = vadd.f32 %v3562, %v3784
    %v3786 = vpop.f32.mrb[0].mxu0
    %v3787 = vadd.f32 %v3564, %v3786
    %v3788 = vpop.f32.mrb[0].mxu0
    %v3789 = vadd.f32 %v3566, %v3788
    %3790 = vmatprep.mubr.bf16.mxu0 %v472
    %3791 = vmatmul.mubr.bf16.gmra.mrb[0].mxu0 %v471
    %v3792 = vpop.f32.mrb[0].mxu0
    %v3793 = vadd.f32 %v3570, %v3792
    %v3794 = vpop.f32.mrb[0].mxu0
    %v3795 = vadd.f32 %v3572, %v3794
    %v3796 = vpop.f32.mrb[0].mxu0
    %v3797 = vadd.f32 %v3574, %v3796
    %v3798 = vpop.f32.mrb[0].mxu0
    %v3799 = vadd.f32 %v3576, %v3798
    %3800 = vmatprep.mubr.bf16.mxu0 %v480
    %3801 = vmatmul.mubr.bf16.gmra.mrb[0].mxu0 %v479
    %v3802 = vpop.f32.mrb[0].mxu0
    %v3803 = vadd.f32 %v3580, %v3802
    %v3804 = vpop.f32.mrb[0].mxu0
    %v3805 = vadd.f32 %v3582, %v3804
    %v3806 = vpop.f32.mrb[0].mxu0
    %v3807 = vadd.f32 %v3584, %v3806
    %v3808 = vpop.f32.mrb[0].mxu0
    %v3809 = vadd.f32 %v3586, %v3808
    %3810 = vmatprep.mubr.bf16.mxu0 %v488
    %3811 = vmatmul.mubr.bf16.gmra.mrb[0].mxu0 %v487
    %v3812 = vpop.f32.mrb[0].mxu0
    %v3813 = vadd.f32 %v3590, %v3812
    %v3814 = vpop.f32.mrb[0].mxu0
    %v3815 = vadd.f32 %v3592, %v3814
    %v3816 = vpop.f32.mrb[0].mxu0
    %v3817 = vadd.f32 %v3594, %v3816
    %v3818 = vpop.f32.mrb[0].mxu0
    %v3819 = vadd.f32 %v3596, %v3818
    %3820 = vmatprep.mubr.bf16.mxu0 %v496
    %3821 = vmatmul.mubr.bf16.gmra.mrb[0].mxu0 %v495
    %v3822 = vpop.f32.mrb[0].mxu0
    %v3823 = vadd.f32 %v3600, %v3822
    %v3824 = vpop.f32.mrb[0].mxu0
    %v3825 = vadd.f32 %v3602, %v3824
    %v3826 = vpop.f32.mrb[0].mxu0
    %v3827 = vadd.f32 %v3604, %v3826
    %v3828 = vpop.f32.mrb[0].mxu0
    %v3829 = vadd.f32 %v3606, %v3828
    %3830 = vmatprep.mubr.bf16.mxu0 %v504
    %3831 = vmatmul.mubr.bf16.gmra.mrb[0].mxu0 %v503
    %v3832 = vpop.f32.mrb[0].mxu0
    %v3833 = vadd.f32 %v3610, %v3832
    %v3834 = vpop.f32.mrb[0].mxu0
    %v3835 = vadd.f32 %v3612, %v3834
    %v3836 = vpop.f32.mrb[0].mxu0
    %v3837 = vadd.f32 %v3614, %v3836
    %v3838 = vpop.f32.mrb[0].mxu0
    %v3839 = vadd.f32 %v3616, %v3838
    %3840 = vmatprep.mubr.bf16.mxu0 %v512
    %3841 = vmatmul.mubr.bf16.gmra.mrb[0].mxu0 %v511
    %v3842 = vpop.f32.mrb[0].mxu0
    %v3843 = vadd.f32 %v3620, %v3842
    %v3844 = vpop.f32.mrb[0].mxu0
    %v3845 = vadd.f32 %v3622, %v3844
    %v3846 = vpop.f32.mrb[0].mxu0
    %v3847 = vadd.f32 %v3624, %v3846
    %v3848 = vpop.f32.mrb[0].mxu0
    %v3849 = vadd.f32 %v3626, %v3848
    %3850 = vmatprep.mubr.bf16.mxu0 %v520
    %3851 = vmatmul.mubr.bf16.gmra.mrb[0].mxu0 %v519
    %v3852 = vpop.f32.mrb[0].mxu0
    %v3853 = vadd.f32 %v3630, %v3852
    %v3854 = vpop.f32.mrb[0].mxu0
    %v3855 = vadd.f32 %v3632, %v3854
    %v3856 = vpop.f32.mrb[0].mxu0
    %v3857 = vadd.f32 %v3634, %v3856
    %v3858 = vpop.f32.mrb[0].mxu0
    %v3859 = vadd.f32 %v3636, %v3858
    %3860 = vmatprep.mubr.bf16.mxu0 %v528
    %3861 = vmatmul.mubr.bf16.gmra.mrb[0].mxu0 %v527
    %v3862 = vpop.f32.mrb[0].mxu0
    %v3863 = vadd.f32 %v3640, %v3862
    %v3864 = vpop.f32.mrb[0].mxu0
    %v3865 = vadd.f32 %v3642, %v3864
    %v3866 = vpop.f32.mrb[0].mxu0
    %v3867 = vadd.f32 %v3644, %v3866
    %v3868 = vpop.f32.mrb[0].mxu0
    %v3869 = vadd.f32 %v3646, %v3868
    %3870 = vdwg.mxu0
    %v3871 = vtanh.pop %v2791
    %v3872 = vtanh.pop %v2793
    %v3873 = vtanh.pop %v2795
    %v3874 = vtanh.pop %v2797
    %v3875 = vtanh.pop %v2801
    %v3876 = vtanh.pop %v2803
    %v3877 = vtanh.pop %v2805
    %v3878 = vtanh.pop %v2807
    %v3879 = vtanh.pop %v2811
    %v3880 = vtanh.pop %v2813
    %v3881 = vtanh.pop %v2815
    %v3882 = vtanh.pop %v2817
    %v3883 = vtanh.pop %v2821
    %v3884 = vtanh.pop %v2823
    %v3885 = vtanh.pop %v2825
    %v3886 = vtanh.pop %v2827
    %v3887 = vtanh.pop %v2831
    %v3888 = vtanh.pop %v2833
    %v3889 = vtanh.pop %v2835
    %v3890 = vtanh.pop %v2837
    %v3891 = vtanh.pop %v2841
    %v3892 = vtanh.pop %v2843
    %v3893 = vtanh.pop %v2845
    %v3894 = vtanh.pop %v2847
    %v3895 = vtanh.pop %v2851
    %v3896 = vtanh.pop %v2853
    %v3897 = vtanh.pop %v2855
    %v3898 = vtanh.pop %v2857
    %v3899 = vtanh.pop %v2861
    %v3900 = vtanh.pop %v2863
    %v3901 = vtanh.pop %v2865
    %v3902 = vtanh.pop %v2867
    %v3903 = vtanh.pop %v2871
    %v3904 = vtanh.pop %v2873
    %v3905 = vtanh.pop %v2875
    %v3906 = vtanh.pop %v2877
    %v3907 = vtanh.pop %v2881
    %v3908 = vtanh.pop %v2883
    %v3909 = vtanh.pop %v2885
    %v3910 = vtanh.pop %v2887
    %v3911 = vtanh.pop %v2891
    %v3912 = vtanh.pop %v2893
    %v3913 = vtanh.pop %v2895
    %v3914 = vtanh.pop %v2897
    %v3915 = vtanh.pop %v2901
    %v3916 = vtanh.pop %v2903
    %v3917 = vtanh.pop %v2905
    %v3918 = vtanh.pop %v2907
    %v3919 = vtanh.pop %v2911
    %v3920 = vtanh.pop %v2913
    %v3921 = vtanh.pop %v2915
    %v3922 = vtanh.pop %v2917
    %v3923 = vtanh.pop %v2921
    %v3924 = vtanh.pop %v2923
    %v3925 = vtanh.pop %v2925
    %v3926 = vtanh.pop %v2927
    %v3927 = vtanh.pop %v2931
    %v3928 = vtanh.pop %v2933
    %v3929 = vtanh.pop %v2935
    %v3930 = vtanh.pop %v2937
    %v3931 = vtanh.pop %v2941
    %v3932 = vtanh.pop %v2943
    %v3933 = vtanh.pop %v2945
    %v3934 = vtanh.pop %v2947
    %v3935 = vtanh.pop %v2951
    %v3936 = vtanh.pop %v2953
    %v3937 = vtanh.pop %v2955
    %v3938 = vtanh.pop %v2957
    %v3939 = vtanh.pop %v2961
    %v3940 = vtanh.pop %v2963
    %v3941 = vtanh.pop %v2965
    %v3942 = vtanh.pop %v2967
    %v3943 = vtanh.pop %v2971
    %v3944 = vtanh.pop %v2973
    %v3945 = vtanh.pop %v2975
    %v3946 = vtanh.pop %v2977
    %v3947 = vxor.u32 %v3683, 2147483648
    %v3948 = vxor.u32 %v3685, 2147483648
    %v3949 = vxor.u32 %v3687, 2147483648
    %v3950 = vxor.u32 %v3689, 2147483648
    %v3951 = vxor.u32 %v3693, 2147483648
    %v3952 = vxor.u32 %v3695, 2147483648
    %v3953 = vxor.u32 %v3697, 2147483648
    %v3954 = vxor.u32 %v3699, 2147483648
    %v3955 = vxor.u32 %v3703, 2147483648
    %v3956 = vxor.u32 %v3705, 2147483648
    %v3957 = vxor.u32 %v3707, 2147483648
    %v3958 = vxor.u32 %v3709, 2147483648
    %v3959 = vxor.u32 %v3713, 2147483648
    %v3960 = vxor.u32 %v3715, 2147483648
    %v3961 = vxor.u32 %v3717, 2147483648
    %v3962 = vxor.u32 %v3719, 2147483648
    %v3963 = vxor.u32 %v3723, 2147483648
    %v3964 = vxor.u32 %v3725, 2147483648
    %v3965 = vxor.u32 %v3727, 2147483648
    %v3966 = vxor.u32 %v3729, 2147483648
    %v3967 = vxor.u32 %v3733, 2147483648
    %v3968 = vxor.u32 %v3735, 2147483648
    %v3969 = vxor.u32 %v3737, 2147483648
    %v3970 = vxor.u32 %v3739, 2147483648
    %v3971 = vxor.u32 %v3743, 2147483648
    %v3972 = vxor.u32 %v3745, 2147483648
    %v3973 = vxor.u32 %v3747, 2147483648
    %v3974 = vxor.u32 %v3749, 2147483648
    %v3975 = vxor.u32 %v3753, 2147483648
    %v3976 = vxor.u32 %v3755, 2147483648
    %v3977 = vxor.u32 %v3757, 2147483648
    %v3978 = vxor.u32 %v3759, 2147483648
    %v3979 = vxor.u32 %v3763, 2147483648
    %v3980 = vxor.u32 %v3765, 2147483648
    %v3981 = vxor.u32 %v3767, 2147483648
    %v3982 = vxor.u32 %v3769, 2147483648
    %v3983 = vxor.u32 %v3773, 2147483648
    %v3984 = vxor.u32 %v3775, 2147483648
    %v3985 = vxor.u32 %v3777, 2147483648
    %v3986 = vxor.u32 %v3779, 2147483648
    %v3987 = vxor.u32 %v3783, 2147483648
    %v3988 = vxor.u32 %v3785, 2147483648
    %v3989 = vxor.u32 %v3787, 2147483648
    %v3990 = vxor.u32 %v3789, 2147483648
    %v3991 = vxor.u32 %v3793, 2147483648
    %v3992 = vxor.u32 %v3795, 2147483648
    %v3993 = vxor.u32 %v3797, 2147483648
    %v3994 = vxor.u32 %v3799, 2147483648
    %v3995 = vxor.u32 %v3803, 2147483648
    %v3996 = vxor.u32 %v3805, 2147483648
    %v3997 = vxor.u32 %v3807, 2147483648
    %v3998 = vxor.u32 %v3809, 2147483648
    %v3999 = vxor.u32 %v3813, 2147483648
    %v4000 = vxor.u32 %v3815, 2147483648
    %v4001 = vxor.u32 %v3817, 2147483648
    %v4002 = vxor.u32 %v3819, 2147483648
    %v4003 = vxor.u32 %v3823, 2147483648
    %v4004 = vxor.u32 %v3825, 2147483648
    %v4005 = vxor.u32 %v3827, 2147483648
    %v4006 = vxor.u32 %v3829, 2147483648
    %v4007 = vxor.u32 %v3833, 2147483648
    %v4008 = vxor.u32 %v3835, 2147483648
    %v4009 = vxor.u32 %v3837, 2147483648
    %v4010 = vxor.u32 %v3839, 2147483648
    %v4011 = vxor.u32 %v3843, 2147483648
    %v4012 = vxor.u32 %v3845, 2147483648
    %v4013 = vxor.u32 %v3847, 2147483648
    %v4014 = vxor.u32 %v3849, 2147483648
    %v4015 = vxor.u32 %v3853, 2147483648
    %v4016 = vxor.u32 %v3855, 2147483648
    %v4017 = vxor.u32 %v3857, 2147483648
    %v4018 = vxor.u32 %v3859, 2147483648
    %v4019 = vxor.u32 %v3863, 2147483648
    %v4020 = vxor.u32 %v3865, 2147483648
    %v4021 = vxor.u32 %v3867, 2147483648
    %v4022 = vxor.u32 %v3869, 2147483648
    %v4023 = vmul.f32 %v3947, 1.442695
    %v4024 = vpow.pop %v4023
    %v4025 = vmul.f32 %v3948, 1.442695
    %v4026 = vpow.pop %v4025
    %v4027 = vmul.f32 %v3949, 1.442695
    %v4028 = vpow.pop %v4027
    %v4029 = vmul.f32 %v3950, 1.442695
    %v4030 = vpow.pop %v4029
    %v4031 = vmul.f32 %v3951, 1.442695
    %v4032 = vpow.pop %v4031
    %v4033 = vmul.f32 %v3952, 1.442695
    %v4034 = vpow.pop %v4033
    %v4035 = vmul.f32 %v3953, 1.442695
    %v4036 = vpow.pop %v4035
    %v4037 = vmul.f32 %v3954, 1.442695
    %v4038 = vpow.pop %v4037
    %v4039 = vmul.f32 %v3955, 1.442695
    %v4040 = vpow.pop %v4039
    %v4041 = vmul.f32 %v3956, 1.442695
    %v4042 = vpow.pop %v4041
    %v4043 = vmul.f32 %v3957, 1.442695
    %v4044 = vpow.pop %v4043
    %v4045 = vmul.f32 %v3958, 1.442695
    %v4046 = vpow.pop %v4045
    %v4047 = vmul.f32 %v3959, 1.442695
    %v4048 = vpow.pop %v4047
    %v4049 = vmul.f32 %v3960, 1.442695
    %v4050 = vpow.pop %v4049
    %v4051 = vmul.f32 %v3961, 1.442695
    %v4052 = vpow.pop %v4051
    %v4053 = vmul.f32 %v3962, 1.442695
    %v4054 = vpow.pop %v4053
    %v4055 = vmul.f32 %v3963, 1.442695
    %v4056 = vpow.pop %v4055
    %v4057 = vmul.f32 %v3964, 1.442695
    %v4058 = vpow.pop %v4057
    %v4059 = vmul.f32 %v3965, 1.442695
    %v4060 = vpow.pop %v4059
    %v4061 = vmul.f32 %v3966, 1.442695
    %v4062 = vpow.pop %v4061
    %v4063 = vmul.f32 %v3967, 1.442695
    %v4064 = vpow.pop %v4063
    %v4065 = vmul.f32 %v3968, 1.442695
    %v4066 = vpow.pop %v4065
    %v4067 = vmul.f32 %v3969, 1.442695
    %v4068 = vpow.pop %v4067
    %v4069 = vmul.f32 %v3970, 1.442695
    %v4070 = vpow.pop %v4069
    %v4071 = vmul.f32 %v3971, 1.442695
    %v4072 = vpow.pop %v4071
    %v4073 = vmul.f32 %v3972, 1.442695
    %v4074 = vpow.pop %v4073
    %v4075 = vmul.f32 %v3973, 1.442695
    %v4076 = vpow.pop %v4075
    %v4077 = vmul.f32 %v3974, 1.442695
    %v4078 = vpow.pop %v4077
    %v4079 = vmul.f32 %v3975, 1.442695
    %v4080 = vpow.pop %v4079
    %v4081 = vmul.f32 %v3976, 1.442695
    %v4082 = vpow.pop %v4081
    %v4083 = vmul.f32 %v3977, 1.442695
    %v4084 = vpow.pop %v4083
    %v4085 = vmul.f32 %v3978, 1.442695
    %v4086 = vpow.pop %v4085
    %v4087 = vmul.f32 %v3979, 1.442695
    %v4088 = vpow.pop %v4087
    %v4089 = vmul.f32 %v3980, 1.442695
    %v4090 = vpow.pop %v4089
    %v4091 = vmul.f32 %v3981, 1.442695
    %v4092 = vpow.pop %v4091
    %v4093 = vmul.f32 %v3982, 1.442695
    %v4094 = vpow.pop %v4093
    %v4095 = vmul.f32 %v3983, 1.442695
    %v4096 = vpow.pop %v4095
    %v4097 = vmul.f32 %v3984, 1.442695
    %v4098 = vpow.pop %v4097
    %v4099 = vmul.f32 %v3985, 1.442695
    %v4100 = vpow.pop %v4099
    %v4101 = vmul.f32 %v3986, 1.442695
    %v4102 = vpow.pop %v4101
    %v4103 = vmul.f32 %v3987, 1.442695
    %v4104 = vpow.pop %v4103
    %v4105 = vmul.f32 %v3988, 1.442695
    %v4106 = vpow.pop %v4105
    %v4107 = vmul.f32 %v3989, 1.442695
    %v4108 = vpow.pop %v4107
    %v4109 = vmul.f32 %v3990, 1.442695
    %v4110 = vpow.pop %v4109
    %v4111 = vmul.f32 %v3991, 1.442695
    %v4112 = vpow.pop %v4111
    %v4113 = vmul.f32 %v3992, 1.442695
    %v4114 = vpow.pop %v4113
    %v4115 = vmul.f32 %v3993, 1.442695
    %v4116 = vpow.pop %v4115
    %v4117 = vmul.f32 %v3994, 1.442695
    %v4118 = vpow.pop %v4117
    %v4119 = vmul.f32 %v3995, 1.442695
    %v4120 = vpow.pop %v4119
    %v4121 = vmul.f32 %v3996, 1.442695
    %v4122 = vpow.pop %v4121
    %v4123 = vmul.f32 %v3997, 1.442695
    %v4124 = vpow.pop %v4123
    %v4125 = vmul.f32 %v3998, 1.442695
    %v4126 = vpow.pop %v4125
    %v4127 = vmul.f32 %v3999, 1.442695
    %v4128 = vpow.pop %v4127
    %v4129 = vmul.f32 %v4000, 1.442695
    %v4130 = vpow.pop %v4129
    %v4131 = vmul.f32 %v4001, 1.442695
    %v4132 = vpow.pop %v4131
    %v4133 = vmul.f32 %v4002, 1.442695
    %v4134 = vpow.pop %v4133
    %v4135 = vmul.f32 %v4003, 1.442695
    %v4136 = vpow.pop %v4135
    %v4137 = vmul.f32 %v4004, 1.442695
    %v4138 = vpow.pop %v4137
    %v4139 = vmul.f32 %v4005, 1.442695
    %v4140 = vpow.pop %v4139
    %v4141 = vmul.f32 %v4006, 1.442695
    %v4142 = vpow.pop %v4141
    %v4143 = vmul.f32 %v4007, 1.442695
    %v4144 = vpow.pop %v4143
    %v4145 = vmul.f32 %v4008, 1.442695
    %v4146 = vpow.pop %v4145
    %v4147 = vmul.f32 %v4009, 1.442695
    %v4148 = vpow.pop %v4147
    %v4149 = vmul.f32 %v4010, 1.442695
    %v4150 = vpow.pop %v4149
    %v4151 = vmul.f32 %v4011, 1.442695
    %v4152 = vpow.pop %v4151
    %v4153 = vmul.f32 %v4012, 1.442695
    %v4154 = vpow.pop %v4153
    %v4155 = vmul.f32 %v4013, 1.442695
    %v4156 = vpow.pop %v4155
    %v4157 = vmul.f32 %v4014, 1.442695
    %v4158 = vpow.pop %v4157
    %v4159 = vmul.f32 %v4015, 1.442695
    %v4160 = vpow.pop %v4159
    %v4161 = vmul.f32 %v4016, 1.442695
    %v4162 = vpow.pop %v4161
    %v4163 = vmul.f32 %v4017, 1.442695
    %v4164 = vpow.pop %v4163
    %v4165 = vmul.f32 %v4018, 1.442695
    %v4166 = vpow.pop %v4165
    %v4167 = vmul.f32 %v4019, 1.442695
    %v4168 = vpow.pop %v4167
    %v4169 = vmul.f32 %v4020, 1.442695
    %v4170 = vpow.pop %v4169
    %v4171 = vmul.f32 %v4021, 1.442695
    %v4172 = vpow.pop %v4171
    %v4173 = vmul.f32 %v4022, 1.442695
    %v4174 = vpow.pop %v4173
    %v4175 = vadd.f32 %v4024, 1.0
    %v4176 = vadd.f32 %v4026, 1.0
    %v4177 = vadd.f32 %v4028, 1.0
    %v4178 = vadd.f32 %v4030, 1.0
    %v4179 = vadd.f32 %v4032, 1.0
    %v4180 = vadd.f32 %v4034, 1.0
    %v4181 = vadd.f32 %v4036, 1.0
    %v4182 = vadd.f32 %v4038, 1.0
    %v4183 = vadd.f32 %v4040, 1.0
    %v4184 = vadd.f32 %v4042, 1.0
    %v4185 = vadd.f32 %v4044, 1.0
    %v4186 = vadd.f32 %v4046, 1.0
    %v4187 = vadd.f32 %v4048, 1.0
    %v4188 = vadd.f32 %v4050, 1.0
    %v4189 = vadd.f32 %v4052, 1.0
    %v4190 = vadd.f32 %v4054, 1.0
    %v4191 = vadd.f32 %v4056, 1.0
    %v4192 = vadd.f32 %v4058, 1.0
    %v4193 = vadd.f32 %v4060, 1.0
    %v4194 = vadd.f32 %v4062, 1.0
    %v4195 = vadd.f32 %v4064, 1.0
    %v4196 = vadd.f32 %v4066, 1.0
    %v4197 = vadd.f32 %v4068, 1.0
    %v4198 = vadd.f32 %v4070, 1.0
    %v4199 = vadd.f32 %v4072, 1.0
    %v4200 = vadd.f32 %v4074, 1.0
    %v4201 = vadd.f32 %v4076, 1.0
    %v4202 = vadd.f32 %v4078, 1.0
    %v4203 = vadd.f32 %v4080, 1.0
    %v4204 = vadd.f32 %v4082, 1.0
    %v4205 = vadd.f32 %v4084, 1.0
    %v4206 = vadd.f32 %v4086, 1.0
    %v4207 = vadd.f32 %v4088, 1.0
    %v4208 = vadd.f32 %v4090, 1.0
    %v4209 = vadd.f32 %v4092, 1.0
    %v4210 = vadd.f32 %v4094, 1.0
    %v4211 = vadd.f32 %v4096, 1.0
    %v4212 = vadd.f32 %v4098, 1.0
    %v4213 = vadd.f32 %v4100, 1.0
    %v4214 = vadd.f32 %v4102, 1.0
    %v4215 = vadd.f32 %v4104, 1.0
    %v4216 = vadd.f32 %v4106, 1.0
    %v4217 = vadd.f32 %v4108, 1.0
    %v4218 = vadd.f32 %v4110, 1.0
    %v4219 = vadd.f32 %v4112, 1.0
    %v4220 = vadd.f32 %v4114, 1.0
    %v4221 = vadd.f32 %v4116, 1.0
    %v4222 = vadd.f32 %v4118, 1.0
    %v4223 = vadd.f32 %v4120, 1.0
    %v4224 = vadd.f32 %v4122, 1.0
    %v4225 = vadd.f32 %v4124, 1.0
    %v4226 = vadd.f32 %v4126, 1.0
    %v4227 = vadd.f32 %v4128, 1.0
    %v4228 = vadd.f32 %v4130, 1.0
    %v4229 = vadd.f32 %v4132, 1.0
    %v4230 = vadd.f32 %v4134, 1.0
    %v4231 = vadd.f32 %v4136, 1.0
    %v4232 = vadd.f32 %v4138, 1.0
    %v4233 = vadd.f32 %v4140, 1.0
    %v4234 = vadd.f32 %v4142, 1.0
    %v4235 = vadd.f32 %v4144, 1.0
    %v4236 = vadd.f32 %v4146, 1.0
    %v4237 = vadd.f32 %v4148, 1.0
    %v4238 = vadd.f32 %v4150, 1.0
    %v4239 = vadd.f32 %v4152, 1.0
    %v4240 = vadd.f32 %v4154, 1.0
    %v4241 = vadd.f32 %v4156, 1.0
    %v4242 = vadd.f32 %v4158, 1.0
    %v4243 = vadd.f32 %v4160, 1.0
    %v4244 = vadd.f32 %v4162, 1.0
    %v4245 = vadd.f32 %v4164, 1.0
    %v4246 = vadd.f32 %v4166, 1.0
    %v4247 = vadd.f32 %v4168, 1.0
    %v4248 = vadd.f32 %v4170, 1.0
    %v4249 = vadd.f32 %v4172, 1.0
    %v4250 = vadd.f32 %v4174, 1.0
    %v4251 = vrcp.pop %v4175
    %v4252 = vmul.f32 1.0, %v4251
    %v4253 = vrcp.pop %v4176
    %v4254 = vmul.f32 1.0, %v4253
    %v4255 = vrcp.pop %v4177
    %v4256 = vmul.f32 1.0, %v4255
    %v4257 = vrcp.pop %v4178
    %v4258 = vmul.f32 1.0, %v4257
    %v4259 = vrcp.pop %v4179
    %v4260 = vmul.f32 1.0, %v4259
    %v4261 = vrcp.pop %v4180
    %v4262 = vmul.f32 1.0, %v4261
    %v4263 = vrcp.pop %v4181
    %v4264 = vmul.f32 1.0, %v4263
    %v4265 = vrcp.pop %v4182
    %v4266 = vmul.f32 1.0, %v4265
    %v4267 = vrcp.pop %v4183
    %v4268 = vmul.f32 1.0, %v4267
    %v4269 = vrcp.pop %v4184
    %v4270 = vmul.f32 1.0, %v4269
    %v4271 = vrcp.pop %v4185
    %v4272 = vmul.f32 1.0, %v4271
    %v4273 = vrcp.pop %v4186
    %v4274 = vmul.f32 1.0, %v4273
    %v4275 = vrcp.pop %v4187
    %v4276 = vmul.f32 1.0, %v4275
    %v4277 = vrcp.pop %v4188
    %v4278 = vmul.f32 1.0, %v4277
    %v4279 = vrcp.pop %v4189
    %v4280 = vmul.f32 1.0, %v4279
    %v4281 = vrcp.pop %v4190
    %v4282 = vmul.f32 1.0, %v4281
    %v4283 = vrcp.pop %v4191
    %v4284 = vmul.f32 1.0, %v4283
    %v4285 = vrcp.pop %v4192
    %v4286 = vmul.f32 1.0, %v4285
    %v4287 = vrcp.pop %v4193
    %v4288 = vmul.f32 1.0, %v4287
    %v4289 = vrcp.pop %v4194
    %v4290 = vmul.f32 1.0, %v4289
    %v4291 = vrcp.pop %v4195
    %v4292 = vmul.f32 1.0, %v4291
    %v4293 = vrcp.pop %v4196
    %v4294 = vmul.f32 1.0, %v4293
    %v4295 = vrcp.pop %v4197
    %v4296 = vmul.f32 1.0, %v4295
    %v4297 = vrcp.pop %v4198
    %v4298 = vmul.f32 1.0, %v4297
    %v4299 = vrcp.pop %v4199
    %v4300 = vmul.f32 1.0, %v4299
    %v4301 = vrcp.pop %v4200
    %v4302 = vmul.f32 1.0, %v4301
    %v4303 = vrcp.pop %v4201
    %v4304 = vmul.f32 1.0, %v4303
    %v4305 = vrcp.pop %v4202
    %v4306 = vmul.f32 1.0, %v4305
    %v4307 = vrcp.pop %v4203
    %v4308 = vmul.f32 1.0, %v4307
    %v4309 = vrcp.pop %v4204
    %v4310 = vmul.f32 1.0, %v4309
    %v4311 = vrcp.pop %v4205
    %v4312 = vmul.f32 1.0, %v4311
    %v4313 = vrcp.pop %v4206
    %v4314 = vmul.f32 1.0, %v4313
    %v4315 = vrcp.pop %v4207
    %v4316 = vmul.f32 1.0, %v4315
    %v4317 = vrcp.pop %v4208
    %v4318 = vmul.f32 1.0, %v4317
    %v4319 = vrcp.pop %v4209
    %v4320 = vmul.f32 1.0, %v4319
    %v4321 = vrcp.pop %v4210
    %v4322 = vmul.f32 1.0, %v4321
    %v4323 = vrcp.pop %v4211
    %v4324 = vmul.f32 1.0, %v4323
    %v4325 = vrcp.pop %v4212
    %v4326 = vmul.f32 1.0, %v4325
    %v4327 = vrcp.pop %v4213
    %v4328 = vmul.f32 1.0, %v4327
    %v4329 = vrcp.pop %v4214
    %v4330 = vmul.f32 1.0, %v4329
    %v4331 = vrcp.pop %v4215
    %v4332 = vmul.f32 1.0, %v4331
    %v4333 = vrcp.pop %v4216
    %v4334 = vmul.f32 1.0, %v4333
    %v4335 = vrcp.pop %v4217
    %v4336 = vmul.f32 1.0, %v4335
    %v4337 = vrcp.pop %v4218
    %v4338 = vmul.f32 1.0, %v4337
    %v4339 = vrcp.pop %v4219
    %v4340 = vmul.f32 1.0, %v4339
    %v4341 = vrcp.pop %v4220
    %v4342 = vmul.f32 1.0, %v4341
    %v4343 = vrcp.pop %v4221
    %v4344 = vmul.f32 1.0, %v4343
    %v4345 = vrcp.pop %v4222
    %v4346 = vmul.f32 1.0, %v4345
    %v4347 = vrcp.pop %v4223
    %v4348 = vmul.f32 1.0, %v4347
    %v4349 = vrcp.pop %v4224
    %v4350 = vmul.f32 1.0, %v4349
    %v4351 = vrcp.pop %v4225
    %v4352 = vmul.f32 1.0, %v4351
    %v4353 = vrcp.pop %v4226
    %v4354 = vmul.f32 1.0, %v4353
    %v4355 = vrcp.pop %v4227
    %v4356 = vmul.f32 1.0, %v4355
    %v4357 = vrcp.pop %v4228
    %v4358 = vmul.f32 1.0, %v4357
    %v4359 = vrcp.pop %v4229
    %v4360 = vmul.f32 1.0, %v4359
    %v4361 = vrcp.pop %v4230
    %v4362 = vmul.f32 1.0, %v4361
    %v4363 = vrcp.pop %v4231
    %v4364 = vmul.f32 1.0, %v4363
    %v4365 = vrcp.pop %v4232
    %v4366 = vmul.f32 1.0, %v4365
    %v4367 = vrcp.pop %v4233
    %v4368 = vmul.f32 1.0, %v4367
    %v4369 = vrcp.pop %v4234
    %v4370 = vmul.f32 1.0, %v4369
    %v4371 = vrcp.pop %v4235
    %v4372 = vmul.f32 1.0, %v4371
    %v4373 = vrcp.pop %v4236
    %v4374 = vmul.f32 1.0, %v4373
    %v4375 = vrcp.pop %v4237
    %v4376 = vmul.f32 1.0, %v4375
    %v4377 = vrcp.pop %v4238
    %v4378 = vmul.f32 1.0, %v4377
    %v4379 = vrcp.pop %v4239
    %v4380 = vmul.f32 1.0, %v4379
    %v4381 = vrcp.pop %v4240
    %v4382 = vmul.f32 1.0, %v4381
    %v4383 = vrcp.pop %v4241
    %v4384 = vmul.f32 1.0, %v4383
    %v4385 = vrcp.pop %v4242
    %v4386 = vmul.f32 1.0, %v4385
    %v4387 = vrcp.pop %v4243
    %v4388 = vmul.f32 1.0, %v4387
    %v4389 = vrcp.pop %v4244
    %v4390 = vmul.f32 1.0, %v4389
    %v4391 = vrcp.pop %v4245
    %v4392 = vmul.f32 1.0, %v4391
    %v4393 = vrcp.pop %v4246
    %v4394 = vmul.f32 1.0, %v4393
    %v4395 = vrcp.pop %v4247
    %v4396 = vmul.f32 1.0, %v4395
    %v4397 = vrcp.pop %v4248
    %v4398 = vmul.f32 1.0, %v4397
    %v4399 = vrcp.pop %v4249
    %v4400 = vmul.f32 1.0, %v4399
    %v4401 = vrcp.pop %v4250
    %v4402 = vmul.f32 1.0, %v4401
    %v4403 = vmul.f32 %v3871, %v4252
    %v4404 = vmul.f32 %v3872, %v4254
    %v4405 = vmul.f32 %v3873, %v4256
    %v4406 = vmul.f32 %v3874, %v4258
    %v4407 = vmul.f32 %v3875, %v4260
    %v4408 = vmul.f32 %v3876, %v4262
    %v4409 = vmul.f32 %v3877, %v4264
    %v4410 = vmul.f32 %v3878, %v4266
    %v4411 = vmul.f32 %v3879, %v4268
    %v4412 = vmul.f32 %v3880, %v4270
    %v4413 = vmul.f32 %v3881, %v4272
    %v4414 = vmul.f32 %v3882, %v4274
    %v4415 = vmul.f32 %v3883, %v4276
    %v4416 = vmul.f32 %v3884, %v4278
    %v4417 = vmul.f32 %v3885, %v4280
    %v4418 = vmul.f32 %v3886, %v4282
    %v4419 = vmul.f32 %v3887, %v4284
    %v4420 = vmul.f32 %v3888, %v4286
    %v4421 = vmul.f32 %v3889, %v4288
    %v4422 = vmul.f32 %v3890, %v4290
    %v4423 = vmul.f32 %v3891, %v4292
    %v4424 = vmul.f32 %v3892, %v4294
    %v4425 = vmul.f32 %v3893, %v4296
    %v4426 = vmul.f32 %v3894, %v4298
    %v4427 = vmul.f32 %v3895, %v4300
    %v4428 = vmul.f32 %v3896, %v4302
    %v4429 = vmul.f32 %v3897, %v4304
    %v4430 = vmul.f32 %v3898, %v4306
    %v4431 = vmul.f32 %v3899, %v4308
    %v4432 = vmul.f32 %v3900, %v4310
    %v4433 = vmul.f32 %v3901, %v4312
    %v4434 = vmul.f32 %v3902, %v4314
    %v4435 = vmul.f32 %v3903, %v4316
    %v4436 = vmul.f32 %v3904, %v4318
    %v4437 = vmul.f32 %v3905, %v4320
    %v4438 = vmul.f32 %v3906, %v4322
    %v4439 = vmul.f32 %v3907, %v4324
    %v4440 = vmul.f32 %v3908, %v4326
    %v4441 = vmul.f32 %v3909, %v4328
    %v4442 = vmul.f32 %v3910, %v4330
    %v4443 = vmul.f32 %v3911, %v4332
    %v4444 = vmul.f32 %v3912, %v4334
    %v4445 = vmul.f32 %v3913, %v4336
    %v4446 = vmul.f32 %v3914, %v4338
    %v4447 = vmul.f32 %v3915, %v4340
    %v4448 = vmul.f32 %v3916, %v4342
    %v4449 = vmul.f32 %v3917, %v4344
    %v4450 = vmul.f32 %v3918, %v4346
    %v4451 = vmul.f32 %v3919, %v4348
    %v4452 = vmul.f32 %v3920, %v4350
    %v4453 = vmul.f32 %v3921, %v4352
    %v4454 = vmul.f32 %v3922, %v4354
    %v4455 = vmul.f32 %v3923, %v4356
    %v4456 = vmul.f32 %v3924, %v4358
    %v4457 = vmul.f32 %v3925, %v4360
    %v4458 = vmul.f32 %v3926, %v4362
    %v4459 = vmul.f32 %v3927, %v4364
    %v4460 = vmul.f32 %v3928, %v4366
    %v4461 = vmul.f32 %v3929, %v4368
    %v4462 = vmul.f32 %v3930, %v4370
    %v4463 = vmul.f32 %v3931, %v4372
    %v4464 = vmul.f32 %v3932, %v4374
    %v4465 = vmul.f32 %v3933, %v4376
    %v4466 = vmul.f32 %v3934, %v4378
    %v4467 = vmul.f32 %v3935, %v4380
    %v4468 = vmul.f32 %v3936, %v4382
    %v4469 = vmul.f32 %v3937, %v4384
    %v4470 = vmul.f32 %v3938, %v4386
    %v4471 = vmul.f32 %v3939, %v4388
    %v4472 = vmul.f32 %v3940, %v4390
    %v4473 = vmul.f32 %v3941, %v4392
    %v4474 = vmul.f32 %v3942, %v4394
    %v4475 = vmul.f32 %v3943, %v4396
    %v4476 = vmul.f32 %v3944, %v4398
    %v4477 = vmul.f32 %v3945, %v4400
    %v4478 = vmul.f32 %v3946, %v4402
    %v4479 = vld [vmem:[#allocation8] sm:$0x3]
    %v4481 = vlaneseq
    %v4482 = vshrl.u32 %v4481, 7
    %v4483 = vsub.s32 0, %v4482
    %v4484 = vrot.slane %v4479, %v4483
    %v4485 = vlaneseq
    %v4486 = vshrl.u32 %v4485, 7
    %v4487 = vsub.s32 1, %v4486
    %v4488 = vrot.slane %v4479, %v4487
    %v4491 = vmul.f32 %v4403, %v4484
    %v4492 = vmul.f32 %v4404, %v4488
    %v4493 = vmul.f32 %v4405, %v4484
    %v4494 = vmul.f32 %v4406, %v4488
    %v4495 = vmul.f32 %v4407, %v4484
    %v4496 = vmul.f32 %v4408, %v4488
    %v4497 = vmul.f32 %v4409, %v4484
    %v4498 = vmul.f32 %v4410, %v4488
    %v4499 = vmul.f32 %v4411, %v4484
    %v4500 = vmul.f32 %v4412, %v4488
    %v4501 = vmul.f32 %v4413, %v4484
    %v4502 = vmul.f32 %v4414, %v4488
    %v4503 = vmul.f32 %v4415, %v4484
    %v4504 = vmul.f32 %v4416, %v4488
    %v4505 = vmul.f32 %v4417, %v4484
    %v4506 = vmul.f32 %v4418, %v4488
    %v4507 = vmul.f32 %v4419, %v4484
    %v4508 = vmul.f32 %v4420, %v4488
    %v4509 = vmul.f32 %v4421, %v4484
    %v4510 = vmul.f32 %v4422, %v4488
    %v4511 = vmul.f32 %v4423, %v4484
    %v4512 = vmul.f32 %v4424, %v4488
    %v4513 = vmul.f32 %v4425, %v4484
    %v4514 = vmul.f32 %v4426, %v4488
    %v4515 = vmul.f32 %v4427, %v4484
    %v4516 = vmul.f32 %v4428, %v4488
    %v4517 = vmul.f32 %v4429, %v4484
    %v4518 = vmul.f32 %v4430, %v4488
    %v4519 = vmul.f32 %v4431, %v4484
    %v4520 = vmul.f32 %v4432, %v4488
    %v4521 = vmul.f32 %v4433, %v4484
    %v4522 = vmul.f32 %v4434, %v4488
    %v4523 = vmul.f32 %v4435, %v4484
    %v4524 = vmul.f32 %v4436, %v4488
    %v4525 = vmul.f32 %v4437, %v4484
    %v4526 = vmul.f32 %v4438, %v4488
    %v4527 = vmul.f32 %v4439, %v4484
    %v4528 = vmul.f32 %v4440, %v4488
    %v4529 = vmul.f32 %v4441, %v4484
    %v4530 = vmul.f32 %v4442, %v4488
    %v4531 = vmul.f32 %v4443, %v4484
    %v4532 = vmul.f32 %v4444, %v4488
    %v4533 = vmul.f32 %v4445, %v4484
    %v4534 = vmul.f32 %v4446, %v4488
    %v4535 = vmul.f32 %v4447, %v4484
    %v4536 = vmul.f32 %v4448, %v4488
    %v4537 = vmul.f32 %v4449, %v4484
    %v4538 = vmul.f32 %v4450, %v4488
    %v4539 = vmul.f32 %v4451, %v4484
    %v4540 = vmul.f32 %v4452, %v4488
    %v4541 = vmul.f32 %v4453, %v4484
    %v4542 = vmul.f32 %v4454, %v4488
    %v4543 = vmul.f32 %v4455, %v4484
    %v4544 = vmul.f32 %v4456, %v4488
    %v4545 = vmul.f32 %v4457, %v4484
    %v4546 = vmul.f32 %v4458, %v4488
    %v4547 = vmul.f32 %v4459, %v4484
    %v4548 = vmul.f32 %v4460, %v4488
    %v4549 = vmul.f32 %v4461, %v4484
    %v4550 = vmul.f32 %v4462, %v4488
    %v4551 = vmul.f32 %v4463, %v4484
    %v4552 = vmul.f32 %v4464, %v4488
    %v4553 = vmul.f32 %v4465, %v4484
    %v4554 = vmul.f32 %v4466, %v4488
    %v4555 = vmul.f32 %v4467, %v4484
    %v4556 = vmul.f32 %v4468, %v4488
    %v4557 = vmul.f32 %v4469, %v4484
    %v4558 = vmul.f32 %v4470, %v4488
    %v4559 = vmul.f32 %v4471, %v4484
    %v4560 = vmul.f32 %v4472, %v4488
    %v4561 = vmul.f32 %v4473, %v4484
    %v4562 = vmul.f32 %v4474, %v4488
    %v4563 = vmul.f32 %v4475, %v4484
    %v4564 = vmul.f32 %v4476, %v4488
    %v4565 = vmul.f32 %v4477, %v4484
    %v4566 = vmul.f32 %v4478, %v4488
    %v4567 = vadd.f32 %v4491, %v4492
    %4568 = vadd.xlane.f32.xlu0 %v4567
    %v4569 = vpop.xlane.xlu0 %4568
    %v4570 = vadd.f32 %v4493, %v4494
    %4571 = vadd.xlane.f32.xlu0 %v4570
    %v4572 = vpop.xlane.xlu0 %4571
    %v4573 = vadd.f32 %v4495, %v4496
    %4574 = vadd.xlane.f32.xlu0 %v4573
    %v4575 = vpop.xlane.xlu0 %4574
    %v4576 = vadd.f32 %v4497, %v4498
    %4577 = vadd.xlane.f32.xlu0 %v4576
    %v4578 = vpop.xlane.xlu0 %4577
    %v4579 = vadd.f32 %v4499, %v4500
    %4580 = vadd.xlane.f32.xlu0 %v4579
    %v4581 = vpop.xlane.xlu0 %4580
    %v4582 = vadd.f32 %v4501, %v4502
    %4583 = vadd.xlane.f32.xlu0 %v4582
    %v4584 = vpop.xlane.xlu0 %4583
    %v4585 = vadd.f32 %v4503, %v4504
    %4586 = vadd.xlane.f32.xlu0 %v4585
    %v4587 = vpop.xlane.xlu0 %4586
    %v4588 = vadd.f32 %v4505, %v4506
    %4589 = vadd.xlane.f32.xlu0 %v4588
    %v4590 = vpop.xlane.xlu0 %4589
    %v4591 = vadd.f32 %v4507, %v4508
    %4592 = vadd.xlane.f32.xlu0 %v4591
    %v4593 = vpop.xlane.xlu0 %4592
    %v4594 = vadd.f32 %v4509, %v4510
    %4595 = vadd.xlane.f32.xlu0 %v4594
    %v4596 = vpop.xlane.xlu0 %4595
    %v4597 = vadd.f32 %v4511, %v4512
    %4598 = vadd.xlane.f32.xlu0 %v4597
    %v4599 = vpop.xlane.xlu0 %4598
    %v4600 = vadd.f32 %v4513, %v4514
    %4601 = vadd.xlane.f32.xlu0 %v4600
    %v4602 = vpop.xlane.xlu0 %4601
    %v4603 = vadd.f32 %v4515, %v4516
    %4604 = vadd.xlane.f32.xlu0 %v4603
    %v4605 = vpop.xlane.xlu0 %4604
    %v4606 = vadd.f32 %v4517, %v4518
    %4607 = vadd.xlane.f32.xlu0 %v4606
    %v4608 = vpop.xlane.xlu0 %4607
    %v4609 = vadd.f32 %v4519, %v4520
    %4610 = vadd.xlane.f32.xlu0 %v4609
    %v4611 = vpop.xlane.xlu0 %4610
    %v4612 = vadd.f32 %v4521, %v4522
    %4613 = vadd.xlane.f32.xlu0 %v4612
    %v4614 = vpop.xlane.xlu0 %4613
    %v4615 = vadd.f32 %v4523, %v4524
    %4616 = vadd.xlane.f32.xlu0 %v4615
    %v4617 = vpop.xlane.xlu0 %4616
    %v4618 = vadd.f32 %v4525, %v4526
    %4619 = vadd.xlane.f32.xlu0 %v4618
    %v4620 = vpop.xlane.xlu0 %4619
    %v4621 = vadd.f32 %v4527, %v4528
    %4622 = vadd.xlane.f32.xlu0 %v4621
    %v4623 = vpop.xlane.xlu0 %4622
    %v4624 = vadd.f32 %v4529, %v4530
    %4625 = vadd.xlane.f32.xlu0 %v4624
    %v4626 = vpop.xlane.xlu0 %4625
    %v4627 = vadd.f32 %v4531, %v4532
    %4628 = vadd.xlane.f32.xlu0 %v4627
    %v4629 = vpop.xlane.xlu0 %4628
    %v4630 = vadd.f32 %v4533, %v4534
    %4631 = vadd.xlane.f32.xlu0 %v4630
    %v4632 = vpop.xlane.xlu0 %4631
    %v4633 = vadd.f32 %v4535, %v4536
    %4634 = vadd.xlane.f32.xlu0 %v4633
    %v4635 = vpop.xlane.xlu0 %4634
    %v4636 = vadd.f32 %v4537, %v4538
    %4637 = vadd.xlane.f32.xlu0 %v4636
    %v4638 = vpop.xlane.xlu0 %4637
    %v4639 = vadd.f32 %v4539, %v4540
    %4640 = vadd.xlane.f32.xlu0 %v4639
    %v4641 = vpop.xlane.xlu0 %4640
    %v4642 = vadd.f32 %v4541, %v4542
    %4643 = vadd.xlane.f32.xlu0 %v4642
    %v4644 = vpop.xlane.xlu0 %4643
    %v4645 = vadd.f32 %v4543, %v4544
    %4646 = vadd.xlane.f32.xlu0 %v4645
    %v4647 = vpop.xlane.xlu0 %4646
    %v4648 = vadd.f32 %v4545, %v4546
    %4649 = vadd.xlane.f32.xlu0 %v4648
    %v4650 = vpop.xlane.xlu0 %4649
    %v4651 = vadd.f32 %v4547, %v4548
    %4652 = vadd.xlane.f32.xlu0 %v4651
    %v4653 = vpop.xlane.xlu0 %4652
    %v4654 = vadd.f32 %v4549, %v4550
    %4655 = vadd.xlane.f32.xlu0 %v4654
    %v4656 = vpop.xlane.xlu0 %4655
    %v4657 = vadd.f32 %v4551, %v4552
    %4658 = vadd.xlane.f32.xlu0 %v4657
    %v4659 = vpop.xlane.xlu0 %4658
    %v4660 = vadd.f32 %v4553, %v4554
    %4661 = vadd.xlane.f32.xlu0 %v4660
    %v4662 = vpop.xlane.xlu0 %4661
    %v4663 = vadd.f32 %v4555, %v4556
    %4664 = vadd.xlane.f32.xlu0 %v4663
    %v4665 = vpop.xlane.xlu0 %4664
    %v4666 = vadd.f32 %v4557, %v4558
    %4667 = vadd.xlane.f32.xlu0 %v4666
    %v4668 = vpop.xlane.xlu0 %4667
    %v4669 = vadd.f32 %v4559, %v4560
    %4670 = vadd.xlane.f32.xlu0 %v4669
    %v4671 = vpop.xlane.xlu0 %4670
    %v4672 = vadd.f32 %v4561, %v4562
    %4673 = vadd.xlane.f32.xlu0 %v4672
    %v4674 = vpop.xlane.xlu0 %4673
    %v4675 = vadd.f32 %v4563, %v4564
    %4676 = vadd.xlane.f32.xlu0 %v4675
    %v4677 = vpop.xlane.xlu0 %4676
    %vm4678 = vcmask 1043456
    %v4679 = vsel %vm4678, %v4565, 0.0
    %v4680 = vsel %vm4678, %v4566, 0.0
    %v4681 = vadd.f32 %v4679, %v4680
    %4682 = vadd.xlane.f32.xlu0 %v4681
    %v4683 = vpop.xlane.xlu0 %4682
    %v4684 = vld [vmem:[#allocation2] sm:$0x1]
    %v4686 = vlaneseq
    %v4687 = vshrl.u32 %v4686, 7
    %v4688 = vsub.s32 0, %v4687
    %v4689 = vrot.slane %v4684, %v4688
    %v4691 = vadd.f32 %v4569, %v4689
    %v4692 = vadd.f32 %v4572, %v4689
    %v4693 = vadd.f32 %v4575, %v4689
    %v4694 = vadd.f32 %v4578, %v4689
    %v4695 = vadd.f32 %v4581, %v4689
    %v4696 = vadd.f32 %v4584, %v4689
    %v4697 = vadd.f32 %v4587, %v4689
    %v4698 = vadd.f32 %v4590, %v4689
    %v4699 = vadd.f32 %v4593, %v4689
    %v4700 = vadd.f32 %v4596, %v4689
    %v4701 = vadd.f32 %v4599, %v4689
    %v4702 = vadd.f32 %v4602, %v4689
    %v4703 = vadd.f32 %v4605, %v4689
    %v4704 = vadd.f32 %v4608, %v4689
    %v4705 = vadd.f32 %v4611, %v4689
    %v4706 = vadd.f32 %v4614, %v4689
    %v4707 = vadd.f32 %v4617, %v4689
    %v4708 = vadd.f32 %v4620, %v4689
    %v4709 = vadd.f32 %v4623, %v4689
    %v4710 = vadd.f32 %v4626, %v4689
    %v4711 = vadd.f32 %v4629, %v4689
    %v4712 = vadd.f32 %v4632, %v4689
    %v4713 = vadd.f32 %v4635, %v4689
    %v4714 = vadd.f32 %v4638, %v4689
    %v4715 = vadd.f32 %v4641, %v4689
    %v4716 = vadd.f32 %v4644, %v4689
    %v4717 = vadd.f32 %v4647, %v4689
    %v4718 = vadd.f32 %v4650, %v4689
    %v4719 = vadd.f32 %v4653, %v4689
    %v4720 = vadd.f32 %v4656, %v4689
    %v4721 = vadd.f32 %v4659, %v4689
    %v4722 = vadd.f32 %v4662, %v4689
    %v4723 = vadd.f32 %v4665, %v4689
    %v4724 = vadd.f32 %v4668, %v4689
    %v4725 = vadd.f32 %v4671, %v4689
    %v4726 = vadd.f32 %v4674, %v4689
    %v4727 = vadd.f32 %v4677, %v4689
    %v4728 = vadd.f32 %v4683, %v4689
    %vm4729 = vcmask 7168
    %4730 = vst.msk [vmem:[%s5] sm:$0xff] %vm4729, %v4691
    %4731 = vst.msk [vmem:[%s5 + $0x8] sm:$0xff] %vm4729, %v4692
    %4732 = vst.msk [vmem:[%s5 + $0x10] sm:$0xff] %vm4729, %v4693
    %4733 = vst.msk [vmem:[%s5 + $0x18] sm:$0xff] %vm4729, %v4694
    %4734 = vst.msk [vmem:[%s5 + $0x20] sm:$0xff] %vm4729, %v4695
    %4735 = vst.msk [vmem:[%s5 + $0x28] sm:$0xff] %vm4729, %v4696
    %4736 = vst.msk [vmem:[%s5 + $0x30] sm:$0xff] %vm4729, %v4697
    %4737 = vst.msk [vmem:[%s5 + $0x38] sm:$0xff] %vm4729, %v4698
    %4738 = vst.msk [vmem:[%s5 + $0x40] sm:$0xff] %vm4729, %v4699
    %4739 = vst.msk [vmem:[%s5 + $0x48] sm:$0xff] %vm4729, %v4700
    %4740 = vst.msk [vmem:[%s5 + $0x50] sm:$0xff] %vm4729, %v4701
    %4741 = vst.msk [vmem:[%s5 + $0x58] sm:$0xff] %vm4729, %v4702
    %4742 = vst.msk [vmem:[%s5 + $0x60] sm:$0xff] %vm4729, %v4703
    %4743 = vst.msk [vmem:[%s5 + $0x68] sm:$0xff] %vm4729, %v4704
    %4744 = vst.msk [vmem:[%s5 + $0x70] sm:$0xff] %vm4729, %v4705
    %4745 = vst.msk [vmem:[%s5 + $0x78] sm:$0xff] %vm4729, %v4706
    %4746 = vst.msk [vmem:[%s5 + $0x80] sm:$0xff] %vm4729, %v4707
    %4747 = vst.msk [vmem:[%s5 + $0x88] sm:$0xff] %vm4729, %v4708
    %4748 = vst.msk [vmem:[%s5 + $0x90] sm:$0xff] %vm4729, %v4709
    %4749 = vst.msk [vmem:[%s5 + $0x98] sm:$0xff] %vm4729, %v4710
    %4750 = vst.msk [vmem:[%s5 + $0xa0] sm:$0xff] %vm4729, %v4711
    %4751 = vst.msk [vmem:[%s5 + $0xa8] sm:$0xff] %vm4729, %v4712
    %4752 = vst.msk [vmem:[%s5 + $0xb0] sm:$0xff] %vm4729, %v4713
    %4753 = vst.msk [vmem:[%s5 + $0xb8] sm:$0xff] %vm4729, %v4714
    %4754 = vst.msk [vmem:[%s5 + $0xc0] sm:$0xff] %vm4729, %v4715
    %4755 = vst.msk [vmem:[%s5 + $0xc8] sm:$0xff] %vm4729, %v4716
    %4756 = vst.msk [vmem:[%s5 + $0xd0] sm:$0xff] %vm4729, %v4717
    %4757 = vst.msk [vmem:[%s5 + $0xd8] sm:$0xff] %vm4729, %v4718
    %4758 = vst.msk [vmem:[%s5 + $0xe0] sm:$0xff] %vm4729, %v4719
    %4759 = vst.msk [vmem:[%s5 + $0xe8] sm:$0xff] %vm4729, %v4720
    %4760 = vst.msk [vmem:[%s5 + $0xf0] sm:$0xff] %vm4729, %v4721
    %4761 = vst.msk [vmem:[%s5 + $0xf8] sm:$0xff] %vm4729, %v4722
    %4762 = vst.msk [vmem:[%s5 + $0x100] sm:$0xff] %vm4729, %v4723
    %4763 = vst.msk [vmem:[%s5 + $0x108] sm:$0xff] %vm4729, %v4724
    %4764 = vst.msk [vmem:[%s5 + $0x110] sm:$0xff] %vm4729, %v4725
    %4765 = vst.msk [vmem:[%s5 + $0x118] sm:$0xff] %vm4729, %v4726
    %4766 = vst.msk [vmem:[%s5 + $0x120] sm:$0xff] %vm4729, %v4727
    %vm4767 = vcmask 3072
    %4768 = vst.msk [vmem:[%s5 + $0x128] sm:$0xf] %vm4767, %v4728
    // Predicated region
    $region38: #{tpu_custom_call.1} parent=1 // pred_check
      _
    $region39: #{tpu_custom_call.1} parent=1 // pred_check_branch
      %4770 = sbr.rel (0) target = $region41
    $region40: #{tpu_custom_call.1} parent=1 // pred_region
      _
    $region41: #{tpu_custom_call.1} parent=1 // pred_fallthru
      _
    // Predicated region
    $region42: #{tpu_custom_call.1} parent=1 // pred_check
      _
    $region43: #{tpu_custom_call.1} parent=1 // pred_check_branch
      %4772 = sbr.rel (0) target = $region45
    $region44: #{tpu_custom_call.1} parent=1 // pred_region
      _
    $region45: #{tpu_custom_call.1} parent=1 // pred_fallthru
      _
    %4773 = vsyncpa [#allocation4], 1
    %4774 = vsyncpa [#allocation6], 1
    %4775 = vsyncpa [#allocation9], 1

</llo_original>
